<compile_context>
chip_gen: v5e
topology: v5e:2x2
jax: 0.10.0
libtpu: 0.0.40
codegen_flags: <defaults>
</compile_context>

<pallas_src>
import functools

import jax
import jax.numpy as jnp
import numpy as np
from jax.experimental import pallas as pl
from jax.experimental.pallas import tpu as pltpu

_VMEM = functools.partial(pl.BlockSpec, memory_space=pltpu.MemorySpace.VMEM)


# ----------------------------- Pallas kernels -----------------------------

def _linear_kernel(x_ref, w_ref, b_ref, o_ref):
    # x: (B, Din) f32, w: (Din, init*256) bf16 (pre-cast once), b: (1, init*256) f32
    acc = jnp.dot(x_ref[...].astype(jnp.bfloat16), w_ref[...],
                  preferred_element_type=jnp.float32) + b_ref[...]
    o_ref[...] = acc.astype(o_ref.dtype)


def _fused_deconv_kernel(x_ref, *refs, init_size):
    """All five ConvTranspose1d(+LeakyReLU+BN / +Tanh) layers in one kernel.

    Layout: rows = B*init_size (fixed).  At layer n the activation is
    (rows, P_n*C_n) with a[r, p*C_n + c] = value at sequence position
    l*P_n + p (l = r % init_size), channel c.  One deconv layer is

        pre = [a | a_prev_row | a_next_row]_bf16 @ W_ext + bias_packed

    where W_ext = [W_within ; W_prev ; W_next] is packed once at setup and
    a_prev_row / a_next_row are sublane rolls masked at sample boundaries.
    """
    o_ref = refs[-1]
    prefs = refs[:-1]
    rows = x_ref.shape[0]                       # B * init_size

    # Row (b, l) boundary masks for the two cross-row taps (l = r % init_size).
    l_idx = jax.lax.broadcasted_iota(jnp.int32, (rows, 1), 0) % init_size
    first_row = l_idx == 0                      # position q-1 does not exist
    last_row = l_idx == init_size - 1           # position q+1 does not exist

    a = x_ref[...].astype(jnp.float32)          # (rows, 256), f32 in registers
    idx = 0
    while idx < len(prefs):
        w_ref, b_ref = prefs[idx], prefs[idx + 1]
        is_final = (idx + 2 == len(prefs))

        # Adjacent-row activations (only their relevant lane block is picked
        # up by the mostly-zero W_prev / W_next parts of the packed weight).
        prev = jnp.where(first_row, 0.0, pltpu.roll(a, 1, axis=0))         # row r-1
        nxt = jnp.where(last_row, 0.0, pltpu.roll(a, rows - 1, axis=0))    # row r+1
        a_ext = jnp.concatenate([a, prev, nxt], axis=1).astype(jnp.bfloat16)

        pre = jnp.dot(a_ext, w_ref[...],
                      preferred_element_type=jnp.float32) + b_ref[...]

        if is_final:
            o_ref[...] = jnp.tanh(pre)          # (rows, 32*Cout) lane-dense store
            idx += 2
        else:
            gamma = prefs[idx + 2][...]         # (1, Cout) f32
            beta_p = prefs[idx + 3][...]        # (1, P_out*Cout) f32, pre-tiled
            idx += 4

            z = jnp.where(pre >= 0.0, pre, 0.2 * pre)          # LeakyReLU(0.2)

            cout = gamma.shape[1]
            p_out = z.shape[1] // cout
            n_samples = float(rows * p_out)                    # = B * L_out
            # BatchNorm1d (training-mode) per-channel stats over rows AND the
            # p_out lane blocks; two-pass biased variance, eps = 1e-5.
            col_sum = jnp.sum(z, axis=0, keepdims=True)        # (1, p_out*cout)
            chan = col_sum[:, :cout]
            for p in range(1, p_out):
                chan = chan + col_sum[:, p * cout:(p + 1) * cout]
            mean = chan * (1.0 / n_samples)                    # (1, cout)
            mean_p = jnp.concatenate([mean] * p_out, axis=1)   # back to packed lanes
            d = z - mean_p
            col_sq = jnp.sum(d * d, axis=0, keepdims=True)
            chan = col_sq[:, :cout]
            for p in range(1, p_out):
                chan = chan + col_sq[:, p * cout:(p + 1) * cout]
            var = chan * (1.0 / n_samples)
            inv = jax.lax.rsqrt(var + 1e-5) * gamma
            inv_p = jnp.concatenate([inv] * p_out, axis=1)
            a = d * inv_p + beta_p                             # next layer input (f32)


# ----------------------------- Python wrappers -----------------------------

def _linear(x, w, b):
    B = x.shape[0]
    dout = w.shape[1]
    return pl.pallas_call(
        _linear_kernel,
        out_shape=jax.ShapeDtypeStruct((B, dout), jnp.bfloat16),
        in_specs=[_VMEM(), _VMEM(), _VMEM()],
        out_specs=_VMEM(),
    )(x, w, b)


def _fused_deconv(x2, flat_params, init_size, output_channels):
    rows = x2.shape[0]
    n_out = 32 * output_channels
    kernel = functools.partial(_fused_deconv_kernel, init_size=init_size)
    return pl.pallas_call(
        kernel,
        out_shape=jax.ShapeDtypeStruct((rows, n_out), jnp.float32),
        in_specs=[_VMEM()] * (1 + len(flat_params)),
        out_specs=_VMEM(),
        compiler_params=pltpu.CompilerParams(vmem_limit_bytes=32 * 1024 * 1024),
    )(x2, *flat_params)


@functools.partial(jax.jit, static_argnames=("init_size", "output_channels"))
def generator_forward(kparams, x, *, init_size, output_channels):
    """x: (B, input_size) -> (B, output_channels, sequence_length) (NCL)."""
    B = x.shape[0]
    # Linear: packed weight already yields the flattened channels-last
    # activation, so PyTorch's .view + NCL->NLC become one free reshape.
    h = _linear(x, kparams["linear_w"], kparams["linear_b"])     # (B, init*256) bf16
    h = h.reshape(B * init_size, 256)                            # rows = (b, l)
    out = _fused_deconv(h, kparams["deconv_flat"], init_size, output_channels)
    seq = init_size * 32
    # (rows, 32*C) lane-packed (pos, chan) -> (B, seq, C) is a free reshape.
    return jnp.transpose(out.reshape(B, seq, output_channels), (0, 2, 1))


# ------------------------ parameters (PyTorch layout) -----------------------

def init_generator_params(key, input_size, output_channels, sequence_length):
    """Parameters in PyTorch layouts (nn.Linear / nn.ConvTranspose1d)."""
    init_size = sequence_length // 2 ** 5
    channels = [256, 128, 64, 32, 16, output_channels]
    keys = jax.random.split(key, 12)
    params = {
        "linear_w": 0.05 * jax.random.normal(
            keys[0], (input_size, 256 * init_size), jnp.float32),
        "linear_b": 0.05 * jax.random.normal(
            keys[1], (256 * init_size,), jnp.float32),
        "deconv": [],
    }
    for i in range(5):
        cin, cout = channels[i], channels[i + 1]
        layer = {
            "w": 0.05 * jax.random.normal(keys[2 + 2 * i], (cin, cout, 4), jnp.float32),
            "b": 0.05 * jax.random.normal(keys[3 + 2 * i], (cout,), jnp.float32),
        }
        if i < 4:  # last layer has Tanh, no BatchNorm
            layer["gamma"] = jnp.ones((cout,), jnp.float32)
            layer["beta"] = jnp.zeros((cout,), jnp.float32)
        params["deconv"].append(layer)
    return params, init_size


def pack_params(params, init_size):
    """One-time repack of PyTorch-layout params into kernel-ready layouts.

    Matmul weights are cast to bf16 here (once); bias/gamma/beta stay f32.
    """
    din = params["linear_w"].shape[0]
    # Linear columns (c*init_size + l) -> (l*256 + c) so the matmul output
    # reshapes directly into channels-last (B*init_size, 256) rows.
    lw = np.asarray(params["linear_w"], np.float32).reshape(din, 256, init_size)
    lw = np.transpose(lw, (0, 2, 1)).reshape(din, init_size * 256)
    lb = np.asarray(params["linear_b"], np.float32).reshape(256, init_size)
    lb = np.transpose(lb, (1, 0)).reshape(1, init_size * 256)

    flat = []
    for n, layer in enumerate(params["deconv"]):
        w = np.asarray(layer["w"], np.float32)          # (cin, cout, 4) PyTorch layout
        cin, cout, _ = w.shape
        p_in = 2 ** n
        p_out = 2 * p_in
        n_out = p_out * cout
        kdim = p_in * cin                               # == 256 for every layer
        K = [w[:, :, t] for t in range(4)]              # taps k0..k3, (cin, cout)

        # ConvTranspose1d(k=4, s=2, p=1):
        #   y[2q]   = x[q]@K1 + x[q-1]@K3 + b
        #   y[2q+1] = x[q+1]@K0 + x[q]@K2 + b
        # Within-row banded weight: input block p feeds output blocks
        # 2p (K1), 2p+1 (K2), 2p+2 (K3), 2p-1 (K0) when they stay in the row.
        w_big = np.zeros((kdim, n_out), np.float32)
        w_prev = np.zeros((kdim, n_out), np.float32)
        w_next = np.zeros((kdim, n_out), np.float32)
        for p in range(p_in):
            r0, r1 = p * cin, (p + 1) * cin
            w_big[r0:r1, (2 * p) * cout:(2 * p + 1) * cout] = K[1]
            w_big[r0:r1, (2 * p + 1) * cout:(2 * p + 2) * cout] = K[2]
            if p + 1 < p_in:
                w_big[r0:r1, (2 * p + 2) * cout:(2 * p + 3) * cout] = K[3]
            if p >= 1:
                w_big[r0:r1, (2 * p - 1) * cout:(2 * p) * cout] = K[0]
        # Cross-row taps: previous row's LAST block -> output block 0 via K3;
        # next row's FIRST block -> last output block via K0.
        w_prev[(p_in - 1) * cin:p_in * cin, 0:cout] = K[3]
        w_next[0:cin, (p_out - 1) * cout:n_out] = K[0]
        w_ext = np.concatenate([w_big, w_prev, w_next], axis=0)   # (3*256, n_out)

        b_packed = np.tile(np.asarray(layer["b"], np.float32), p_out).reshape(1, n_out)
        flat.append(jnp.asarray(w_ext, jnp.bfloat16))
        flat.append(jnp.asarray(b_packed, jnp.float32))
        if "gamma" in layer:
            gamma = np.asarray(layer["gamma"], np.float32).reshape(1, cout)
            beta_p = np.tile(np.asarray(layer["beta"], np.float32), p_out).reshape(1, n_out)
            flat.append(jnp.asarray(gamma, jnp.float32))
            flat.append(jnp.asarray(beta_p, jnp.float32))

    return {
        "linear_w": jnp.asarray(lw, jnp.bfloat16),
        "linear_b": jnp.asarray(lb, jnp.float32),
        "deconv_flat": flat,
    }


# --------------------------- pure-JAX reference -----------------------------

def _reference_forward(params, x, init_size):
    """Straightforward JAX reference in PyTorch NCL layout (bf16 dots)."""
    B = x.shape[0]
    h = jnp.dot(x.astype(jnp.bfloat16), params["linear_w"].astype(jnp.bfloat16),
                preferred_element_type=jnp.float32) + params["linear_b"]
    h = h.reshape(B, 256, init_size)                     # like PyTorch .view
    for i, layer in enumerate(params["deconv"]):
        w, b = layer["w"], layer["b"]
        cout = w.shape[1]
        Bc, _, L = h.shape
        # ConvTranspose1d(k=4, s=2, p=1) from the definition:
        #   y_full[2q + k - 1] += x[q] @ W[:, :, k]; crop padding=1 each side.
        contrib = jnp.einsum("bcl,cok->bolk",
                             h.astype(jnp.bfloat16), w.astype(jnp.bfloat16),
                             preferred_element_type=jnp.float32)
        y = jnp.zeros((Bc, cout, 2 * L + 2), jnp.float32)
        for k in range(4):
            y = y.at[:, :, k:k + 2 * L:2].add(contrib[:, :, :, k])
        y = y[:, :, 1:2 * L + 1] + b[None, :, None]
        if i < len(params["deconv"]) - 1:
            y = jnp.where(y >= 0.0, y, 0.2 * y)                      # LeakyReLU
            mean = jnp.mean(y, axis=(0, 2), keepdims=True)           # BatchNorm1d
            var = jnp.mean((y - mean) ** 2, axis=(0, 2), keepdims=True)
            y = (y - mean) * jax.lax.rsqrt(var + 1e-5)
            y = y * layer["gamma"][None, :, None] + layer["beta"][None, :, None]
        else:
            y = jnp.tanh(y)
        h = y
    return h


if __name__ == "__main__":
    input_size = 32
    output_channels = 4
    sequence_length = 64      # init_size = 64 // 32 = 2
    batch = 4                 # rows = batch * init_size = 8 (one sublane tile)

    key = jax.random.PRNGKey(0)
    pkey, xkey = jax.random.split(key)
    params, init_size = init_generator_params(
        pkey, input_size, output_channels, sequence_length)
    kparams = pack_params(params, init_size)
    x = jax.random.normal(xkey, (batch, input_size), jnp.float32)

    out = generator_forward(kparams, x, init_size=init_size,
                            output_channels=output_channels)
    out = jax.block_until_ready(out)
    assert out.shape == (batch, output_channels, sequence_length), out.shape
    assert bool(jnp.all(jnp.isfinite(out)))

    ref = jax.block_until_ready(_reference_forward(params, x, init_size))
    max_err = float(jnp.max(jnp.abs(out - ref)))
    assert max_err < 3e-2, f"max abs error vs reference: {max_err}"
    print("KERNEL_OK")
</pallas_src>

<mosaic_0001>
module attributes {stable_mosaic.version = 11 : i64} {
  func.func @_linear_kernel(%arg0: memref<4x32xf32, #tpu.memory_space<vmem>>, %arg1: memref<32x512xbf16, #tpu.memory_space<vmem>>, %arg2: memref<1x512xf32, #tpu.memory_space<vmem>>, %arg3: memref<4x512xbf16, #tpu.memory_space<vmem>>) attributes {dimension_semantics = [], scalar_prefetch = 0 : i64, scratch_operands = 0 : i64, tpu.core_type = #tpu.core_type<tc>} {
    %c0 = arith.constant 0 : index
    %c0_0 = arith.constant 0 : index
    %0 = vector.load %arg0[%c0, %c0_0] : memref<4x32xf32, #tpu.memory_space<vmem>>, vector<4x32xf32>
    %1 = arith.truncf %0 : vector<4x32xf32> to vector<4x32xbf16>
    %c0_1 = arith.constant 0 : index
    %c0_2 = arith.constant 0 : index
    %2 = vector.load %arg1[%c0_1, %c0_2] : memref<32x512xbf16, #tpu.memory_space<vmem>>, vector<32x512xbf16>
    %cst = arith.constant dense<0.000000e+00> : vector<4x512xf32>
    %3 = tpu.matmul %1, %2, %cst {dimension_numbers = #tpu.dot_dimension_numbers<[1], [0], [0], [1], [0, 0, 1, 1], [], []>} : vector<4x32xbf16>, vector<32x512xbf16>, vector<4x512xf32> -> vector<4x512xf32>
    %c0_3 = arith.constant 0 : index
    %c0_4 = arith.constant 0 : index
    %4 = vector.load %arg2[%c0_3, %c0_4] : memref<1x512xf32, #tpu.memory_space<vmem>>, vector<1x512xf32>
    %5 = vector.broadcast %4 : vector<1x512xf32> to vector<4x512xf32>
    %6 = arith.addf %3, %5 : vector<4x512xf32>
    %7 = arith.truncf %6 : vector<4x512xf32> to vector<4x512xbf16>
    %c0_5 = arith.constant 0 : index
    %c0_6 = arith.constant 0 : index
    %8 = vector.load %arg3[%c0_5, %c0_6] : memref<4x512xbf16, #tpu.memory_space<vmem>>, vector<4x512xbf16>
    tpu.vector_store %arg3[%c0_5, %c0_6], %7 {strides = array<i32>} : memref<4x512xbf16, #tpu.memory_space<vmem>>, vector<4x512xbf16>,
    return
  }
}

module attributes {stable_mosaic.version = 11 : i64} {
  func.func @_fused_deconv_kernel(%arg0: memref<8x256xbf16, #tpu.memory_space<vmem>>, %arg1: memref<768x256xbf16, #tpu.memory_space<vmem>>, %arg2: memref<1x256xf32, #tpu.memory_space<vmem>>, %arg3: memref<1x128xf32, #tpu.memory_space<vmem>>, %arg4: memref<1x256xf32, #tpu.memory_space<vmem>>, %arg5: memref<768x256xbf16, #tpu.memory_space<vmem>>, %arg6: memref<1x256xf32, #tpu.memory_space<vmem>>, %arg7: memref<1x64xf32, #tpu.memory_space<vmem>>, %arg8: memref<1x256xf32, #tpu.memory_space<vmem>>, %arg9: memref<768x256xbf16, #tpu.memory_space<vmem>>, %arg10: memref<1x256xf32, #tpu.memory_space<vmem>>, %arg11: memref<1x32xf32, #tpu.memory_space<vmem>>, %arg12: memref<1x256xf32, #tpu.memory_space<vmem>>, %arg13: memref<768x256xbf16, #tpu.memory_space<vmem>>, %arg14: memref<1x256xf32, #tpu.memory_space<vmem>>, %arg15: memref<1x16xf32, #tpu.memory_space<vmem>>, %arg16: memref<1x256xf32, #tpu.memory_space<vmem>>, %arg17: memref<768x128xbf16, #tpu.memory_space<vmem>>, %arg18: memref<1x128xf32, #tpu.memory_space<vmem>>, %arg19: memref<8x128xf32, #tpu.memory_space<vmem>>) attributes {dimension_semantics = [], scalar_prefetch = 0 : i64, scratch_operands = 0 : i64, tpu.core_type = #tpu.core_type<tc>} {
    %0 = tpu.iota {dimensions = array<i32: 0>} : vector<8x1xi32>
    %c2_i32 = arith.constant 2 : i32
    %c0_i32 = arith.constant 0 : i32
    %1 = arith.cmpi eq, %c2_i32, %c0_i32 : i32
    %c1_i32 = arith.constant 1 : i32
    %2 = arith.select %1, %c1_i32, %c2_i32 : i32
    %3 = vector.broadcast %2 : i32 to vector<8x1xi32>
    %4 = arith.remsi %0, %3 : vector<8x1xi32>
    %c0_i32_0 = arith.constant 0 : i32
    %5 = vector.broadcast %c0_i32_0 : i32 to vector<8x1xi32>
    %6 = arith.cmpi ne, %4, %5 : vector<8x1xi32>
    %c0_i32_1 = arith.constant 0 : i32
    %7 = vector.broadcast %c0_i32_1 : i32 to vector<8x1xi32>
    %8 = arith.cmpi slt, %4, %7 : vector<8x1xi32>
    %c0_i32_2 = arith.constant 0 : i32
    %9 = arith.cmpi slt, %2, %c0_i32_2 : i32
    %10 = vector.broadcast %9 : i1 to vector<8x1xi1>
    %11 = vector.broadcast %10 : vector<8x1xi1> to vector<8x1xi1>
    %12 = arith.xori %8, %11 : vector<8x1xi1>
    %13 = arith.andi %12, %6 : vector<8x1xi1>
    %14 = vector.broadcast %2 : i32 to vector<8x1xi32>
    %15 = arith.addi %4, %14 : vector<8x1xi32>
    %16 = arith.select %13, %15, %4 : vector<8x1xi1>, vector<8x1xi32>
    %c0_i32_3 = arith.constant 0 : i32
    %17 = vector.broadcast %c0_i32_3 : i32 to vector<8x1xi32>
    %18 = arith.cmpi eq, %16, %17 : vector<8x1xi32>
    %c1_i32_4 = arith.constant 1 : i32
    %19 = vector.broadcast %c1_i32_4 : i32 to vector<8x1xi32>
    %20 = arith.cmpi eq, %16, %19 : vector<8x1xi32>
    %c0 = arith.constant 0 : index
    %c0_5 = arith.constant 0 : index
    %21 = vector.load %arg0[%c0, %c0_5] : memref<8x256xbf16, #tpu.memory_space<vmem>>, vector<8x256xbf16>
    %22 = arith.extf %21 : vector<8x256xbf16> to vector<8x256xf32>
    %c1_i32_6 = arith.constant 1 : i32
    %23 = tpu.dynamic_rotate %22 by %c1_i32_6 dim 0 : vector<8x256xf32>, i32 -> vector<8x256xf32>
    %cst = arith.constant 0.000000e+00 : f32
    %24 = vector.shape_cast %18 : vector<8x1xi1> to vector<8x1xi1>
    %25 = vector.broadcast %24 : vector<8x1xi1> to vector<8x256xi1>
    %26 = vector.broadcast %cst : f32 to vector<8x256xf32>
    %27 = arith.select %25, %26, %23 : vector<8x256xi1>, vector<8x256xf32>
    %c7_i32 = arith.constant 7 : i32
    %28 = tpu.dynamic_rotate %22 by %c7_i32 dim 0 : vector<8x256xf32>, i32 -> vector<8x256xf32>
    %cst_7 = arith.constant 0.000000e+00 : f32
    %29 = vector.shape_cast %20 : vector<8x1xi1> to vector<8x1xi1>
    %30 = vector.broadcast %29 : vector<8x1xi1> to vector<8x256xi1>
    %31 = vector.broadcast %cst_7 : f32 to vector<8x256xf32>
    %32 = arith.select %30, %31, %28 : vector<8x256xi1>, vector<8x256xf32>
    %33 = tpu.concatenate %22, %27, %32 in 1 : vector<8x256xf32>, vector<8x256xf32>, vector<8x256xf32> -> vector<8x768xf32>
    %34 = arith.truncf %33 : vector<8x768xf32> to vector<8x768xbf16>
    %c0_8 = arith.constant 0 : index
    %c0_9 = arith.constant 0 : index
    %35 = vector.load %arg1[%c0_8, %c0_9] : memref<768x256xbf16, #tpu.memory_space<vmem>>, vector<768x256xbf16>
    %cst_10 = arith.constant dense<0.000000e+00> : vector<8x256xf32>
    %36 = tpu.matmul %34, %35, %cst_10 {dimension_numbers = #tpu.dot_dimension_numbers<[1], [0], [0], [1], [0, 0, 1, 1], [], []>} : vector<8x768xbf16>, vector<768x256xbf16>, vector<8x256xf32> -> vector<8x256xf32>
    %c0_11 = arith.constant 0 : index
    %c0_12 = arith.constant 0 : index
    %37 = vector.load %arg2[%c0_11, %c0_12] : memref<1x256xf32, #tpu.memory_space<vmem>>, vector<1x256xf32>
    %38 = vector.broadcast %37 : vector<1x256xf32> to vector<8x256xf32>
    %39 = arith.addf %36, %38 : vector<8x256xf32>
    %c0_13 = arith.constant 0 : index
    %c0_14 = arith.constant 0 : index
    %40 = vector.load %arg3[%c0_13, %c0_14] : memref<1x128xf32, #tpu.memory_space<vmem>>, vector<1x128xf32>
    %c0_15 = arith.constant 0 : index
    %c0_16 = arith.constant 0 : index
    %41 = vector.load %arg4[%c0_15, %c0_16] : memref<1x256xf32, #tpu.memory_space<vmem>>, vector<1x256xf32>
    %cst_17 = arith.constant 0.000000e+00 : f32
    %42 = vector.broadcast %cst_17 : f32 to vector<8x256xf32>
    %43 = arith.cmpf oge, %39, %42 : vector<8x256xf32>
    %cst_18 = arith.constant 2.000000e-01 : f32
    %44 = vector.broadcast %cst_18 : f32 to vector<8x256xf32>
    %45 = arith.mulf %44, %39 : vector<8x256xf32>
    %46 = arith.select %43, %39, %45 : vector<8x256xi1>, vector<8x256xf32>
    %cst_19 = arith.constant dense<0.000000e+00> : vector<256xf32>
    %47 = vector.multi_reduction <add>, %46, %cst_19 [0] : vector<8x256xf32> to vector<256xf32>
    %48 = vector.shape_cast %47 : vector<256xf32> to vector<1x256xf32>
    %49 = vector.extract_strided_slice %48 {offsets = [0, 0], sizes = [1, 128], strides = [1, 1]} : vector<1x256xf32> to vector<1x128xf32>
    %50 = vector.extract_strided_slice %48 {offsets = [0, 128], sizes = [1, 128], strides = [1, 1]} : vector<1x256xf32> to vector<1x128xf32>
    %51 = arith.addf %49, %50 : vector<1x128xf32>
    %cst_20 = arith.constant 6.250000e-02 : f32
    %52 = vector.broadcast %cst_20 : f32 to vector<1x128xf32>
    %53 = arith.mulf %51, %52 : vector<1x128xf32>
    %54 = tpu.concatenate %53, %53 in 1 : vector<1x128xf32>, vector<1x128xf32> -> vector<1x256xf32>
    %55 = vector.broadcast %54 : vector<1x256xf32> to vector<8x256xf32>
    %56 = arith.subf %46, %55 : vector<8x256xf32>
    %57 = arith.mulf %56, %56 : vector<8x256xf32>
    %cst_21 = arith.constant dense<0.000000e+00> : vector<256xf32>
    %58 = vector.multi_reduction <add>, %57, %cst_21 [0] : vector<8x256xf32> to vector<256xf32>
    %59 = vector.shape_cast %58 : vector<256xf32> to vector<1x256xf32>
    %60 = vector.extract_strided_slice %59 {offsets = [0, 0], sizes = [1, 128], strides = [1, 1]} : vector<1x256xf32> to vector<1x128xf32>
    %61 = vector.extract_strided_slice %59 {offsets = [0, 128], sizes = [1, 128], strides = [1, 1]} : vector<1x256xf32> to vector<1x128xf32>
    %62 = arith.addf %60, %61 : vector<1x128xf32>
    %cst_22 = arith.constant 6.250000e-02 : f32
    %63 = vector.broadcast %cst_22 : f32 to vector<1x128xf32>
    %64 = arith.mulf %62, %63 : vector<1x128xf32>
    %cst_23 = arith.constant 9.99999974E-6 : f32
    %65 = vector.broadcast %cst_23 : f32 to vector<1x128xf32>
    %66 = arith.addf %64, %65 : vector<1x128xf32>
    %67 = math.rsqrt %66 : vector<1x128xf32>
    %68 = arith.mulf %67, %40 : vector<1x128xf32>
    %69 = tpu.concatenate %68, %68 in 1 : vector<1x128xf32>, vector<1x128xf32> -> vector<1x256xf32>
    %70 = vector.broadcast %69 : vector<1x256xf32> to vector<8x256xf32>
    %71 = arith.mulf %56, %70 : vector<8x256xf32>
    %72 = vector.broadcast %41 : vector<1x256xf32> to vector<8x256xf32>
    %73 = arith.addf %71, %72 : vector<8x256xf32>
    %c1_i32_24 = arith.constant 1 : i32
    %74 = tpu.dynamic_rotate %73 by %c1_i32_24 dim 0 : vector<8x256xf32>, i32 -> vector<8x256xf32>
    %cst_25 = arith.constant 0.000000e+00 : f32
    %75 = vector.shape_cast %18 : vector<8x1xi1> to vector<8x1xi1>
    %76 = vector.broadcast %75 : vector<8x1xi1> to vector<8x256xi1>
    %77 = vector.broadcast %cst_25 : f32 to vector<8x256xf32>
    %78 = arith.select %76, %77, %74 : vector<8x256xi1>, vector<8x256xf32>
    %c7_i32_26 = arith.constant 7 : i32
    %79 = tpu.dynamic_rotate %73 by %c7_i32_26 dim 0 : vector<8x256xf32>, i32 -> vector<8x256xf32>
    %cst_27 = arith.constant 0.000000e+00 : f32
    %80 = vector.shape_cast %20 : vector<8x1xi1> to vector<8x1xi1>
    %81 = vector.broadcast %80 : vector<8x1xi1> to vector<8x256xi1>
    %82 = vector.broadcast %cst_27 : f32 to vector<8x256xf32>
    %83 = arith.select %81, %82, %79 : vector<8x256xi1>, vector<8x256xf32>
    %84 = tpu.concatenate %73, %78, %83 in 1 : vector<8x256xf32>, vector<8x256xf32>, vector<8x256xf32> -> vector<8x768xf32>
    %85 = arith.truncf %84 : vector<8x768xf32> to vector<8x768xbf16>
    %c0_28 = arith.constant 0 : index
    %c0_29 = arith.constant 0 : index
    %86 = vector.load %arg5[%c0_28, %c0_29] : memref<768x256xbf16, #tpu.memory_space<vmem>>, vector<768x256xbf16>
    %cst_30 = arith.constant dense<0.000000e+00> : vector<8x256xf32>
    %87 = tpu.matmul %85, %86, %cst_30 {dimension_numbers = #tpu.dot_dimension_numbers<[1], [0], [0], [1], [0, 0, 1, 1], [], []>} : vector<8x768xbf16>, vector<768x256xbf16>, vector<8x256xf32> -> vector<8x256xf32>
    %c0_31 = arith.constant 0 : index
    %c0_32 = arith.constant 0 : index
    %88 = vector.load %arg6[%c0_31, %c0_32] : memref<1x256xf32, #tpu.memory_space<vmem>>, vector<1x256xf32>
    %89 = vector.broadcast %88 : vector<1x256xf32> to vector<8x256xf32>
    %90 = arith.addf %87, %89 : vector<8x256xf32>
    %c0_33 = arith.constant 0 : index
    %c0_34 = arith.constant 0 : index
    %91 = vector.load %arg7[%c0_33, %c0_34] : memref<1x64xf32, #tpu.memory_space<vmem>>, vector<1x64xf32>
    %c0_35 = arith.constant 0 : index
    %c0_36 = arith.constant 0 : index
    %92 = vector.load %arg8[%c0_35, %c0_36] : memref<1x256xf32, #tpu.memory_space<vmem>>, vector<1x256xf32>
    %cst_37 = arith.constant 0.000000e+00 : f32
    %93 = vector.broadcast %cst_37 : f32 to vector<8x256xf32>
    %94 = arith.cmpf oge, %90, %93 : vector<8x256xf32>
    %cst_38 = arith.constant 2.000000e-01 : f32
    %95 = vector.broadcast %cst_38 : f32 to vector<8x256xf32>
    %96 = arith.mulf %95, %90 : vector<8x256xf32>
    %97 = arith.select %94, %90, %96 : vector<8x256xi1>, vector<8x256xf32>
    %cst_39 = arith.constant dense<0.000000e+00> : vector<256xf32>
    %98 = vector.multi_reduction <add>, %97, %cst_39 [0] : vector<8x256xf32> to vector<256xf32>
    %99 = vector.shape_cast %98 : vector<256xf32> to vector<1x256xf32>
    %100 = vector.extract_strided_slice %99 {offsets = [0, 0], sizes = [1, 64], strides = [1, 1]} : vector<1x256xf32> to vector<1x64xf32>
    %101 = vector.extract_strided_slice %99 {offsets = [0, 64], sizes = [1, 64], strides = [1, 1]} : vector<1x256xf32> to vector<1x64xf32>
    %102 = arith.addf %100, %101 : vector<1x64xf32>
    %103 = vector.extract_strided_slice %99 {offsets = [0, 128], sizes = [1, 64], strides = [1, 1]} : vector<1x256xf32> to vector<1x64xf32>
    %104 = arith.addf %102, %103 : vector<1x64xf32>
    %105 = vector.extract_strided_slice %99 {offsets = [0, 192], sizes = [1, 64], strides = [1, 1]} : vector<1x256xf32> to vector<1x64xf32>
    %106 = arith.addf %104, %105 : vector<1x64xf32>
    %cst_40 = arith.constant 3.125000e-02 : f32
    %107 = vector.broadcast %cst_40 : f32 to vector<1x64xf32>
    %108 = arith.mulf %106, %107 : vector<1x64xf32>
    %109 = tpu.concatenate %108, %108, %108, %108 in 1 : vector<1x64xf32>, vector<1x64xf32>, vector<1x64xf32>, vector<1x64xf32> -> vector<1x256xf32>
    %110 = vector.broadcast %109 : vector<1x256xf32> to vector<8x256xf32>
    %111 = arith.subf %97, %110 : vector<8x256xf32>
    %112 = arith.mulf %111, %111 : vector<8x256xf32>
    %cst_41 = arith.constant dense<0.000000e+00> : vector<256xf32>
    %113 = vector.multi_reduction <add>, %112, %cst_41 [0] : vector<8x256xf32> to vector<256xf32>
    %114 = vector.shape_cast %113 : vector<256xf32> to vector<1x256xf32>
    %115 = vector.extract_strided_slice %114 {offsets = [0, 0], sizes = [1, 64], strides = [1, 1]} : vector<1x256xf32> to vector<1x64xf32>
    %116 = vector.extract_strided_slice %114 {offsets = [0, 64], sizes = [1, 64], strides = [1, 1]} : vector<1x256xf32> to vector<1x64xf32>
    %117 = arith.addf %115, %116 : vector<1x64xf32>
    %118 = vector.extract_strided_slice %114 {offsets = [0, 128], sizes = [1, 64], strides = [1, 1]} : vector<1x256xf32> to vector<1x64xf32>
    %119 = arith.addf %117, %118 : vector<1x64xf32>
    %120 = vector.extract_strided_slice %114 {offsets = [0, 192], sizes = [1, 64], strides = [1, 1]} : vector<1x256xf32> to vector<1x64xf32>
    %121 = arith.addf %119, %120 : vector<1x64xf32>
    %cst_42 = arith.constant 3.125000e-02 : f32
    %122 = vector.broadcast %cst_42 : f32 to vector<1x64xf32>
    %123 = arith.mulf %121, %122 : vector<1x64xf32>
    %cst_43 = arith.constant 9.99999974E-6 : f32
    %124 = vector.broadcast %cst_43 : f32 to vector<1x64xf32>
    %125 = arith.addf %123, %124 : vector<1x64xf32>
    %126 = math.rsqrt %125 : vector<1x64xf32>
    %127 = arith.mulf %126, %91 : vector<1x64xf32>
    %128 = tpu.concatenate %127, %127, %127, %127 in 1 : vector<1x64xf32>, vector<1x64xf32>, vector<1x64xf32>, vector<1x64xf32> -> vector<1x256xf32>
    %129 = vector.broadcast %128 : vector<1x256xf32> to vector<8x256xf32>
    %130 = arith.mulf %111, %129 : vector<8x256xf32>
    %131 = vector.broadcast %92 : vector<1x256xf32> to vector<8x256xf32>
    %132 = arith.addf %130, %131 : vector<8x256xf32>
    %c1_i32_44 = arith.constant 1 : i32
    %133 = tpu.dynamic_rotate %132 by %c1_i32_44 dim 0 : vector<8x256xf32>, i32 -> vector<8x256xf32>
    %cst_45 = arith.constant 0.000000e+00 : f32
    %134 = vector.shape_cast %18 : vector<8x1xi1> to vector<8x1xi1>
    %135 = vector.broadcast %134 : vector<8x1xi1> to vector<8x256xi1>
    %136 = vector.broadcast %cst_45 : f32 to vector<8x256xf32>
    %137 = arith.select %135, %136, %133 : vector<8x256xi1>, vector<8x256xf32>
    %c7_i32_46 = arith.constant 7 : i32
    %138 = tpu.dynamic_rotate %132 by %c7_i32_46 dim 0 : vector<8x256xf32>, i32 -> vector<8x256xf32>
    %cst_47 = arith.constant 0.000000e+00 : f32
    %139 = vector.shape_cast %20 : vector<8x1xi1> to vector<8x1xi1>
    %140 = vector.broadcast %139 : vector<8x1xi1> to vector<8x256xi1>
    %141 = vector.broadcast %cst_47 : f32 to vector<8x256xf32>
    %142 = arith.select %140, %141, %138 : vector<8x256xi1>, vector<8x256xf32>
    %143 = tpu.concatenate %132, %137, %142 in 1 : vector<8x256xf32>, vector<8x256xf32>, vector<8x256xf32> -> vector<8x768xf32>
    %144 = arith.truncf %143 : vector<8x768xf32> to vector<8x768xbf16>
    %c0_48 = arith.constant 0 : index
    %c0_49 = arith.constant 0 : index
    %145 = vector.load %arg9[%c0_48, %c0_49] : memref<768x256xbf16, #tpu.memory_space<vmem>>, vector<768x256xbf16>
    %cst_50 = arith.constant dense<0.000000e+00> : vector<8x256xf32>
    %146 = tpu.matmul %144, %145, %cst_50 {dimension_numbers = #tpu.dot_dimension_numbers<[1], [0], [0], [1], [0, 0, 1, 1], [], []>} : vector<8x768xbf16>, vector<768x256xbf16>, vector<8x256xf32> -> vector<8x256xf32>
    %c0_51 = arith.constant 0 : index
    %c0_52 = arith.constant 0 : index
    %147 = vector.load %arg10[%c0_51, %c0_52] : memref<1x256xf32, #tpu.memory_space<vmem>>, vector<1x256xf32>
    %148 = vector.broadcast %147 : vector<1x256xf32> to vector<8x256xf32>
    %149 = arith.addf %146, %148 : vector<8x256xf32>
    %c0_53 = arith.constant 0 : index
    %c0_54 = arith.constant 0 : index
    %150 = vector.load %arg11[%c0_53, %c0_54] : memref<1x32xf32, #tpu.memory_space<vmem>>, vector<1x32xf32>
    %c0_55 = arith.constant 0 : index
    %c0_56 = arith.constant 0 : index
    %151 = vector.load %arg12[%c0_55, %c0_56] : memref<1x256xf32, #tpu.memory_space<vmem>>, vector<1x256xf32>
    %cst_57 = arith.constant 0.000000e+00 : f32
    %152 = vector.broadcast %cst_57 : f32 to vector<8x256xf32>
    %153 = arith.cmpf oge, %149, %152 : vector<8x256xf32>
    %cst_58 = arith.constant 2.000000e-01 : f32
    %154 = vector.broadcast %cst_58 : f32 to vector<8x256xf32>
    %155 = arith.mulf %154, %149 : vector<8x256xf32>
    %156 = arith.select %153, %149, %155 : vector<8x256xi1>, vector<8x256xf32>
    %cst_59 = arith.constant dense<0.000000e+00> : vector<256xf32>
    %157 = vector.multi_reduction <add>, %156, %cst_59 [0] : vector<8x256xf32> to vector<256xf32>
    %158 = vector.shape_cast %157 : vector<256xf32> to vector<1x256xf32>
    %159 = vector.extract_strided_slice %158 {offsets = [0, 0], sizes = [1, 32], strides = [1, 1]} : vector<1x256xf32> to vector<1x32xf32>
    %160 = vector.extract_strided_slice %158 {offsets = [0, 32], sizes = [1, 32], strides = [1, 1]} : vector<1x256xf32> to vector<1x32xf32>
    %161 = arith.addf %159, %160 : vector<1x32xf32>
    %162 = vector.extract_strided_slice %158 {offsets = [0, 64], sizes = [1, 32], strides = [1, 1]} : vector<1x256xf32> to vector<1x32xf32>
    %163 = arith.addf %161, %162 : vector<1x32xf32>
    %164 = vector.extract_strided_slice %158 {offsets = [0, 96], sizes = [1, 32], strides = [1, 1]} : vector<1x256xf32> to vector<1x32xf32>
    %165 = arith.addf %163, %164 : vector<1x32xf32>
    %166 = vector.extract_strided_slice %158 {offsets = [0, 128], sizes = [1, 32], strides = [1, 1]} : vector<1x256xf32> to vector<1x32xf32>
    %167 = arith.addf %165, %166 : vector<1x32xf32>
    %168 = vector.extract_strided_slice %158 {offsets = [0, 160], sizes = [1, 32], strides = [1, 1]} : vector<1x256xf32> to vector<1x32xf32>
    %169 = arith.addf %167, %168 : vector<1x32xf32>
    %170 = vector.extract_strided_slice %158 {offsets = [0, 192], sizes = [1, 32], strides = [1, 1]} : vector<1x256xf32> to vector<1x32xf32>
    %171 = arith.addf %169, %170 : vector<1x32xf32>
    %172 = vector.extract_strided_slice %158 {offsets = [0, 224], sizes = [1, 32], strides = [1, 1]} : vector<1x256xf32> to vector<1x32xf32>
    %173 = arith.addf %171, %172 : vector<1x32xf32>
    %cst_60 = arith.constant 1.562500e-02 : f32
    %174 = vector.broadcast %cst_60 : f32 to vector<1x32xf32>
    %175 = arith.mulf %173, %174 : vector<1x32xf32>
    %176 = tpu.concatenate %175, %175, %175, %175, %175, %175, %175, %175 in 1 : vector<1x32xf32>, vector<1x32xf32>, vector<1x32xf32>, vector<1x32xf32>, vector<1x32xf32>, vector<1x32xf32>, vector<1x32xf32>, vector<1x32xf32> -> vector<1x256xf32>
    %177 = vector.broadcast %176 : vector<1x256xf32> to vector<8x256xf32>
    %178 = arith.subf %156, %177 : vector<8x256xf32>
    %179 = arith.mulf %178, %178 : vector<8x256xf32>
    %cst_61 = arith.constant dense<0.000000e+00> : vector<256xf32>
    %180 = vector.multi_reduction <add>, %179, %cst_61 [0] : vector<8x256xf32> to vector<256xf32>
    %181 = vector.shape_cast %180 : vector<256xf32> to vector<1x256xf32>
    %182 = vector.extract_strided_slice %181 {offsets = [0, 0], sizes = [1, 32], strides = [1, 1]} : vector<1x256xf32> to vector<1x32xf32>
    %183 = vector.extract_strided_slice %181 {offsets = [0, 32], sizes = [1, 32], strides = [1, 1]} : vector<1x256xf32> to vector<1x32xf32>
    %184 = arith.addf %182, %183 : vector<1x32xf32>
    %185 = vector.extract_strided_slice %181 {offsets = [0, 64], sizes = [1, 32], strides = [1, 1]} : vector<1x256xf32> to vector<1x32xf32>
    %186 = arith.addf %184, %185 : vector<1x32xf32>
    %187 = vector.extract_strided_slice %181 {offsets = [0, 96], sizes = [1, 32], strides = [1, 1]} : vector<1x256xf32> to vector<1x32xf32>
    %188 = arith.addf %186, %187 : vector<1x32xf32>
    %189 = vector.extract_strided_slice %181 {offsets = [0, 128], sizes = [1, 32], strides = [1, 1]} : vector<1x256xf32> to vector<1x32xf32>
    %190 = arith.addf %188, %189 : vector<1x32xf32>
    %191 = vector.extract_strided_slice %181 {offsets = [0, 160], sizes = [1, 32], strides = [1, 1]} : vector<1x256xf32> to vector<1x32xf32>
    %192 = arith.addf %190, %191 : vector<1x32xf32>
    %193 = vector.extract_strided_slice %181 {offsets = [0, 192], sizes = [1, 32], strides = [1, 1]} : vector<1x256xf32> to vector<1x32xf32>
    %194 = arith.addf %192, %193 : vector<1x32xf32>
    %195 = vector.extract_strided_slice %181 {offsets = [0, 224], sizes = [1, 32], strides = [1, 1]} : vector<1x256xf32> to vector<1x32xf32>
    %196 = arith.addf %194, %195 : vector<1x32xf32>
    %cst_62 = arith.constant 1.562500e-02 : f32
    %197 = vector.broadcast %cst_62 : f32 to vector<1x32xf32>
    %198 = arith.mulf %196, %197 : vector<1x32xf32>
    %cst_63 = arith.constant 9.99999974E-6 : f32
    %199 = vector.broadcast %cst_63 : f32 to vector<1x32xf32>
    %200 = arith.addf %198, %199 : vector<1x32xf32>
    %201 = math.rsqrt %200 : vector<1x32xf32>
    %202 = arith.mulf %201, %150 : vector<1x32xf32>
    %203 = tpu.concatenate %202, %202, %202, %202, %202, %202, %202, %202 in 1 : vector<1x32xf32>, vector<1x32xf32>, vector<1x32xf32>, vector<1x32xf32>, vector<1x32xf32>, vector<1x32xf32>, vector<1x32xf32>, vector<1x32xf32> -> vector<1x256xf32>
    %204 = vector.broadcast %203 : vector<1x256xf32> to vector<8x256xf32>
    %205 = arith.mulf %178, %204 : vector<8x256xf32>
    %206 = vector.broadcast %151 : vector<1x256xf32> to vector<8x256xf32>
    %207 = arith.addf %205, %206 : vector<8x256xf32>
    %c1_i32_64 = arith.constant 1 : i32
    %208 = tpu.dynamic_rotate %207 by %c1_i32_64 dim 0 : vector<8x256xf32>, i32 -> vector<8x256xf32>
    %cst_65 = arith.constant 0.000000e+00 : f32
    %209 = vector.shape_cast %18 : vector<8x1xi1> to vector<8x1xi1>
    %210 = vector.broadcast %209 : vector<8x1xi1> to vector<8x256xi1>
    %211 = vector.broadcast %cst_65 : f32 to vector<8x256xf32>
    %212 = arith.select %210, %211, %208 : vector<8x256xi1>, vector<8x256xf32>
    %c7_i32_66 = arith.constant 7 : i32
    %213 = tpu.dynamic_rotate %207 by %c7_i32_66 dim 0 : vector<8x256xf32>, i32 -> vector<8x256xf32>
    %cst_67 = arith.constant 0.000000e+00 : f32
    %214 = vector.shape_cast %20 : vector<8x1xi1> to vector<8x1xi1>
    %215 = vector.broadcast %214 : vector<8x1xi1> to vector<8x256xi1>
    %216 = vector.broadcast %cst_67 : f32 to vector<8x256xf32>
    %217 = arith.select %215, %216, %213 : vector<8x256xi1>, vector<8x256xf32>
    %218 = tpu.concatenate %207, %212, %217 in 1 : vector<8x256xf32>, vector<8x256xf32>, vector<8x256xf32> -> vector<8x768xf32>
    %219 = arith.truncf %218 : vector<8x768xf32> to vector<8x768xbf16>
    %c0_68 = arith.constant 0 : index
    %c0_69 = arith.constant 0 : index
    %220 = vector.load %arg13[%c0_68, %c0_69] : memref<768x256xbf16, #tpu.memory_space<vmem>>, vector<768x256xbf16>
    %cst_70 = arith.constant dense<0.000000e+00> : vector<8x256xf32>
    %221 = tpu.matmul %219, %220, %cst_70 {dimension_numbers = #tpu.dot_dimension_numbers<[1], [0], [0], [1], [0, 0, 1, 1], [], []>} : vector<8x768xbf16>, vector<768x256xbf16>, vector<8x256xf32> -> vector<8x256xf32>
    %c0_71 = arith.constant 0 : index
    %c0_72 = arith.constant 0 : index
    %222 = vector.load %arg14[%c0_71, %c0_72] : memref<1x256xf32, #tpu.memory_space<vmem>>, vector<1x256xf32>
    %223 = vector.broadcast %222 : vector<1x256xf32> to vector<8x256xf32>
    %224 = arith.addf %221, %223 : vector<8x256xf32>
    %c0_73 = arith.constant 0 : index
    %c0_74 = arith.constant 0 : index
    %225 = vector.load %arg15[%c0_73, %c0_74] : memref<1x16xf32, #tpu.memory_space<vmem>>, vector<1x16xf32>
    %c0_75 = arith.constant 0 : index
    %c0_76 = arith.constant 0 : index
    %226 = vector.load %arg16[%c0_75, %c0_76] : memref<1x256xf32, #tpu.memory_space<vmem>>, vector<1x256xf32>
    %cst_77 = arith.constant 0.000000e+00 : f32
    %227 = vector.broadcast %cst_77 : f32 to vector<8x256xf32>
    %228 = arith.cmpf oge, %224, %227 : vector<8x256xf32>
    %cst_78 = arith.constant 2.000000e-01 : f32
    %229 = vector.broadcast %cst_78 : f32 to vector<8x256xf32>
    %230 = arith.mulf %229, %224 : vector<8x256xf32>
    %231 = arith.select %228, %224, %230 : vector<8x256xi1>, vector<8x256xf32>
    %cst_79 = arith.constant dense<0.000000e+00> : vector<256xf32>
    %232 = vector.multi_reduction <add>, %231, %cst_79 [0] : vector<8x256xf32> to vector<256xf32>
    %233 = vector.shape_cast %232 : vector<256xf32> to vector<1x256xf32>
    %234 = vector.extract_strided_slice %233 {offsets = [0, 0], sizes = [1, 16], strides = [1, 1]} : vector<1x256xf32> to vector<1x16xf32>
    %235 = vector.extract_strided_slice %233 {offsets = [0, 16], sizes = [1, 16], strides = [1, 1]} : vector<1x256xf32> to vector<1x16xf32>
    %236 = arith.addf %234, %235 : vector<1x16xf32>
    %237 = vector.extract_strided_slice %233 {offsets = [0, 32], sizes = [1, 16], strides = [1, 1]} : vector<1x256xf32> to vector<1x16xf32>
    %238 = arith.addf %236, %237 : vector<1x16xf32>
    %239 = vector.extract_strided_slice %233 {offsets = [0, 48], sizes = [1, 16], strides = [1, 1]} : vector<1x256xf32> to vector<1x16xf32>
    %240 = arith.addf %238, %239 : vector<1x16xf32>
    %241 = vector.extract_strided_slice %233 {offsets = [0, 64], sizes = [1, 16], strides = [1, 1]} : vector<1x256xf32> to vector<1x16xf32>
    %242 = arith.addf %240, %241 : vector<1x16xf32>
    %243 = vector.extract_strided_slice %233 {offsets = [0, 80], sizes = [1, 16], strides = [1, 1]} : vector<1x256xf32> to vector<1x16xf32>
    %244 = arith.addf %242, %243 : vector<1x16xf32>
    %245 = vector.extract_strided_slice %233 {offsets = [0, 96], sizes = [1, 16], strides = [1, 1]} : vector<1x256xf32> to vector<1x16xf32>
    %246 = arith.addf %244, %245 : vector<1x16xf32>
    %247 = vector.extract_strided_slice %233 {offsets = [0, 112], sizes = [1, 16], strides = [1, 1]} : vector<1x256xf32> to vector<1x16xf32>
    %248 = arith.addf %246, %247 : vector<1x16xf32>
    %249 = vector.extract_strided_slice %233 {offsets = [0, 128], sizes = [1, 16], strides = [1, 1]} : vector<1x256xf32> to vector<1x16xf32>
    %250 = arith.addf %248, %249 : vector<1x16xf32>
    %251 = vector.extract_strided_slice %233 {offsets = [0, 144], sizes = [1, 16], strides = [1, 1]} : vector<1x256xf32> to vector<1x16xf32>
    %252 = arith.addf %250, %251 : vector<1x16xf32>
    %253 = vector.extract_strided_slice %233 {offsets = [0, 160], sizes = [1, 16], strides = [1, 1]} : vector<1x256xf32> to vector<1x16xf32>
    %254 = arith.addf %252, %253 : vector<1x16xf32>
    %255 = vector.extract_strided_slice %233 {offsets = [0, 176], sizes = [1, 16], strides = [1, 1]} : vector<1x256xf32> to vector<1x16xf32>
    %256 = arith.addf %254, %255 : vector<1x16xf32>
    %257 = vector.extract_strided_slice %233 {offsets = [0, 192], sizes = [1, 16], strides = [1, 1]} : vector<1x256xf32> to vector<1x16xf32>
    %258 = arith.addf %256, %257 : vector<1x16xf32>
    %259 = vector.extract_strided_slice %233 {offsets = [0, 208], sizes = [1, 16], strides = [1, 1]} : vector<1x256xf32> to vector<1x16xf32>
    %260 = arith.addf %258, %259 : vector<1x16xf32>
    %261 = vector.extract_strided_slice %233 {offsets = [0, 224], sizes = [1, 16], strides = [1, 1]} : vector<1x256xf32> to vector<1x16xf32>
    %262 = arith.addf %260, %261 : vector<1x16xf32>
    %263 = vector.extract_strided_slice %233 {offsets = [0, 240], sizes = [1, 16], strides = [1, 1]} : vector<1x256xf32> to vector<1x16xf32>
    %264 = arith.addf %262, %263 : vector<1x16xf32>
    %cst_80 = arith.constant 7.812500e-03 : f32
    %265 = vector.broadcast %cst_80 : f32 to vector<1x16xf32>
    %266 = arith.mulf %264, %265 : vector<1x16xf32>
    %267 = tpu.concatenate %266, %266, %266, %266, %266, %266, %266, %266, %266, %266, %266, %266, %266, %266, %266, %266 in 1 : vector<1x16xf32>, vector<1x16xf32>, vector<1x16xf32>, vector<1x16xf32>, vector<1x16xf32>, vector<1x16xf32>, vector<1x16xf32>, vector<1x16xf32>, vector<1x16xf32>, vector<1x16xf32>, vector<1x16xf32>, vector<1x16xf32>, vector<1x16xf32>, vector<1x16xf32>, vector<1x16xf32>, vector<1x16xf32> -> vector<1x256xf32>
    %268 = vector.broadcast %267 : vector<1x256xf32> to vector<8x256xf32>
    %269 = arith.subf %231, %268 : vector<8x256xf32>
    %270 = arith.mulf %269, %269 : vector<8x256xf32>
    %cst_81 = arith.constant dense<0.000000e+00> : vector<256xf32>
    %271 = vector.multi_reduction <add>, %270, %cst_81 [0] : vector<8x256xf32> to vector<256xf32>
    %272 = vector.shape_cast %271 : vector<256xf32> to vector<1x256xf32>
    %273 = vector.extract_strided_slice %272 {offsets = [0, 0], sizes = [1, 16], strides = [1, 1]} : vector<1x256xf32> to vector<1x16xf32>
    %274 = vector.extract_strided_slice %272 {offsets = [0, 16], sizes = [1, 16], strides = [1, 1]} : vector<1x256xf32> to vector<1x16xf32>
    %275 = arith.addf %273, %274 : vector<1x16xf32>
    %276 = vector.extract_strided_slice %272 {offsets = [0, 32], sizes = [1, 16], strides = [1, 1]} : vector<1x256xf32> to vector<1x16xf32>
    %277 = arith.addf %275, %276 : vector<1x16xf32>
    %278 = vector.extract_strided_slice %272 {offsets = [0, 48], sizes = [1, 16], strides = [1, 1]} : vector<1x256xf32> to vector<1x16xf32>
    %279 = arith.addf %277, %278 : vector<1x16xf32>
    %280 = vector.extract_strided_slice %272 {offsets = [0, 64], sizes = [1, 16], strides = [1, 1]} : vector<1x256xf32> to vector<1x16xf32>
    %281 = arith.addf %279, %280 : vector<1x16xf32>
    %282 = vector.extract_strided_slice %272 {offsets = [0, 80], sizes = [1, 16], strides = [1, 1]} : vector<1x256xf32> to vector<1x16xf32>
    %283 = arith.addf %281, %282 : vector<1x16xf32>
    %284 = vector.extract_strided_slice %272 {offsets = [0, 96], sizes = [1, 16], strides = [1, 1]} : vector<1x256xf32> to vector<1x16xf32>
    %285 = arith.addf %283, %284 : vector<1x16xf32>
    %286 = vector.extract_strided_slice %272 {offsets = [0, 112], sizes = [1, 16], strides = [1, 1]} : vector<1x256xf32> to vector<1x16xf32>
    %287 = arith.addf %285, %286 : vector<1x16xf32>
    %288 = vector.extract_strided_slice %272 {offsets = [0, 128], sizes = [1, 16], strides = [1, 1]} : vector<1x256xf32> to vector<1x16xf32>
    %289 = arith.addf %287, %288 : vector<1x16xf32>
    %290 = vector.extract_strided_slice %272 {offsets = [0, 144], sizes = [1, 16], strides = [1, 1]} : vector<1x256xf32> to vector<1x16xf32>
    %291 = arith.addf %289, %290 : vector<1x16xf32>
    %292 = vector.extract_strided_slice %272 {offsets = [0, 160], sizes = [1, 16], strides = [1, 1]} : vector<1x256xf32> to vector<1x16xf32>
    %293 = arith.addf %291, %292 : vector<1x16xf32>
    %294 = vector.extract_strided_slice %272 {offsets = [0, 176], sizes = [1, 16], strides = [1, 1]} : vector<1x256xf32> to vector<1x16xf32>
    %295 = arith.addf %293, %294 : vector<1x16xf32>
    %296 = vector.extract_strided_slice %272 {offsets = [0, 192], sizes = [1, 16], strides = [1, 1]} : vector<1x256xf32> to vector<1x16xf32>
    %297 = arith.addf %295, %296 : vector<1x16xf32>
    %298 = vector.extract_strided_slice %272 {offsets = [0, 208], sizes = [1, 16], strides = [1, 1]} : vector<1x256xf32> to vector<1x16xf32>
    %299 = arith.addf %297, %298 : vector<1x16xf32>
    %300 = vector.extract_strided_slice %272 {offsets = [0, 224], sizes = [1, 16], strides = [1, 1]} : vector<1x256xf32> to vector<1x16xf32>
    %301 = arith.addf %299, %300 : vector<1x16xf32>
    %302 = vector.extract_strided_slice %272 {offsets = [0, 240], sizes = [1, 16], strides = [1, 1]} : vector<1x256xf32> to vector<1x16xf32>
    %303 = arith.addf %301, %302 : vector<1x16xf32>
    %cst_82 = arith.constant 7.812500e-03 : f32
    %304 = vector.broadcast %cst_82 : f32 to vector<1x16xf32>
    %305 = arith.mulf %303, %304 : vector<1x16xf32>
    %cst_83 = arith.constant 9.99999974E-6 : f32
    %306 = vector.broadcast %cst_83 : f32 to vector<1x16xf32>
    %307 = arith.addf %305, %306 : vector<1x16xf32>
    %308 = math.rsqrt %307 : vector<1x16xf32>
    %309 = arith.mulf %308, %225 : vector<1x16xf32>
    %310 = tpu.concatenate %309, %309, %309, %309, %309, %309, %309, %309, %309, %309, %309, %309, %309, %309, %309, %309 in 1 : vector<1x16xf32>, vector<1x16xf32>, vector<1x16xf32>, vector<1x16xf32>, vector<1x16xf32>, vector<1x16xf32>, vector<1x16xf32>, vector<1x16xf32>, vector<1x16xf32>, vector<1x16xf32>, vector<1x16xf32>, vector<1x16xf32>, vector<1x16xf32>, vector<1x16xf32>, vector<1x16xf32>, vector<1x16xf32> -> vector<1x256xf32>
    %311 = vector.broadcast %310 : vector<1x256xf32> to vector<8x256xf32>
    %312 = arith.mulf %269, %311 : vector<8x256xf32>
    %313 = vector.broadcast %226 : vector<1x256xf32> to vector<8x256xf32>
    %314 = arith.addf %312, %313 : vector<8x256xf32>
    %c1_i32_84 = arith.constant 1 : i32
    %315 = tpu.dynamic_rotate %314 by %c1_i32_84 dim 0 : vector<8x256xf32>, i32 -> vector<8x256xf32>
    %cst_85 = arith.constant 0.000000e+00 : f32
    %316 = vector.shape_cast %18 : vector<8x1xi1> to vector<8x1xi1>
    %317 = vector.broadcast %316 : vector<8x1xi1> to vector<8x256xi1>
    %318 = vector.broadcast %cst_85 : f32 to vector<8x256xf32>
    %319 = arith.select %317, %318, %315 : vector<8x256xi1>, vector<8x256xf32>
    %c7_i32_86 = arith.constant 7 : i32
    %320 = tpu.dynamic_rotate %314 by %c7_i32_86 dim 0 : vector<8x256xf32>, i32 -> vector<8x256xf32>
    %cst_87 = arith.constant 0.000000e+00 : f32
    %321 = vector.shape_cast %20 : vector<8x1xi1> to vector<8x1xi1>
    %322 = vector.broadcast %321 : vector<8x1xi1> to vector<8x256xi1>
    %323 = vector.broadcast %cst_87 : f32 to vector<8x256xf32>
    %324 = arith.select %322, %323, %320 : vector<8x256xi1>, vector<8x256xf32>
    %325 = tpu.concatenate %314, %319, %324 in 1 : vector<8x256xf32>, vector<8x256xf32>, vector<8x256xf32> -> vector<8x768xf32>
    %326 = arith.truncf %325 : vector<8x768xf32> to vector<8x768xbf16>
    %c0_88 = arith.constant 0 : index
    %c0_89 = arith.constant 0 : index
    %327 = vector.load %arg17[%c0_88, %c0_89] : memref<768x128xbf16, #tpu.memory_space<vmem>>, vector<768x128xbf16>
    %cst_90 = arith.constant dense<0.000000e+00> : vector<8x128xf32>
    %328 = tpu.matmul %326, %327, %cst_90 {dimension_numbers = #tpu.dot_dimension_numbers<[1], [0], [0], [1], [0, 0, 1, 1], [], []>} : vector<8x768xbf16>, vector<768x128xbf16>, vector<8x128xf32> -> vector<8x128xf32>
    %c0_91 = arith.constant 0 : index
    %c0_92 = arith.constant 0 : index
    %329 = vector.load %arg18[%c0_91, %c0_92] : memref<1x128xf32, #tpu.memory_space<vmem>>, vector<1x128xf32>
    %330 = vector.broadcast %329 : vector<1x128xf32> to vector<8x128xf32>
    %331 = arith.addf %328, %330 : vector<8x128xf32>
    %332 = math.tanh %331 : vector<8x128xf32>
    %c0_93 = arith.constant 0 : index
    %c0_94 = arith.constant 0 : index
    %333 = vector.load %arg19[%c0_93, %c0_94] : memref<8x128xf32, #tpu.memory_space<vmem>>, vector<8x128xf32>
    tpu.vector_store %arg19[%c0_93, %c0_94], %332 {strides = array<i32>} : memref<8x128xf32, #tpu.memory_space<vmem>>, vector<8x128xf32>,
    return
  }
}

</mosaic_0001>

<llo_original>
// kernel: generator_forward.2
$region0: #{generator_forward.2}
  #allocation0 [shape = 'u32[]', space=smem, size = 0x4, offset = 0x4, fixed_abs, tag = 'smem constant byte address 0x4 - core index']
  #allocation1 [shape = 'u32[72,128]{1,0:T(1,128)}', space=vmem, size = 0x9000, scoped, tag = 'internal scratch']
  %s0 = inlined_call_operand.vmem [shape: f32[4,32], index: 0, kind: input, shape index: {}]
  %s1 = inlined_call_operand.hbm [shape: bf16[32,512], index: 1, kind: input, shape index: {}]
  %s2 = inlined_call_operand.vmem [shape: f32[1,512], index: 2, kind: input, shape index: {}]
  %s3 = inlined_call_operand.vmem [shape: bf16[4,512], index: 3, kind: output, shape index: {}]
  %s4 = sld [smem:[#allocation0]]
  $region26: #{generator_forward.2} parent=0
    _
  %s6 = ssub.s32 1, %s4
  %s7 = scalar_select 0, %s6, %s4
  $region1: #{generator_forward.2} parent=0
    #allocation2 [shape = 'u8[32768]{0}', space=vmem, size = 0x8000, scoped, tag = 'input window, operand 1, single buffered']
    #allocation3 [shape = 's32[1]{0}', space=sflag, size = 0x4, scoped, tag = 'scoped memory for generator_forward.2']
    %8 = vsyncpa [#allocation3], 0
    // Predicated region
    $region2: #{generator_forward.2} parent=1 // pred_check
      _
    $region3: #{generator_forward.2} parent=1 // pred_check_branch
      %10 = sbr.rel (0) target = $region5
    $region4: #{generator_forward.2} parent=1 // pred_region
      _
    $region5: #{generator_forward.2} parent=1 // pred_fallthru
      _
    // Predicated region
    $region6: #{generator_forward.2} parent=1 // pred_check
      _
    $region7: #{generator_forward.2} parent=1 // pred_check_branch
      %12 = sbr.rel (0) target = $region9
    $region8: #{generator_forward.2} parent=1 // pred_region
      %14 = vsyncadd [#allocation3], 0
      %s15 = sshll.u32 %s1, 4
      %s16 = int_to_ptr.hbm [resolvable:$true] %s15
      %s17 = sshll.u32 [#allocation2], 4
      %s18 = int_to_ptr.vmem [resolvable:$true] %s17
      %23 = dma.hbm_to_vmem [thread:$0]  %s16, 1024, %s18, [#allocation3], 256, 256, 16
    $region9: #{generator_forward.2} parent=1 // pred_fallthru
      _
    // Predicated region
    $region10: #{generator_forward.2} parent=1 // pred_check
      _
    $region11: #{generator_forward.2} parent=1 // pred_check_branch
      %25 = sbr.rel (0) target = $region13
    $region12: #{generator_forward.2} parent=1 // pred_region
      _
    $region13: #{generator_forward.2} parent=1 // pred_fallthru
      _
    // Predicated region
    $region14: #{generator_forward.2} parent=1 // pred_check
      _
    $region15: #{generator_forward.2} parent=1 // pred_check_branch
      %27 = sbr.rel (0) target = $region17
    $region16: #{generator_forward.2} parent=1 // pred_region
      %29 = dma.done [#allocation3], 1024
    $region17: #{generator_forward.2} parent=1 // pred_fallthru
      _
    %v31 = vld [vmem:[%s0] sm:$0xf]
    %v32 = vpack.c.bf16 %v31, %v31
    %v33 = vld [vmem:[#allocation2] sm:$0xff]
    %v34 = vld [vmem:[#allocation2 + $0x8] sm:$0xff]
    %v35 = vld [vmem:[#allocation2 + $0x10] sm:$0xff]
    %v36 = vld [vmem:[#allocation2 + $0x18] sm:$0xff]
    %v37 = vld [vmem:[#allocation2 + $0x20] sm:$0xff]
    %v38 = vld [vmem:[#allocation2 + $0x28] sm:$0xff]
    %v39 = vld [vmem:[#allocation2 + $0x30] sm:$0xff]
    %v40 = vld [vmem:[#allocation2 + $0x38] sm:$0xff]
    %v41 = vld [vmem:[%s2] sm:$0xf]
    %v43 = vperm.slane %v41, 0
    %v44 = vperm.slane %v41, 1
    %v45 = vperm.slane %v41, 2
    %v46 = vperm.slane %v41, 3
    %v59 = vunpack.c.l.b16 %v33
    %v60 = vunpack.c.h.b16 %v33
    %v61 = vunpack.c.l.b16 %v34
    %v62 = vunpack.c.h.b16 %v34
    %v63 = vunpack.c.l.b16 %v35
    %v64 = vunpack.c.h.b16 %v35
    %v65 = vunpack.c.l.b16 %v36
    %v66 = vunpack.c.h.b16 %v36
    %v67 = vunpack.c.l.b16 %v37
    %v68 = vunpack.c.h.b16 %v37
    %v69 = vunpack.c.l.b16 %v38
    %v70 = vunpack.c.h.b16 %v38
    %v71 = vunpack.c.l.b16 %v39
    %v72 = vunpack.c.h.b16 %v39
    %v73 = vunpack.c.l.b16 %v40
    %v74 = vunpack.c.h.b16 %v40
    %v75 = vpack.c.b16 %v63, %v59
    %v76 = vpack.c.b16 %v64, %v60
    %v77 = vpack.c.b16 %v65, %v61
    %v78 = vpack.c.b16 %v66, %v62
    %v79 = vpack.c.b16 %v71, %v67
    %v80 = vpack.c.b16 %v72, %v68
    %v81 = vpack.c.b16 %v73, %v69
    %v82 = vpack.c.b16 %v74, %v70
    %vm91 = vcmask 261120
    %v93 = vsel %vm91, %v32, 0
    %95 = vmatpush.bf16.msra.mxu0 0
    %96 = vmatpush.bf16.msra.mxu0 0
    %97 = vmatpush.bf16.msra.mxu0 0
    %98 = vmatpush.bf16.msra.mxu0 0
    %99 = vmatpush.bf16.msra.mxu0 0
    %100 = vmatpush.bf16.msra.mxu0 0
    %101 = vmatpush.bf16.msra.mxu0 %v79
    %102 = vmatpush.bf16.msra.mxu0 %v75
    %103 = vmatmul.bf16.gmra.mxu0 %v93
    %v104 = vpop.f32.mrf.mxu0
    %v105 = vadd.f32 %v43, %v104
    %v106 = vpop.f32.mrf.mxu0
    %107 = vdwg.mxu0
    %108 = vmatpush.bf16.msra.mxu0 0
    %109 = vmatpush.bf16.msra.mxu0 0
    %110 = vmatpush.bf16.msra.mxu0 0
    %111 = vmatpush.bf16.msra.mxu0 0
    %112 = vmatpush.bf16.msra.mxu0 0
    %113 = vmatpush.bf16.msra.mxu0 0
    %114 = vmatpush.bf16.msra.mxu0 %v80
    %115 = vmatpush.bf16.msra.mxu0 %v76
    %116 = vmatmul.bf16.gmra.mxu0 %v93
    %v117 = vpop.f32.mrf.mxu0
    %v118 = vadd.f32 %v44, %v117
    %v119 = vpop.f32.mrf.mxu0
    %120 = vdwg.mxu0
    %121 = vmatpush.bf16.msra.mxu0 0
    %122 = vmatpush.bf16.msra.mxu0 0
    %123 = vmatpush.bf16.msra.mxu0 0
    %124 = vmatpush.bf16.msra.mxu0 0
    %125 = vmatpush.bf16.msra.mxu0 0
    %126 = vmatpush.bf16.msra.mxu0 0
    %127 = vmatpush.bf16.msra.mxu0 %v81
    %128 = vmatpush.bf16.msra.mxu0 %v77
    %129 = vmatmul.bf16.gmra.mxu0 %v93
    %v130 = vpop.f32.mrf.mxu0
    %v131 = vadd.f32 %v45, %v130
    %v132 = vpop.f32.mrf.mxu0
    %133 = vdwg.mxu0
    %134 = vmatpush.bf16.msra.mxu0 0
    %135 = vmatpush.bf16.msra.mxu0 0
    %136 = vmatpush.bf16.msra.mxu0 0
    %137 = vmatpush.bf16.msra.mxu0 0
    %138 = vmatpush.bf16.msra.mxu0 0
    %139 = vmatpush.bf16.msra.mxu0 0
    %140 = vmatpush.bf16.msra.mxu0 %v82
    %141 = vmatpush.bf16.msra.mxu0 %v78
    %142 = vmatmul.bf16.gmra.mxu0 %v93
    %v143 = vpop.f32.mrf.mxu0
    %v144 = vadd.f32 %v46, %v143
    %v145 = vpop.f32.mrf.mxu0
    %146 = vdwg.mxu0
    %v147 = vpack.c.bf16 %v118, %v105
    %v148 = vpack.c.bf16 %v144, %v131
    %v151 = vrot.slane %v147, 2
    %v152 = vrot.slane %v148, 4
    %v153 = vrot.slane %v148, 6
    %vm154 = vcmask 1041408
    %v157 = vsel %vm154, %v147, %v151
    %vm158 = vcmask 1045508
    %v161 = vsel %vm158, %v152, %v153
    %vm162 = vcmask 1043456
    %v163 = vsel %vm162, %v157, %v161
    %165 = vst [vmem:[%s3] sm:$0xff] %v163
    // Predicated region
    $region18: #{generator_forward.2} parent=1 // pred_check
      _
    $region19: #{generator_forward.2} parent=1 // pred_check_branch
      %167 = sbr.rel (0) target = $region21
    $region20: #{generator_forward.2} parent=1 // pred_region
      _
    $region21: #{generator_forward.2} parent=1 // pred_fallthru
      _
    // Predicated region
    $region22: #{generator_forward.2} parent=1 // pred_check
      _
    $region23: #{generator_forward.2} parent=1 // pred_check_branch
      %169 = sbr.rel (0) target = $region25
    $region24: #{generator_forward.2} parent=1 // pred_region
      _
    $region25: #{generator_forward.2} parent=1 // pred_fallthru
      _
    %170 = vsyncpa [#allocation3], 1

// kernel: generator_forward.3
$region0: #{generator_forward.3}
  #allocation0 [shape = 'u32[]', space=smem, size = 0x4, offset = 0x4, fixed_abs, tag = 'smem constant byte address 0x4 - core index']
  #allocation1 [shape = 'u32[72,128]{1,0:T(1,128)}', space=vmem, size = 0x9000, scoped, tag = 'internal scratch']
  %s0 = inlined_call_operand.vmem [shape: bf16[8,256], index: 0, kind: input, shape index: {}]
  %s1 = inlined_call_operand.hbm [shape: bf16[768,256], index: 1, kind: input, shape index: {}]
  %s2 = inlined_call_operand.vmem [shape: f32[1,256], index: 2, kind: input, shape index: {}]
  %s3 = inlined_call_operand.vmem [shape: f32[1,128], index: 3, kind: input, shape index: {}]
  %s4 = inlined_call_operand.vmem [shape: f32[1,256], index: 4, kind: input, shape index: {}]
  %s5 = inlined_call_operand.hbm [shape: bf16[768,256], index: 5, kind: input, shape index: {}]
  %s6 = inlined_call_operand.vmem [shape: f32[1,256], index: 6, kind: input, shape index: {}]
  %s7 = inlined_call_operand.hbm [shape: f32[1,64], index: 7, kind: input, shape index: {}]
  %s8 = inlined_call_operand.vmem [shape: f32[1,256], index: 8, kind: input, shape index: {}]
  %s9 = inlined_call_operand.hbm [shape: bf16[768,256], index: 9, kind: input, shape index: {}]
  %s10 = inlined_call_operand.vmem [shape: f32[1,256], index: 10, kind: input, shape index: {}]
  %s11 = inlined_call_operand.vmem [shape: f32[1,32], index: 11, kind: input, shape index: {}]
  %s12 = inlined_call_operand.vmem [shape: f32[1,256], index: 12, kind: input, shape index: {}]
  %s13 = inlined_call_operand.hbm [shape: bf16[768,256], index: 13, kind: input, shape index: {}]
  %s14 = inlined_call_operand.vmem [shape: f32[1,256], index: 14, kind: input, shape index: {}]
  %s15 = inlined_call_operand.vmem [shape: f32[1,16], index: 15, kind: input, shape index: {}]
  %s16 = inlined_call_operand.vmem [shape: f32[1,256], index: 16, kind: input, shape index: {}]
  %s17 = inlined_call_operand.hbm [shape: bf16[768,128], index: 17, kind: input, shape index: {}]
  %s18 = inlined_call_operand.vmem [shape: f32[1,128], index: 18, kind: input, shape index: {}]
  %s19 = inlined_call_operand.vmem [shape: f32[8,128], index: 19, kind: output, shape index: {}]
  %s20 = sld [smem:[#allocation0]]
  $region110: #{generator_forward.3} parent=0
    _
  %s22 = ssub.s32 1, %s20
  %s23 = scalar_select 0, %s22, %s20
  $region1: #{generator_forward.3} parent=0
    #allocation2 [shape = 'u8[393216]{0}', space=vmem, size = 0x60000, scoped, tag = 'input window, operand 1, single buffered']
    #allocation3 [shape = 's32[1]{0}', space=sflag, size = 0x4, scoped, tag = 'scoped memory for generator_forward.3']
    #allocation4 [shape = 'u8[393216]{0}', space=vmem, size = 0x60000, scoped, tag = 'input window, operand 5, single buffered']
    #allocation5 [shape = 's32[1]{0}', space=sflag, size = 0x4, scoped, tag = 'scoped memory for generator_forward.3']
    #allocation6 [shape = 'u8[512]{0}', space=vmem, size = 0x400, scoped, tag = 'input window, operand 7, single buffered']
    #allocation7 [shape = 'u8[393216]{0}', space=vmem, size = 0x60000, scoped, tag = 'input window, operand 9, single buffered']
    #allocation8 [shape = 's32[1]{0}', space=sflag, size = 0x4, scoped, tag = 'scoped memory for generator_forward.3']
    #allocation9 [shape = 'u8[393216]{0}', space=vmem, size = 0x60000, scoped, tag = 'input window, operand 13, single buffered']
    #allocation10 [shape = 'u8[196608]{0}', space=vmem, size = 0x30000, scoped, tag = 'input window, operand 17, single buffered']
    #allocation11 [shape = 's32[1]{0}', space=sflag, size = 0x4, scoped, tag = 'scoped memory for generator_forward.3']
    %24 = vsyncpa [#allocation3], 0
    %25 = vsyncpa [#allocation5], 0
    %26 = vsyncpa [#allocation8], 0
    %27 = vsyncpa [#allocation11], 0
    // Predicated region
    $region2: #{generator_forward.3} parent=1 // pred_check
      _
    $region3: #{generator_forward.3} parent=1 // pred_check_branch
      %29 = sbr.rel (0) target = $region5
    $region4: #{generator_forward.3} parent=1 // pred_region
      _
    $region5: #{generator_forward.3} parent=1 // pred_fallthru
      _
    // Predicated region
    $region6: #{generator_forward.3} parent=1 // pred_check
      _
    $region7: #{generator_forward.3} parent=1 // pred_check_branch
      %31 = sbr.rel (0) target = $region9
    $region8: #{generator_forward.3} parent=1 // pred_region
      %33 = vsyncadd [#allocation3], 0
      %s34 = sshll.u32 %s1, 4
      %s35 = int_to_ptr.hbm [resolvable:$true] %s34
      %s36 = sshll.u32 [#allocation2], 4
      %s37 = int_to_ptr.vmem [resolvable:$true] %s36
      %42 = dma.hbm_to_vmem [thread:$0]  %s35, 12288, %s37, [#allocation3], 128, 128, 8
    $region9: #{generator_forward.3} parent=1 // pred_fallthru
      _
    // Predicated region
    $region10: #{generator_forward.3} parent=1 // pred_check
      _
    $region11: #{generator_forward.3} parent=1 // pred_check_branch
      %44 = sbr.rel (0) target = $region13
    $region12: #{generator_forward.3} parent=1 // pred_region
      _
    $region13: #{generator_forward.3} parent=1 // pred_fallthru
      _
    // Predicated region
    $region14: #{generator_forward.3} parent=1 // pred_check
      _
    $region15: #{generator_forward.3} parent=1 // pred_check_branch
      %46 = sbr.rel (0) target = $region17
    $region16: #{generator_forward.3} parent=1 // pred_region
      _
    $region17: #{generator_forward.3} parent=1 // pred_fallthru
      _
    // Predicated region
    $region18: #{generator_forward.3} parent=1 // pred_check
      _
    $region19: #{generator_forward.3} parent=1 // pred_check_branch
      %48 = sbr.rel (0) target = $region21
    $region20: #{generator_forward.3} parent=1 // pred_region
      _
    $region21: #{generator_forward.3} parent=1 // pred_fallthru
      _
    // Predicated region
    $region22: #{generator_forward.3} parent=1 // pred_check
      _
    $region23: #{generator_forward.3} parent=1 // pred_check_branch
      %50 = sbr.rel (0) target = $region25
    $region24: #{generator_forward.3} parent=1 // pred_region
      %52 = vsyncadd [#allocation5], 0
      %s53 = sshll.u32 %s5, 4
      %s54 = int_to_ptr.hbm [resolvable:$true] %s53
      %s55 = sshll.u32 [#allocation4], 4
      %s56 = int_to_ptr.vmem [resolvable:$true] %s55
      %61 = dma.hbm_to_vmem [thread:$0]  %s54, 12288, %s56, [#allocation5], 128, 128, 8
    $region25: #{generator_forward.3} parent=1 // pred_fallthru
      _
    // Predicated region
    $region26: #{generator_forward.3} parent=1 // pred_check
      _
    $region27: #{generator_forward.3} parent=1 // pred_check_branch
      %63 = sbr.rel (0) target = $region29
    $region28: #{generator_forward.3} parent=1 // pred_region
      _
    $region29: #{generator_forward.3} parent=1 // pred_fallthru
      _
    // Predicated region
    $region30: #{generator_forward.3} parent=1 // pred_check
      _
    $region31: #{generator_forward.3} parent=1 // pred_check_branch
      %65 = sbr.rel (0) target = $region33
    $region32: #{generator_forward.3} parent=1 // pred_region
      %67 = vsyncadd [#allocation5], 0
      %s69 = sshll.u32 %s7, 4
      %s70 = int_to_ptr.hbm [resolvable:$true] %s69
      %s71 = sshll.u32 [#allocation6], 4
      %s72 = int_to_ptr.vmem [resolvable:$true] %s71
      %74 = dma.hbm_to_vmem [thread:$0]  %s70, 16, %s72, [#allocation5]
    $region33: #{generator_forward.3} parent=1 // pred_fallthru
      _
    // Predicated region
    $region34: #{generator_forward.3} parent=1 // pred_check
      _
    $region35: #{generator_forward.3} parent=1 // pred_check_branch
      %76 = sbr.rel (0) target = $region37
    $region36: #{generator_forward.3} parent=1 // pred_region
      _
    $region37: #{generator_forward.3} parent=1 // pred_fallthru
      _
    // Predicated region
    $region38: #{generator_forward.3} parent=1 // pred_check
      _
    $region39: #{generator_forward.3} parent=1 // pred_check_branch
      %78 = sbr.rel (0) target = $region41
    $region40: #{generator_forward.3} parent=1 // pred_region
      %80 = vsyncadd [#allocation8], 0
      %s81 = sshll.u32 %s9, 4
      %s82 = int_to_ptr.hbm [resolvable:$true] %s81
      %s83 = sshll.u32 [#allocation7], 4
      %s84 = int_to_ptr.vmem [resolvable:$true] %s83
      %89 = dma.hbm_to_vmem [thread:$0]  %s82, 12288, %s84, [#allocation8], 128, 128, 8
    $region41: #{generator_forward.3} parent=1 // pred_fallthru
      _
    // Predicated region
    $region42: #{generator_forward.3} parent=1 // pred_check
      _
    $region43: #{generator_forward.3} parent=1 // pred_check_branch
      %91 = sbr.rel (0) target = $region45
    $region44: #{generator_forward.3} parent=1 // pred_region
      _
    $region45: #{generator_forward.3} parent=1 // pred_fallthru
      _
    // Predicated region
    $region46: #{generator_forward.3} parent=1 // pred_check
      _
    $region47: #{generator_forward.3} parent=1 // pred_check_branch
      %93 = sbr.rel (0) target = $region49
    $region48: #{generator_forward.3} parent=1 // pred_region
      _
    $region49: #{generator_forward.3} parent=1 // pred_fallthru
      _
    // Predicated region
    $region50: #{generator_forward.3} parent=1 // pred_check
      _
    $region51: #{generator_forward.3} parent=1 // pred_check_branch
      %95 = sbr.rel (0) target = $region53
    $region52: #{generator_forward.3} parent=1 // pred_region
      _
    $region53: #{generator_forward.3} parent=1 // pred_fallthru
      _
    // Predicated region
    $region54: #{generator_forward.3} parent=1 // pred_check
      _
    $region55: #{generator_forward.3} parent=1 // pred_check_branch
      %97 = sbr.rel (0) target = $region57
    $region56: #{generator_forward.3} parent=1 // pred_region
      %99 = vsyncadd [#allocation8], 0
      %s100 = sshll.u32 %s13, 4
      %s101 = int_to_ptr.hbm [resolvable:$true] %s100
      %s102 = sshll.u32 [#allocation9], 4
      %s103 = int_to_ptr.vmem [resolvable:$true] %s102
      %108 = dma.hbm_to_vmem [thread:$0]  %s101, 12288, %s103, [#allocation8], 128, 128, 8
    $region57: #{generator_forward.3} parent=1 // pred_fallthru
      _
    // Predicated region
    $region58: #{generator_forward.3} parent=1 // pred_check
      _
    $region59: #{generator_forward.3} parent=1 // pred_check_branch
      %110 = sbr.rel (0) target = $region61
    $region60: #{generator_forward.3} parent=1 // pred_region
      _
    $region61: #{generator_forward.3} parent=1 // pred_fallthru
      _
    // Predicated region
    $region62: #{generator_forward.3} parent=1 // pred_check
      _
    $region63: #{generator_forward.3} parent=1 // pred_check_branch
      %112 = sbr.rel (0) target = $region65
    $region64: #{generator_forward.3} parent=1 // pred_region
      _
    $region65: #{generator_forward.3} parent=1 // pred_fallthru
      _
    // Predicated region
    $region66: #{generator_forward.3} parent=1 // pred_check
      _
    $region67: #{generator_forward.3} parent=1 // pred_check_branch
      %114 = sbr.rel (0) target = $region69
    $region68: #{generator_forward.3} parent=1 // pred_region
      _
    $region69: #{generator_forward.3} parent=1 // pred_fallthru
      _
    // Predicated region
    $region70: #{generator_forward.3} parent=1 // pred_check
      _
    $region71: #{generator_forward.3} parent=1 // pred_check_branch
      %116 = sbr.rel (0) target = $region73
    $region72: #{generator_forward.3} parent=1 // pred_region
      %118 = vsyncadd [#allocation11], 0
      %s119 = sshll.u32 %s17, 4
      %s120 = int_to_ptr.hbm [resolvable:$true] %s119
      %s121 = sshll.u32 [#allocation10], 4
      %s122 = int_to_ptr.vmem [resolvable:$true] %s121
      %127 = dma.hbm_to_vmem [thread:$0]  %s120, 6144, %s122, [#allocation11], 64, 64, 4
    $region73: #{generator_forward.3} parent=1 // pred_fallthru
      _
    // Predicated region
    $region74: #{generator_forward.3} parent=1 // pred_check
      _
    $region75: #{generator_forward.3} parent=1 // pred_check_branch
      %129 = sbr.rel (0) target = $region77
    $region76: #{generator_forward.3} parent=1 // pred_region
      _
    $region77: #{generator_forward.3} parent=1 // pred_fallthru
      _
    // Predicated region
    $region78: #{generator_forward.3} parent=1 // pred_check
      _
    $region79: #{generator_forward.3} parent=1 // pred_check_branch
      %131 = sbr.rel (0) target = $region81
    $region80: #{generator_forward.3} parent=1 // pred_region
      %133 = dma.done [#allocation3], 12288
    $region81: #{generator_forward.3} parent=1 // pred_fallthru
      _
    // Predicated region
    $region82: #{generator_forward.3} parent=1 // pred_check
      _
    $region83: #{generator_forward.3} parent=1 // pred_check_branch
      %135 = sbr.rel (0) target = $region85
    $region84: #{generator_forward.3} parent=1 // pred_region
      %137 = dma.done [#allocation5], 12288
    $region85: #{generator_forward.3} parent=1 // pred_fallthru
      _
    // Predicated region
    $region86: #{generator_forward.3} parent=1 // pred_check
      _
    $region87: #{generator_forward.3} parent=1 // pred_check_branch
      %139 = sbr.rel (0) target = $region89
    $region88: #{generator_forward.3} parent=1 // pred_region
      %141 = dma.done [#allocation5], 16
    $region89: #{generator_forward.3} parent=1 // pred_fallthru
      _
    // Predicated region
    $region90: #{generator_forward.3} parent=1 // pred_check
      _
    $region91: #{generator_forward.3} parent=1 // pred_check_branch
      %143 = sbr.rel (0) target = $region93
    $region92: #{generator_forward.3} parent=1 // pred_region
      %145 = dma.done [#allocation8], 12288
    $region93: #{generator_forward.3} parent=1 // pred_fallthru
      _
    // Predicated region
    $region94: #{generator_forward.3} parent=1 // pred_check
      _
    $region95: #{generator_forward.3} parent=1 // pred_check_branch
      %147 = sbr.rel (0) target = $region97
    $region96: #{generator_forward.3} parent=1 // pred_region
      %149 = dma.done [#allocation8], 12288
    $region97: #{generator_forward.3} parent=1 // pred_fallthru
      _
    // Predicated region
    $region98: #{generator_forward.3} parent=1 // pred_check
      _
    $region99: #{generator_forward.3} parent=1 // pred_check_branch
      %151 = sbr.rel (0) target = $region101
    $region100: #{generator_forward.3} parent=1 // pred_region
      %153 = dma.done [#allocation11], 6144
    $region101: #{generator_forward.3} parent=1 // pred_fallthru
      _
    %v154 = vlaneseq
    %v155 = vshrl.u32 %v154, 7
    %vm156 = vcmp.lt.s32.totalorder %v155, 0
    %v157 = vsub.s32 0, %v155
    %v158 = vsel %vm156, %v157, %v155
    %v159 = vshrl.u32 %v158, 1
    %v160 = vand.u32 %v158, 1
    %v161 = vsub.s32 0, %v160
    %v162 = vsel %vm156, %v161, %v160
    %vm163 = vcmp.ne.s32.totalorder %v162, 0
    %vm164 = vcmp.lt.s32.totalorder %v162, 0
    %vm165 = vmand %vm164, %vm163
    %v166 = vadd.s32 %v162, 2
    %v167 = vsel %vm165, %v166, %v162
    %vm168 = vcmp.eq.s32.totalorder %v167, 0
    %vm169 = vcmp.eq.s32.totalorder %v167, 1
    %v170 = vld [vmem:[%s0] sm:$0xff]
    %v171 = vunpack.c.l.bf16 %v170
    %v172 = vunpack.c.h.bf16 %v170
    %v173 = vrot.slane %v171, 7
    %v174 = vrot.slane %v172, 7
    %v175 = vsel %vm168, 1, 0
    %vm176 = vcmp.eq.s32.totalorder %v175, 1
    %v177 = vsel %vm176, 0.0, %v173
    %v178 = vsel %vm176, 0.0, %v174
    %v179 = vrot.slane %v171, 1
    %v180 = vrot.slane %v172, 1
    %v181 = vsel %vm169, 1, 0
    %vm182 = vcmp.eq.s32.totalorder %v181, 1
    %v183 = vsel %vm182, 0.0, %v179
    %v184 = vsel %vm182, 0.0, %v180
    %v185 = vpack.c.bf16 %v171, %v171
    %v186 = vpack.c.bf16 %v172, %v172
    %v187 = vpack.c.bf16 %v177, %v177
    %v188 = vpack.c.bf16 %v178, %v178
    %v189 = vpack.c.bf16 %v183, %v183
    %v190 = vpack.c.bf16 %v184, %v184
    %v191 = vld [vmem:[#allocation2] sm:$0xff]
    %v192 = vld [vmem:[#allocation2 + $0x8] sm:$0xff]
    %v193 = vld [vmem:[#allocation2 + $0x10] sm:$0xff]
    %v194 = vld [vmem:[#allocation2 + $0x18] sm:$0xff]
    %v195 = vld [vmem:[#allocation2 + $0x20] sm:$0xff]
    %v196 = vld [vmem:[#allocation2 + $0x28] sm:$0xff]
    %v197 = vld [vmem:[#allocation2 + $0x30] sm:$0xff]
    %v198 = vld [vmem:[#allocation2 + $0x38] sm:$0xff]
    %v199 = vld [vmem:[#allocation2 + $0x40] sm:$0xff]
    %v200 = vld [vmem:[#allocation2 + $0x48] sm:$0xff]
    %v201 = vld [vmem:[#allocation2 + $0x50] sm:$0xff]
    %v202 = vld [vmem:[#allocation2 + $0x58] sm:$0xff]
    %v203 = vld [vmem:[#allocation2 + $0x60] sm:$0xff]
    %v204 = vld [vmem:[#allocation2 + $0x68] sm:$0xff]
    %v205 = vld [vmem:[#allocation2 + $0x70] sm:$0xff]
    %v206 = vld [vmem:[#allocation2 + $0x78] sm:$0xff]
    %v207 = vld [vmem:[#allocation2 + $0x80] sm:$0xff]
    %v208 = vld [vmem:[#allocation2 + $0x88] sm:$0xff]
    %v209 = vld [vmem:[#allocation2 + $0x90] sm:$0xff]
    %v210 = vld [vmem:[#allocation2 + $0x98] sm:$0xff]
    %v211 = vld [vmem:[#allocation2 + $0xa0] sm:$0xff]
    %v212 = vld [vmem:[#allocation2 + $0xa8] sm:$0xff]
    %v213 = vld [vmem:[#allocation2 + $0xb0] sm:$0xff]
    %v214 = vld [vmem:[#allocation2 + $0xb8] sm:$0xff]
    %v215 = vld [vmem:[#allocation2 + $0xc0] sm:$0xff]
    %v216 = vld [vmem:[#allocation2 + $0xc8] sm:$0xff]
    %v217 = vld [vmem:[#allocation2 + $0xd0] sm:$0xff]
    %v218 = vld [vmem:[#allocation2 + $0xd8] sm:$0xff]
    %v219 = vld [vmem:[#allocation2 + $0xe0] sm:$0xff]
    %v220 = vld [vmem:[#allocation2 + $0xe8] sm:$0xff]
    %v221 = vld [vmem:[#allocation2 + $0xf0] sm:$0xff]
    %v222 = vld [vmem:[#allocation2 + $0xf8] sm:$0xff]
    %v223 = vld [vmem:[#allocation2 + $0x100] sm:$0xff]
    %v224 = vld [vmem:[#allocation2 + $0x108] sm:$0xff]
    %v225 = vld [vmem:[#allocation2 + $0x110] sm:$0xff]
    %v226 = vld [vmem:[#allocation2 + $0x118] sm:$0xff]
    %v227 = vld [vmem:[#allocation2 + $0x120] sm:$0xff]
    %v228 = vld [vmem:[#allocation2 + $0x128] sm:$0xff]
    %v229 = vld [vmem:[#allocation2 + $0x130] sm:$0xff]
    %v230 = vld [vmem:[#allocation2 + $0x138] sm:$0xff]
    %v231 = vld [vmem:[#allocation2 + $0x140] sm:$0xff]
    %v232 = vld [vmem:[#allocation2 + $0x148] sm:$0xff]
    %v233 = vld [vmem:[#allocation2 + $0x150] sm:$0xff]
    %v234 = vld [vmem:[#allocation2 + $0x158] sm:$0xff]
    %v235 = vld [vmem:[#allocation2 + $0x160] sm:$0xff]
    %v236 = vld [vmem:[#allocation2 + $0x168] sm:$0xff]
    %v237 = vld [vmem:[#allocation2 + $0x170] sm:$0xff]
    %v238 = vld [vmem:[#allocation2 + $0x178] sm:$0xff]
    %v239 = vld [vmem:[#allocation2 + $0x180] sm:$0xff]
    %v240 = vld [vmem:[#allocation2 + $0x188] sm:$0xff]
    %v241 = vld [vmem:[#allocation2 + $0x190] sm:$0xff]
    %v242 = vld [vmem:[#allocation2 + $0x198] sm:$0xff]
    %v243 = vld [vmem:[#allocation2 + $0x1a0] sm:$0xff]
    %v244 = vld [vmem:[#allocation2 + $0x1a8] sm:$0xff]
    %v245 = vld [vmem:[#allocation2 + $0x1b0] sm:$0xff]
    %v246 = vld [vmem:[#allocation2 + $0x1b8] sm:$0xff]
    %v247 = vld [vmem:[#allocation2 + $0x1c0] sm:$0xff]
    %v248 = vld [vmem:[#allocation2 + $0x1c8] sm:$0xff]
    %v249 = vld [vmem:[#allocation2 + $0x1d0] sm:$0xff]
    %v250 = vld [vmem:[#allocation2 + $0x1d8] sm:$0xff]
    %v251 = vld [vmem:[#allocation2 + $0x1e0] sm:$0xff]
    %v252 = vld [vmem:[#allocation2 + $0x1e8] sm:$0xff]
    %v253 = vld [vmem:[#allocation2 + $0x1f0] sm:$0xff]
    %v254 = vld [vmem:[#allocation2 + $0x1f8] sm:$0xff]
    %v255 = vld [vmem:[#allocation2 + $0x200] sm:$0xff]
    %v256 = vld [vmem:[#allocation2 + $0x208] sm:$0xff]
    %v257 = vld [vmem:[#allocation2 + $0x210] sm:$0xff]
    %v258 = vld [vmem:[#allocation2 + $0x218] sm:$0xff]
    %v259 = vld [vmem:[#allocation2 + $0x220] sm:$0xff]
    %v260 = vld [vmem:[#allocation2 + $0x228] sm:$0xff]
    %v261 = vld [vmem:[#allocation2 + $0x230] sm:$0xff]
    %v262 = vld [vmem:[#allocation2 + $0x238] sm:$0xff]
    %v263 = vld [vmem:[#allocation2 + $0x240] sm:$0xff]
    %v264 = vld [vmem:[#allocation2 + $0x248] sm:$0xff]
    %v265 = vld [vmem:[#allocation2 + $0x250] sm:$0xff]
    %v266 = vld [vmem:[#allocation2 + $0x258] sm:$0xff]
    %v267 = vld [vmem:[#allocation2 + $0x260] sm:$0xff]
    %v268 = vld [vmem:[#allocation2 + $0x268] sm:$0xff]
    %v269 = vld [vmem:[#allocation2 + $0x270] sm:$0xff]
    %v270 = vld [vmem:[#allocation2 + $0x278] sm:$0xff]
    %v271 = vld [vmem:[#allocation2 + $0x280] sm:$0xff]
    %v272 = vld [vmem:[#allocation2 + $0x288] sm:$0xff]
    %v273 = vld [vmem:[#allocation2 + $0x290] sm:$0xff]
    %v274 = vld [vmem:[#allocation2 + $0x298] sm:$0xff]
    %v275 = vld [vmem:[#allocation2 + $0x2a0] sm:$0xff]
    %v276 = vld [vmem:[#allocation2 + $0x2a8] sm:$0xff]
    %v277 = vld [vmem:[#allocation2 + $0x2b0] sm:$0xff]
    %v278 = vld [vmem:[#allocation2 + $0x2b8] sm:$0xff]
    %v279 = vld [vmem:[#allocation2 + $0x2c0] sm:$0xff]
    %v280 = vld [vmem:[#allocation2 + $0x2c8] sm:$0xff]
    %v281 = vld [vmem:[#allocation2 + $0x2d0] sm:$0xff]
    %v282 = vld [vmem:[#allocation2 + $0x2d8] sm:$0xff]
    %v283 = vld [vmem:[#allocation2 + $0x2e0] sm:$0xff]
    %v284 = vld [vmem:[#allocation2 + $0x2e8] sm:$0xff]
    %v285 = vld [vmem:[#allocation2 + $0x2f0] sm:$0xff]
    %v286 = vld [vmem:[#allocation2 + $0x2f8] sm:$0xff]
    %v287 = vld [vmem:[%s2] sm:$0x3]
    %v289 = vperm.slane %v287, 0
    %v290 = vperm.slane %v287, 1
    %v389 = vunpack.c.l.b16 %v191
    %v390 = vunpack.c.h.b16 %v191
    %v391 = vunpack.c.l.b16 %v192
    %v392 = vunpack.c.h.b16 %v192
    %v393 = vunpack.c.l.b16 %v193
    %v394 = vunpack.c.h.b16 %v193
    %v395 = vunpack.c.l.b16 %v194
    %v396 = vunpack.c.h.b16 %v194
    %v397 = vunpack.c.l.b16 %v195
    %v398 = vunpack.c.h.b16 %v195
    %v399 = vunpack.c.l.b16 %v196
    %v400 = vunpack.c.h.b16 %v196
    %v401 = vunpack.c.l.b16 %v197
    %v402 = vunpack.c.h.b16 %v197
    %v403 = vunpack.c.l.b16 %v198
    %v404 = vunpack.c.h.b16 %v198
    %v405 = vunpack.c.l.b16 %v199
    %v406 = vunpack.c.h.b16 %v199
    %v407 = vunpack.c.l.b16 %v200
    %v408 = vunpack.c.h.b16 %v200
    %v409 = vunpack.c.l.b16 %v201
    %v410 = vunpack.c.h.b16 %v201
    %v411 = vunpack.c.l.b16 %v202
    %v412 = vunpack.c.h.b16 %v202
    %v413 = vunpack.c.l.b16 %v203
    %v414 = vunpack.c.h.b16 %v203
    %v415 = vunpack.c.l.b16 %v204
    %v416 = vunpack.c.h.b16 %v204
    %v417 = vunpack.c.l.b16 %v205
    %v418 = vunpack.c.h.b16 %v205
    %v419 = vunpack.c.l.b16 %v206
    %v420 = vunpack.c.h.b16 %v206
    %v421 = vunpack.c.l.b16 %v207
    %v422 = vunpack.c.h.b16 %v207
    %v423 = vunpack.c.l.b16 %v208
    %v424 = vunpack.c.h.b16 %v208
    %v425 = vunpack.c.l.b16 %v209
    %v426 = vunpack.c.h.b16 %v209
    %v427 = vunpack.c.l.b16 %v210
    %v428 = vunpack.c.h.b16 %v210
    %v429 = vunpack.c.l.b16 %v211
    %v430 = vunpack.c.h.b16 %v211
    %v431 = vunpack.c.l.b16 %v212
    %v432 = vunpack.c.h.b16 %v212
    %v433 = vunpack.c.l.b16 %v213
    %v434 = vunpack.c.h.b16 %v213
    %v435 = vunpack.c.l.b16 %v214
    %v436 = vunpack.c.h.b16 %v214
    %v437 = vunpack.c.l.b16 %v215
    %v438 = vunpack.c.h.b16 %v215
    %v439 = vunpack.c.l.b16 %v216
    %v440 = vunpack.c.h.b16 %v216
    %v441 = vunpack.c.l.b16 %v217
    %v442 = vunpack.c.h.b16 %v217
    %v443 = vunpack.c.l.b16 %v218
    %v444 = vunpack.c.h.b16 %v218
    %v445 = vunpack.c.l.b16 %v219
    %v446 = vunpack.c.h.b16 %v219
    %v447 = vunpack.c.l.b16 %v220
    %v448 = vunpack.c.h.b16 %v220
    %v449 = vunpack.c.l.b16 %v221
    %v450 = vunpack.c.h.b16 %v221
    %v451 = vunpack.c.l.b16 %v222
    %v452 = vunpack.c.h.b16 %v222
    %v453 = vunpack.c.l.b16 %v223
    %v454 = vunpack.c.h.b16 %v223
    %v455 = vunpack.c.l.b16 %v224
    %v456 = vunpack.c.h.b16 %v224
    %v457 = vunpack.c.l.b16 %v225
    %v458 = vunpack.c.h.b16 %v225
    %v459 = vunpack.c.l.b16 %v226
    %v460 = vunpack.c.h.b16 %v226
    %v461 = vunpack.c.l.b16 %v227
    %v462 = vunpack.c.h.b16 %v227
    %v463 = vunpack.c.l.b16 %v228
    %v464 = vunpack.c.h.b16 %v228
    %v465 = vunpack.c.l.b16 %v229
    %v466 = vunpack.c.h.b16 %v229
    %v467 = vunpack.c.l.b16 %v230
    %v468 = vunpack.c.h.b16 %v230
    %v469 = vunpack.c.l.b16 %v231
    %v470 = vunpack.c.h.b16 %v231
    %v471 = vunpack.c.l.b16 %v232
    %v472 = vunpack.c.h.b16 %v232
    %v473 = vunpack.c.l.b16 %v233
    %v474 = vunpack.c.h.b16 %v233
    %v475 = vunpack.c.l.b16 %v234
    %v476 = vunpack.c.h.b16 %v234
    %v477 = vunpack.c.l.b16 %v235
    %v478 = vunpack.c.h.b16 %v235
    %v479 = vunpack.c.l.b16 %v236
    %v480 = vunpack.c.h.b16 %v236
    %v481 = vunpack.c.l.b16 %v237
    %v482 = vunpack.c.h.b16 %v237
    %v483 = vunpack.c.l.b16 %v238
    %v484 = vunpack.c.h.b16 %v238
    %v485 = vunpack.c.l.b16 %v239
    %v486 = vunpack.c.h.b16 %v239
    %v487 = vunpack.c.l.b16 %v240
    %v488 = vunpack.c.h.b16 %v240
    %v489 = vunpack.c.l.b16 %v241
    %v490 = vunpack.c.h.b16 %v241
    %v491 = vunpack.c.l.b16 %v242
    %v492 = vunpack.c.h.b16 %v242
    %v493 = vunpack.c.l.b16 %v243
    %v494 = vunpack.c.h.b16 %v243
    %v495 = vunpack.c.l.b16 %v244
    %v496 = vunpack.c.h.b16 %v244
    %v497 = vunpack.c.l.b16 %v245
    %v498 = vunpack.c.h.b16 %v245
    %v499 = vunpack.c.l.b16 %v246
    %v500 = vunpack.c.h.b16 %v246
    %v501 = vunpack.c.l.b16 %v247
    %v502 = vunpack.c.h.b16 %v247
    %v503 = vunpack.c.l.b16 %v248
    %v504 = vunpack.c.h.b16 %v248
    %v505 = vunpack.c.l.b16 %v249
    %v506 = vunpack.c.h.b16 %v249
    %v507 = vunpack.c.l.b16 %v250
    %v508 = vunpack.c.h.b16 %v250
    %v509 = vunpack.c.l.b16 %v251
    %v510 = vunpack.c.h.b16 %v251
    %v511 = vunpack.c.l.b16 %v252
    %v512 = vunpack.c.h.b16 %v252
    %v513 = vunpack.c.l.b16 %v253
    %v514 = vunpack.c.h.b16 %v253
    %v515 = vunpack.c.l.b16 %v254
    %v516 = vunpack.c.h.b16 %v254
    %v517 = vunpack.c.l.b16 %v255
    %v518 = vunpack.c.h.b16 %v255
    %v519 = vunpack.c.l.b16 %v256
    %v520 = vunpack.c.h.b16 %v256
    %v521 = vunpack.c.l.b16 %v257
    %v522 = vunpack.c.h.b16 %v257
    %v523 = vunpack.c.l.b16 %v258
    %v524 = vunpack.c.h.b16 %v258
    %v525 = vunpack.c.l.b16 %v259
    %v526 = vunpack.c.h.b16 %v259
    %v527 = vunpack.c.l.b16 %v260
    %v528 = vunpack.c.h.b16 %v260
    %v529 = vunpack.c.l.b16 %v261
    %v530 = vunpack.c.h.b16 %v261
    %v531 = vunpack.c.l.b16 %v262
    %v532 = vunpack.c.h.b16 %v262
    %v533 = vunpack.c.l.b16 %v263
    %v534 = vunpack.c.h.b16 %v263
    %v535 = vunpack.c.l.b16 %v264
    %v536 = vunpack.c.h.b16 %v264
    %v537 = vunpack.c.l.b16 %v265
    %v538 = vunpack.c.h.b16 %v265
    %v539 = vunpack.c.l.b16 %v266
    %v540 = vunpack.c.h.b16 %v266
    %v541 = vunpack.c.l.b16 %v267
    %v542 = vunpack.c.h.b16 %v267
    %v543 = vunpack.c.l.b16 %v268
    %v544 = vunpack.c.h.b16 %v268
    %v545 = vunpack.c.l.b16 %v269
    %v546 = vunpack.c.h.b16 %v269
    %v547 = vunpack.c.l.b16 %v270
    %v548 = vunpack.c.h.b16 %v270
    %v549 = vunpack.c.l.b16 %v271
    %v550 = vunpack.c.h.b16 %v271
    %v551 = vunpack.c.l.b16 %v272
    %v552 = vunpack.c.h.b16 %v272
    %v553 = vunpack.c.l.b16 %v273
    %v554 = vunpack.c.h.b16 %v273
    %v555 = vunpack.c.l.b16 %v274
    %v556 = vunpack.c.h.b16 %v274
    %v557 = vunpack.c.l.b16 %v275
    %v558 = vunpack.c.h.b16 %v275
    %v559 = vunpack.c.l.b16 %v276
    %v560 = vunpack.c.h.b16 %v276
    %v561 = vunpack.c.l.b16 %v277
    %v562 = vunpack.c.h.b16 %v277
    %v563 = vunpack.c.l.b16 %v278
    %v564 = vunpack.c.h.b16 %v278
    %v565 = vunpack.c.l.b16 %v279
    %v566 = vunpack.c.h.b16 %v279
    %v567 = vunpack.c.l.b16 %v280
    %v568 = vunpack.c.h.b16 %v280
    %v569 = vunpack.c.l.b16 %v281
    %v570 = vunpack.c.h.b16 %v281
    %v571 = vunpack.c.l.b16 %v282
    %v572 = vunpack.c.h.b16 %v282
    %v573 = vunpack.c.l.b16 %v283
    %v574 = vunpack.c.h.b16 %v283
    %v575 = vunpack.c.l.b16 %v284
    %v576 = vunpack.c.h.b16 %v284
    %v577 = vunpack.c.l.b16 %v285
    %v578 = vunpack.c.h.b16 %v285
    %v579 = vunpack.c.l.b16 %v286
    %v580 = vunpack.c.h.b16 %v286
    %v581 = vpack.c.b16 %v391, %v389
    %v582 = vpack.c.b16 %v392, %v390
    %v583 = vpack.c.b16 %v395, %v393
    %v584 = vpack.c.b16 %v396, %v394
    %v585 = vpack.c.b16 %v399, %v397
    %v586 = vpack.c.b16 %v400, %v398
    %v587 = vpack.c.b16 %v403, %v401
    %v588 = vpack.c.b16 %v404, %v402
    %v589 = vpack.c.b16 %v407, %v405
    %v590 = vpack.c.b16 %v408, %v406
    %v591 = vpack.c.b16 %v411, %v409
    %v592 = vpack.c.b16 %v412, %v410
    %v593 = vpack.c.b16 %v415, %v413
    %v594 = vpack.c.b16 %v416, %v414
    %v595 = vpack.c.b16 %v419, %v417
    %v596 = vpack.c.b16 %v420, %v418
    %v597 = vpack.c.b16 %v423, %v421
    %v598 = vpack.c.b16 %v424, %v422
    %v599 = vpack.c.b16 %v427, %v425
    %v600 = vpack.c.b16 %v428, %v426
    %v601 = vpack.c.b16 %v431, %v429
    %v602 = vpack.c.b16 %v432, %v430
    %v603 = vpack.c.b16 %v435, %v433
    %v604 = vpack.c.b16 %v436, %v434
    %v605 = vpack.c.b16 %v439, %v437
    %v606 = vpack.c.b16 %v440, %v438
    %v607 = vpack.c.b16 %v443, %v441
    %v608 = vpack.c.b16 %v444, %v442
    %v609 = vpack.c.b16 %v447, %v445
    %v610 = vpack.c.b16 %v448, %v446
    %v611 = vpack.c.b16 %v451, %v449
    %v612 = vpack.c.b16 %v452, %v450
    %v613 = vpack.c.b16 %v455, %v453
    %v614 = vpack.c.b16 %v456, %v454
    %v615 = vpack.c.b16 %v459, %v457
    %v616 = vpack.c.b16 %v460, %v458
    %v617 = vpack.c.b16 %v463, %v461
    %v618 = vpack.c.b16 %v464, %v462
    %v619 = vpack.c.b16 %v467, %v465
    %v620 = vpack.c.b16 %v468, %v466
    %v621 = vpack.c.b16 %v471, %v469
    %v622 = vpack.c.b16 %v472, %v470
    %v623 = vpack.c.b16 %v475, %v473
    %v624 = vpack.c.b16 %v476, %v474
    %v625 = vpack.c.b16 %v479, %v477
    %v626 = vpack.c.b16 %v480, %v478
    %v627 = vpack.c.b16 %v483, %v481
    %v628 = vpack.c.b16 %v484, %v482
    %v629 = vpack.c.b16 %v487, %v485
    %v630 = vpack.c.b16 %v488, %v486
    %v631 = vpack.c.b16 %v491, %v489
    %v632 = vpack.c.b16 %v492, %v490
    %v633 = vpack.c.b16 %v495, %v493
    %v634 = vpack.c.b16 %v496, %v494
    %v635 = vpack.c.b16 %v499, %v497
    %v636 = vpack.c.b16 %v500, %v498
    %v637 = vpack.c.b16 %v503, %v501
    %v638 = vpack.c.b16 %v504, %v502
    %v639 = vpack.c.b16 %v507, %v505
    %v640 = vpack.c.b16 %v508, %v506
    %v641 = vpack.c.b16 %v511, %v509
    %v642 = vpack.c.b16 %v512, %v510
    %v643 = vpack.c.b16 %v515, %v513
    %v644 = vpack.c.b16 %v516, %v514
    %v645 = vpack.c.b16 %v519, %v517
    %v646 = vpack.c.b16 %v520, %v518
    %v647 = vpack.c.b16 %v523, %v521
    %v648 = vpack.c.b16 %v524, %v522
    %v649 = vpack.c.b16 %v527, %v525
    %v650 = vpack.c.b16 %v528, %v526
    %v651 = vpack.c.b16 %v531, %v529
    %v652 = vpack.c.b16 %v532, %v530
    %v653 = vpack.c.b16 %v535, %v533
    %v654 = vpack.c.b16 %v536, %v534
    %v655 = vpack.c.b16 %v539, %v537
    %v656 = vpack.c.b16 %v540, %v538
    %v657 = vpack.c.b16 %v543, %v541
    %v658 = vpack.c.b16 %v544, %v542
    %v659 = vpack.c.b16 %v547, %v545
    %v660 = vpack.c.b16 %v548, %v546
    %v661 = vpack.c.b16 %v551, %v549
    %v662 = vpack.c.b16 %v552, %v550
    %v663 = vpack.c.b16 %v555, %v553
    %v664 = vpack.c.b16 %v556, %v554
    %v665 = vpack.c.b16 %v559, %v557
    %v666 = vpack.c.b16 %v560, %v558
    %v667 = vpack.c.b16 %v563, %v561
    %v668 = vpack.c.b16 %v564, %v562
    %v669 = vpack.c.b16 %v567, %v565
    %v670 = vpack.c.b16 %v568, %v566
    %v671 = vpack.c.b16 %v571, %v569
    %v672 = vpack.c.b16 %v572, %v570
    %v673 = vpack.c.b16 %v575, %v573
    %v674 = vpack.c.b16 %v576, %v574
    %v675 = vpack.c.b16 %v579, %v577
    %v676 = vpack.c.b16 %v580, %v578
    %773 = vmatpush.bf16.msra.mxu0 %v595
    %774 = vmatpush.bf16.msra.mxu0 %v593
    %775 = vmatpush.bf16.msra.mxu0 %v591
    %776 = vmatpush.bf16.msra.mxu0 %v589
    %777 = vmatpush.bf16.msra.mxu0 %v587
    %778 = vmatpush.bf16.msra.mxu0 %v585
    %779 = vmatpush.bf16.msra.mxu0 %v583
    %780 = vmatpush.bf16.msra.mxu0 %v581
    %781 = vmatmul.bf16.gmra.mxu0 %v185
    %v782 = vpop.f32.mrf.mxu0
    %v783 = vadd.f32 %v289, %v782
    %v784 = vpop.f32.mrf.mxu0
    %785 = vdwg.mxu0
    %786 = vmatpush.bf16.msra.mxu0 %v611
    %787 = vmatpush.bf16.msra.mxu0 %v609
    %788 = vmatpush.bf16.msra.mxu0 %v607
    %789 = vmatpush.bf16.msra.mxu0 %v605
    %790 = vmatpush.bf16.msra.mxu0 %v603
    %791 = vmatpush.bf16.msra.mxu0 %v601
    %792 = vmatpush.bf16.msra.mxu0 %v599
    %793 = vmatpush.bf16.msra.mxu0 %v597
    %794 = vmatmul.bf16.gmra.mxu0 %v186
    %v795 = vpop.f32.mrf.mxu0
    %v796 = vadd.f32 %v783, %v795
    %v797 = vpop.f32.mrf.mxu0
    %798 = vdwg.mxu0
    %799 = vmatpush.bf16.msra.mxu0 %v627
    %800 = vmatpush.bf16.msra.mxu0 %v625
    %801 = vmatpush.bf16.msra.mxu0 %v623
    %802 = vmatpush.bf16.msra.mxu0 %v621
    %803 = vmatpush.bf16.msra.mxu0 %v619
    %804 = vmatpush.bf16.msra.mxu0 %v617
    %805 = vmatpush.bf16.msra.mxu0 %v615
    %806 = vmatpush.bf16.msra.mxu0 %v613
    %807 = vmatmul.bf16.gmra.mxu0 %v187
    %v808 = vpop.f32.mrf.mxu0
    %v809 = vadd.f32 %v796, %v808
    %v810 = vpop.f32.mrf.mxu0
    %811 = vdwg.mxu0
    %812 = vmatpush.bf16.msra.mxu0 %v643
    %813 = vmatpush.bf16.msra.mxu0 %v641
    %814 = vmatpush.bf16.msra.mxu0 %v639
    %815 = vmatpush.bf16.msra.mxu0 %v637
    %816 = vmatpush.bf16.msra.mxu0 %v635
    %817 = vmatpush.bf16.msra.mxu0 %v633
    %818 = vmatpush.bf16.msra.mxu0 %v631
    %819 = vmatpush.bf16.msra.mxu0 %v629
    %820 = vmatmul.bf16.gmra.mxu0 %v188
    %v821 = vpop.f32.mrf.mxu0
    %v822 = vadd.f32 %v809, %v821
    %v823 = vpop.f32.mrf.mxu0
    %824 = vdwg.mxu0
    %825 = vmatpush.bf16.msra.mxu0 %v659
    %826 = vmatpush.bf16.msra.mxu0 %v657
    %827 = vmatpush.bf16.msra.mxu0 %v655
    %828 = vmatpush.bf16.msra.mxu0 %v653
    %829 = vmatpush.bf16.msra.mxu0 %v651
    %830 = vmatpush.bf16.msra.mxu0 %v649
    %831 = vmatpush.bf16.msra.mxu0 %v647
    %832 = vmatpush.bf16.msra.mxu0 %v645
    %833 = vmatmul.bf16.gmra.mxu0 %v189
    %v834 = vpop.f32.mrf.mxu0
    %v835 = vadd.f32 %v822, %v834
    %v836 = vpop.f32.mrf.mxu0
    %837 = vdwg.mxu0
    %838 = vmatpush.bf16.msra.mxu0 %v675
    %839 = vmatpush.bf16.msra.mxu0 %v673
    %840 = vmatpush.bf16.msra.mxu0 %v671
    %841 = vmatpush.bf16.msra.mxu0 %v669
    %842 = vmatpush.bf16.msra.mxu0 %v667
    %843 = vmatpush.bf16.msra.mxu0 %v665
    %844 = vmatpush.bf16.msra.mxu0 %v663
    %845 = vmatpush.bf16.msra.mxu0 %v661
    %846 = vmatmul.bf16.gmra.mxu0 %v190
    %v847 = vpop.f32.mrf.mxu0
    %v848 = vadd.f32 %v835, %v847
    %v849 = vpop.f32.mrf.mxu0
    %850 = vdwg.mxu0
    %851 = vmatpush.bf16.msra.mxu0 %v596
    %852 = vmatpush.bf16.msra.mxu0 %v594
    %853 = vmatpush.bf16.msra.mxu0 %v592
    %854 = vmatpush.bf16.msra.mxu0 %v590
    %855 = vmatpush.bf16.msra.mxu0 %v588
    %856 = vmatpush.bf16.msra.mxu0 %v586
    %857 = vmatpush.bf16.msra.mxu0 %v584
    %858 = vmatpush.bf16.msra.mxu0 %v582
    %859 = vmatmul.bf16.gmra.mxu0 %v185
    %v860 = vpop.f32.mrf.mxu0
    %v861 = vadd.f32 %v290, %v860
    %v862 = vpop.f32.mrf.mxu0
    %863 = vdwg.mxu0
    %864 = vmatpush.bf16.msra.mxu0 %v612
    %865 = vmatpush.bf16.msra.mxu0 %v610
    %866 = vmatpush.bf16.msra.mxu0 %v608
    %867 = vmatpush.bf16.msra.mxu0 %v606
    %868 = vmatpush.bf16.msra.mxu0 %v604
    %869 = vmatpush.bf16.msra.mxu0 %v602
    %870 = vmatpush.bf16.msra.mxu0 %v600
    %871 = vmatpush.bf16.msra.mxu0 %v598
    %872 = vmatmul.bf16.gmra.mxu0 %v186
    %v873 = vpop.f32.mrf.mxu0
    %v874 = vadd.f32 %v861, %v873
    %v875 = vpop.f32.mrf.mxu0
    %876 = vdwg.mxu0
    %877 = vmatpush.bf16.msra.mxu0 %v628
    %878 = vmatpush.bf16.msra.mxu0 %v626
    %879 = vmatpush.bf16.msra.mxu0 %v624
    %880 = vmatpush.bf16.msra.mxu0 %v622
    %881 = vmatpush.bf16.msra.mxu0 %v620
    %882 = vmatpush.bf16.msra.mxu0 %v618
    %883 = vmatpush.bf16.msra.mxu0 %v616
    %884 = vmatpush.bf16.msra.mxu0 %v614
    %885 = vmatmul.bf16.gmra.mxu0 %v187
    %v886 = vpop.f32.mrf.mxu0
    %v887 = vadd.f32 %v874, %v886
    %v888 = vpop.f32.mrf.mxu0
    %889 = vdwg.mxu0
    %890 = vmatpush.bf16.msra.mxu0 %v644
    %891 = vmatpush.bf16.msra.mxu0 %v642
    %892 = vmatpush.bf16.msra.mxu0 %v640
    %893 = vmatpush.bf16.msra.mxu0 %v638
    %894 = vmatpush.bf16.msra.mxu0 %v636
    %895 = vmatpush.bf16.msra.mxu0 %v634
    %896 = vmatpush.bf16.msra.mxu0 %v632
    %897 = vmatpush.bf16.msra.mxu0 %v630
    %898 = vmatmul.bf16.gmra.mxu0 %v188
    %v899 = vpop.f32.mrf.mxu0
    %v900 = vadd.f32 %v887, %v899
    %v901 = vpop.f32.mrf.mxu0
    %902 = vdwg.mxu0
    %903 = vmatpush.bf16.msra.mxu0 %v660
    %904 = vmatpush.bf16.msra.mxu0 %v658
    %905 = vmatpush.bf16.msra.mxu0 %v656
    %906 = vmatpush.bf16.msra.mxu0 %v654
    %907 = vmatpush.bf16.msra.mxu0 %v652
    %908 = vmatpush.bf16.msra.mxu0 %v650
    %909 = vmatpush.bf16.msra.mxu0 %v648
    %910 = vmatpush.bf16.msra.mxu0 %v646
    %911 = vmatmul.bf16.gmra.mxu0 %v189
    %v912 = vpop.f32.mrf.mxu0
    %v913 = vadd.f32 %v900, %v912
    %v914 = vpop.f32.mrf.mxu0
    %915 = vdwg.mxu0
    %916 = vmatpush.bf16.msra.mxu0 %v676
    %917 = vmatpush.bf16.msra.mxu0 %v674
    %918 = vmatpush.bf16.msra.mxu0 %v672
    %919 = vmatpush.bf16.msra.mxu0 %v670
    %920 = vmatpush.bf16.msra.mxu0 %v668
    %921 = vmatpush.bf16.msra.mxu0 %v666
    %922 = vmatpush.bf16.msra.mxu0 %v664
    %923 = vmatpush.bf16.msra.mxu0 %v662
    %924 = vmatmul.bf16.gmra.mxu0 %v190
    %v925 = vpop.f32.mrf.mxu0
    %v926 = vadd.f32 %v913, %v925
    %v927 = vpop.f32.mrf.mxu0
    %928 = vdwg.mxu0
    %v929 = vld [vmem:[%s3] sm:$0x1]
    %v930 = vld [vmem:[%s4] sm:$0x3]
    %vm931 = vcmp.ge.f32.partialorder %v848, 0.0
    %vm932 = vcmp.ge.f32.partialorder %v926, 0.0
    %v933 = vmul.f32 %v848, 0.2
    %v934 = vmul.f32 %v926, 0.2
    %v935 = vsel %vm931, %v848, %v933
    %v936 = vsel %vm932, %v926, %v934
    %v937 = vrot.slane %v935, 4
    %v938 = vadd.f32 %v935, %v937
    %v939 = vrot.slane %v938, 2
    %v940 = vadd.f32 %v938, %v939
    %v941 = vrot.slane %v940, 1
    %v942 = vadd.f32 %v940, %v941
    %v943 = vrot.slane %v936, 4
    %v944 = vadd.f32 %v936, %v943
    %v945 = vrot.slane %v944, 2
    %v946 = vadd.f32 %v944, %v945
    %v947 = vrot.slane %v946, 1
    %v948 = vadd.f32 %v946, %v947
    %v949 = vadd.f32 %v942, %v948
    %v950 = vmul.f32 %v949, 0.0625
    %v951 = vperm.slane %v950, 0
    %v952 = vsub.f32 %v935, %v951
    %v953 = vsub.f32 %v936, %v951
    %v954 = vmul.f32 %v952, %v952
    %v955 = vmul.f32 %v953, %v953
    %v956 = vrot.slane %v954, 4
    %v957 = vadd.f32 %v954, %v956
    %v958 = vrot.slane %v957, 2
    %v959 = vadd.f32 %v957, %v958
    %v960 = vrot.slane %v959, 1
    %v961 = vadd.f32 %v959, %v960
    %v962 = vrot.slane %v955, 4
    %v963 = vadd.f32 %v955, %v962
    %v964 = vrot.slane %v963, 2
    %v965 = vadd.f32 %v963, %v964
    %v966 = vrot.slane %v965, 1
    %v967 = vadd.f32 %v965, %v966
    %v968 = vadd.f32 %v961, %v967
    %v969 = vmul.f32 %v968, 0.0625
    %v970 = vadd.f32 %v969, 1e-05
    %v971 = vrsqrt.pop %v970
    %v972 = vmul.f32 %v971, %v970
    %v973 = vmul.f32 %v972, %v971
    %v974 = vmul.f32 0.5, %v973
    %v975 = vsub.f32 1.5, %v974
    %v976 = vmul.f32 %v971, %v975
    %vm977 = vweird.f32 %v970
    %vm978 = vweird.f32 %v971
    %vm979 = vmor %vm977, %vm978
    %v980 = vsel %vm979, %v971, %v976
    %v981 = vmul.f32 %v980, %v929
    %v982 = vperm.slane %v981, 0
    %v983 = vmul.f32 %v952, %v982
    %v984 = vmul.f32 %v953, %v982
    %v986 = vperm.slane %v930, 0
    %v987 = vperm.slane %v930, 1
    %v990 = vadd.f32 %v983, %v986
    %v991 = vadd.f32 %v984, %v987
    %v992 = vrot.slane %v990, 7
    %v993 = vrot.slane %v991, 7
    %v994 = vsel %vm176, 0.0, %v992
    %v995 = vsel %vm176, 0.0, %v993
    %v996 = vrot.slane %v990, 1
    %v997 = vrot.slane %v991, 1
    %v998 = vsel %vm182, 0.0, %v996
    %v999 = vsel %vm182, 0.0, %v997
    %v1000 = vpack.c.bf16 %v990, %v990
    %v1001 = vpack.c.bf16 %v991, %v991
    %v1002 = vpack.c.bf16 %v994, %v994
    %v1003 = vpack.c.bf16 %v995, %v995
    %v1004 = vpack.c.bf16 %v998, %v998
    %v1005 = vpack.c.bf16 %v999, %v999
    %v1006 = vld [vmem:[#allocation4] sm:$0xff]
    %v1007 = vld [vmem:[#allocation4 + $0x8] sm:$0xff]
    %v1008 = vld [vmem:[#allocation4 + $0x10] sm:$0xff]
    %v1009 = vld [vmem:[#allocation4 + $0x18] sm:$0xff]
    %v1010 = vld [vmem:[#allocation4 + $0x20] sm:$0xff]
    %v1011 = vld [vmem:[#allocation4 + $0x28] sm:$0xff]
    %v1012 = vld [vmem:[#allocation4 + $0x30] sm:$0xff]
    %v1013 = vld [vmem:[#allocation4 + $0x38] sm:$0xff]
    %v1014 = vld [vmem:[#allocation4 + $0x40] sm:$0xff]
    %v1015 = vld [vmem:[#allocation4 + $0x48] sm:$0xff]
    %v1016 = vld [vmem:[#allocation4 + $0x50] sm:$0xff]
    %v1017 = vld [vmem:[#allocation4 + $0x58] sm:$0xff]
    %v1018 = vld [vmem:[#allocation4 + $0x60] sm:$0xff]
    %v1019 = vld [vmem:[#allocation4 + $0x68] sm:$0xff]
    %v1020 = vld [vmem:[#allocation4 + $0x70] sm:$0xff]
    %v1021 = vld [vmem:[#allocation4 + $0x78] sm:$0xff]
    %v1022 = vld [vmem:[#allocation4 + $0x80] sm:$0xff]
    %v1023 = vld [vmem:[#allocation4 + $0x88] sm:$0xff]
    %v1024 = vld [vmem:[#allocation4 + $0x90] sm:$0xff]
    %v1025 = vld [vmem:[#allocation4 + $0x98] sm:$0xff]
    %v1026 = vld [vmem:[#allocation4 + $0xa0] sm:$0xff]
    %v1027 = vld [vmem:[#allocation4 + $0xa8] sm:$0xff]
    %v1028 = vld [vmem:[#allocation4 + $0xb0] sm:$0xff]
    %v1029 = vld [vmem:[#allocation4 + $0xb8] sm:$0xff]
    %v1030 = vld [vmem:[#allocation4 + $0xc0] sm:$0xff]
    %v1031 = vld [vmem:[#allocation4 + $0xc8] sm:$0xff]
    %v1032 = vld [vmem:[#allocation4 + $0xd0] sm:$0xff]
    %v1033 = vld [vmem:[#allocation4 + $0xd8] sm:$0xff]
    %v1034 = vld [vmem:[#allocation4 + $0xe0] sm:$0xff]
    %v1035 = vld [vmem:[#allocation4 + $0xe8] sm:$0xff]
    %v1036 = vld [vmem:[#allocation4 + $0xf0] sm:$0xff]
    %v1037 = vld [vmem:[#allocation4 + $0xf8] sm:$0xff]
    %v1038 = vld [vmem:[#allocation4 + $0x100] sm:$0xff]
    %v1039 = vld [vmem:[#allocation4 + $0x108] sm:$0xff]
    %v1040 = vld [vmem:[#allocation4 + $0x110] sm:$0xff]
    %v1041 = vld [vmem:[#allocation4 + $0x118] sm:$0xff]
    %v1042 = vld [vmem:[#allocation4 + $0x120] sm:$0xff]
    %v1043 = vld [vmem:[#allocation4 + $0x128] sm:$0xff]
    %v1044 = vld [vmem:[#allocation4 + $0x130] sm:$0xff]
    %v1045 = vld [vmem:[#allocation4 + $0x138] sm:$0xff]
    %v1046 = vld [vmem:[#allocation4 + $0x140] sm:$0xff]
    %v1047 = vld [vmem:[#allocation4 + $0x148] sm:$0xff]
    %v1048 = vld [vmem:[#allocation4 + $0x150] sm:$0xff]
    %v1049 = vld [vmem:[#allocation4 + $0x158] sm:$0xff]
    %v1050 = vld [vmem:[#allocation4 + $0x160] sm:$0xff]
    %v1051 = vld [vmem:[#allocation4 + $0x168] sm:$0xff]
    %v1052 = vld [vmem:[#allocation4 + $0x170] sm:$0xff]
    %v1053 = vld [vmem:[#allocation4 + $0x178] sm:$0xff]
    %v1054 = vld [vmem:[#allocation4 + $0x180] sm:$0xff]
    %v1055 = vld [vmem:[#allocation4 + $0x188] sm:$0xff]
    %v1056 = vld [vmem:[#allocation4 + $0x190] sm:$0xff]
    %v1057 = vld [vmem:[#allocation4 + $0x198] sm:$0xff]
    %v1058 = vld [vmem:[#allocation4 + $0x1a0] sm:$0xff]
    %v1059 = vld [vmem:[#allocation4 + $0x1a8] sm:$0xff]
    %v1060 = vld [vmem:[#allocation4 + $0x1b0] sm:$0xff]
    %v1061 = vld [vmem:[#allocation4 + $0x1b8] sm:$0xff]
    %v1062 = vld [vmem:[#allocation4 + $0x1c0] sm:$0xff]
    %v1063 = vld [vmem:[#allocation4 + $0x1c8] sm:$0xff]
    %v1064 = vld [vmem:[#allocation4 + $0x1d0] sm:$0xff]
    %v1065 = vld [vmem:[#allocation4 + $0x1d8] sm:$0xff]
    %v1066 = vld [vmem:[#allocation4 + $0x1e0] sm:$0xff]
    %v1067 = vld [vmem:[#allocation4 + $0x1e8] sm:$0xff]
    %v1068 = vld [vmem:[#allocation4 + $0x1f0] sm:$0xff]
    %v1069 = vld [vmem:[#allocation4 + $0x1f8] sm:$0xff]
    %v1070 = vld [vmem:[#allocation4 + $0x200] sm:$0xff]
    %v1071 = vld [vmem:[#allocation4 + $0x208] sm:$0xff]
    %v1072 = vld [vmem:[#allocation4 + $0x210] sm:$0xff]
    %v1073 = vld [vmem:[#allocation4 + $0x218] sm:$0xff]
    %v1074 = vld [vmem:[#allocation4 + $0x220] sm:$0xff]
    %v1075 = vld [vmem:[#allocation4 + $0x228] sm:$0xff]
    %v1076 = vld [vmem:[#allocation4 + $0x230] sm:$0xff]
    %v1077 = vld [vmem:[#allocation4 + $0x238] sm:$0xff]
    %v1078 = vld [vmem:[#allocation4 + $0x240] sm:$0xff]
    %v1079 = vld [vmem:[#allocation4 + $0x248] sm:$0xff]
    %v1080 = vld [vmem:[#allocation4 + $0x250] sm:$0xff]
    %v1081 = vld [vmem:[#allocation4 + $0x258] sm:$0xff]
    %v1082 = vld [vmem:[#allocation4 + $0x260] sm:$0xff]
    %v1083 = vld [vmem:[#allocation4 + $0x268] sm:$0xff]
    %v1084 = vld [vmem:[#allocation4 + $0x270] sm:$0xff]
    %v1085 = vld [vmem:[#allocation4 + $0x278] sm:$0xff]
    %v1086 = vld [vmem:[#allocation4 + $0x280] sm:$0xff]
    %v1087 = vld [vmem:[#allocation4 + $0x288] sm:$0xff]
    %v1088 = vld [vmem:[#allocation4 + $0x290] sm:$0xff]
    %v1089 = vld [vmem:[#allocation4 + $0x298] sm:$0xff]
    %v1090 = vld [vmem:[#allocation4 + $0x2a0] sm:$0xff]
    %v1091 = vld [vmem:[#allocation4 + $0x2a8] sm:$0xff]
    %v1092 = vld [vmem:[#allocation4 + $0x2b0] sm:$0xff]
    %v1093 = vld [vmem:[#allocation4 + $0x2b8] sm:$0xff]
    %v1094 = vld [vmem:[#allocation4 + $0x2c0] sm:$0xff]
    %v1095 = vld [vmem:[#allocation4 + $0x2c8] sm:$0xff]
    %v1096 = vld [vmem:[#allocation4 + $0x2d0] sm:$0xff]
    %v1097 = vld [vmem:[#allocation4 + $0x2d8] sm:$0xff]
    %v1098 = vld [vmem:[#allocation4 + $0x2e0] sm:$0xff]
    %v1099 = vld [vmem:[#allocation4 + $0x2e8] sm:$0xff]
    %v1100 = vld [vmem:[#allocation4 + $0x2f0] sm:$0xff]
    %v1101 = vld [vmem:[#allocation4 + $0x2f8] sm:$0xff]
    %v1102 = vld [vmem:[%s6] sm:$0x3]
    %v1104 = vperm.slane %v1102, 0
    %v1105 = vperm.slane %v1102, 1
    %v1204 = vunpack.c.l.b16 %v1006
    %v1205 = vunpack.c.h.b16 %v1006
    %v1206 = vunpack.c.l.b16 %v1007
    %v1207 = vunpack.c.h.b16 %v1007
    %v1208 = vunpack.c.l.b16 %v1008
    %v1209 = vunpack.c.h.b16 %v1008
    %v1210 = vunpack.c.l.b16 %v1009
    %v1211 = vunpack.c.h.b16 %v1009
    %v1212 = vunpack.c.l.b16 %v1010
    %v1213 = vunpack.c.h.b16 %v1010
    %v1214 = vunpack.c.l.b16 %v1011
    %v1215 = vunpack.c.h.b16 %v1011
    %v1216 = vunpack.c.l.b16 %v1012
    %v1217 = vunpack.c.h.b16 %v1012
    %v1218 = vunpack.c.l.b16 %v1013
    %v1219 = vunpack.c.h.b16 %v1013
    %v1220 = vunpack.c.l.b16 %v1014
    %v1221 = vunpack.c.h.b16 %v1014
    %v1222 = vunpack.c.l.b16 %v1015
    %v1223 = vunpack.c.h.b16 %v1015
    %v1224 = vunpack.c.l.b16 %v1016
    %v1225 = vunpack.c.h.b16 %v1016
    %v1226 = vunpack.c.l.b16 %v1017
    %v1227 = vunpack.c.h.b16 %v1017
    %v1228 = vunpack.c.l.b16 %v1018
    %v1229 = vunpack.c.h.b16 %v1018
    %v1230 = vunpack.c.l.b16 %v1019
    %v1231 = vunpack.c.h.b16 %v1019
    %v1232 = vunpack.c.l.b16 %v1020
    %v1233 = vunpack.c.h.b16 %v1020
    %v1234 = vunpack.c.l.b16 %v1021
    %v1235 = vunpack.c.h.b16 %v1021
    %v1236 = vunpack.c.l.b16 %v1022
    %v1237 = vunpack.c.h.b16 %v1022
    %v1238 = vunpack.c.l.b16 %v1023
    %v1239 = vunpack.c.h.b16 %v1023
    %v1240 = vunpack.c.l.b16 %v1024
    %v1241 = vunpack.c.h.b16 %v1024
    %v1242 = vunpack.c.l.b16 %v1025
    %v1243 = vunpack.c.h.b16 %v1025
    %v1244 = vunpack.c.l.b16 %v1026
    %v1245 = vunpack.c.h.b16 %v1026
    %v1246 = vunpack.c.l.b16 %v1027
    %v1247 = vunpack.c.h.b16 %v1027
    %v1248 = vunpack.c.l.b16 %v1028
    %v1249 = vunpack.c.h.b16 %v1028
    %v1250 = vunpack.c.l.b16 %v1029
    %v1251 = vunpack.c.h.b16 %v1029
    %v1252 = vunpack.c.l.b16 %v1030
    %v1253 = vunpack.c.h.b16 %v1030
    %v1254 = vunpack.c.l.b16 %v1031
    %v1255 = vunpack.c.h.b16 %v1031
    %v1256 = vunpack.c.l.b16 %v1032
    %v1257 = vunpack.c.h.b16 %v1032
    %v1258 = vunpack.c.l.b16 %v1033
    %v1259 = vunpack.c.h.b16 %v1033
    %v1260 = vunpack.c.l.b16 %v1034
    %v1261 = vunpack.c.h.b16 %v1034
    %v1262 = vunpack.c.l.b16 %v1035
    %v1263 = vunpack.c.h.b16 %v1035
    %v1264 = vunpack.c.l.b16 %v1036
    %v1265 = vunpack.c.h.b16 %v1036
    %v1266 = vunpack.c.l.b16 %v1037
    %v1267 = vunpack.c.h.b16 %v1037
    %v1268 = vunpack.c.l.b16 %v1038
    %v1269 = vunpack.c.h.b16 %v1038
    %v1270 = vunpack.c.l.b16 %v1039
    %v1271 = vunpack.c.h.b16 %v1039
    %v1272 = vunpack.c.l.b16 %v1040
    %v1273 = vunpack.c.h.b16 %v1040
    %v1274 = vunpack.c.l.b16 %v1041
    %v1275 = vunpack.c.h.b16 %v1041
    %v1276 = vunpack.c.l.b16 %v1042
    %v1277 = vunpack.c.h.b16 %v1042
    %v1278 = vunpack.c.l.b16 %v1043
    %v1279 = vunpack.c.h.b16 %v1043
    %v1280 = vunpack.c.l.b16 %v1044
    %v1281 = vunpack.c.h.b16 %v1044
    %v1282 = vunpack.c.l.b16 %v1045
    %v1283 = vunpack.c.h.b16 %v1045
    %v1284 = vunpack.c.l.b16 %v1046
    %v1285 = vunpack.c.h.b16 %v1046
    %v1286 = vunpack.c.l.b16 %v1047
    %v1287 = vunpack.c.h.b16 %v1047
    %v1288 = vunpack.c.l.b16 %v1048
    %v1289 = vunpack.c.h.b16 %v1048
    %v1290 = vunpack.c.l.b16 %v1049
    %v1291 = vunpack.c.h.b16 %v1049
    %v1292 = vunpack.c.l.b16 %v1050
    %v1293 = vunpack.c.h.b16 %v1050
    %v1294 = vunpack.c.l.b16 %v1051
    %v1295 = vunpack.c.h.b16 %v1051
    %v1296 = vunpack.c.l.b16 %v1052
    %v1297 = vunpack.c.h.b16 %v1052
    %v1298 = vunpack.c.l.b16 %v1053
    %v1299 = vunpack.c.h.b16 %v1053
    %v1300 = vunpack.c.l.b16 %v1054
    %v1301 = vunpack.c.h.b16 %v1054
    %v1302 = vunpack.c.l.b16 %v1055
    %v1303 = vunpack.c.h.b16 %v1055
    %v1304 = vunpack.c.l.b16 %v1056
    %v1305 = vunpack.c.h.b16 %v1056
    %v1306 = vunpack.c.l.b16 %v1057
    %v1307 = vunpack.c.h.b16 %v1057
    %v1308 = vunpack.c.l.b16 %v1058
    %v1309 = vunpack.c.h.b16 %v1058
    %v1310 = vunpack.c.l.b16 %v1059
    %v1311 = vunpack.c.h.b16 %v1059
    %v1312 = vunpack.c.l.b16 %v1060
    %v1313 = vunpack.c.h.b16 %v1060
    %v1314 = vunpack.c.l.b16 %v1061
    %v1315 = vunpack.c.h.b16 %v1061
    %v1316 = vunpack.c.l.b16 %v1062
    %v1317 = vunpack.c.h.b16 %v1062
    %v1318 = vunpack.c.l.b16 %v1063
    %v1319 = vunpack.c.h.b16 %v1063
    %v1320 = vunpack.c.l.b16 %v1064
    %v1321 = vunpack.c.h.b16 %v1064
    %v1322 = vunpack.c.l.b16 %v1065
    %v1323 = vunpack.c.h.b16 %v1065
    %v1324 = vunpack.c.l.b16 %v1066
    %v1325 = vunpack.c.h.b16 %v1066
    %v1326 = vunpack.c.l.b16 %v1067
    %v1327 = vunpack.c.h.b16 %v1067
    %v1328 = vunpack.c.l.b16 %v1068
    %v1329 = vunpack.c.h.b16 %v1068
    %v1330 = vunpack.c.l.b16 %v1069
    %v1331 = vunpack.c.h.b16 %v1069
    %v1332 = vunpack.c.l.b16 %v1070
    %v1333 = vunpack.c.h.b16 %v1070
    %v1334 = vunpack.c.l.b16 %v1071
    %v1335 = vunpack.c.h.b16 %v1071
    %v1336 = vunpack.c.l.b16 %v1072
    %v1337 = vunpack.c.h.b16 %v1072
    %v1338 = vunpack.c.l.b16 %v1073
    %v1339 = vunpack.c.h.b16 %v1073
    %v1340 = vunpack.c.l.b16 %v1074
    %v1341 = vunpack.c.h.b16 %v1074
    %v1342 = vunpack.c.l.b16 %v1075
    %v1343 = vunpack.c.h.b16 %v1075
    %v1344 = vunpack.c.l.b16 %v1076
    %v1345 = vunpack.c.h.b16 %v1076
    %v1346 = vunpack.c.l.b16 %v1077
    %v1347 = vunpack.c.h.b16 %v1077
    %v1348 = vunpack.c.l.b16 %v1078
    %v1349 = vunpack.c.h.b16 %v1078
    %v1350 = vunpack.c.l.b16 %v1079
    %v1351 = vunpack.c.h.b16 %v1079
    %v1352 = vunpack.c.l.b16 %v1080
    %v1353 = vunpack.c.h.b16 %v1080
    %v1354 = vunpack.c.l.b16 %v1081
    %v1355 = vunpack.c.h.b16 %v1081
    %v1356 = vunpack.c.l.b16 %v1082
    %v1357 = vunpack.c.h.b16 %v1082
    %v1358 = vunpack.c.l.b16 %v1083
    %v1359 = vunpack.c.h.b16 %v1083
    %v1360 = vunpack.c.l.b16 %v1084
    %v1361 = vunpack.c.h.b16 %v1084
    %v1362 = vunpack.c.l.b16 %v1085
    %v1363 = vunpack.c.h.b16 %v1085
    %v1364 = vunpack.c.l.b16 %v1086
    %v1365 = vunpack.c.h.b16 %v1086
    %v1366 = vunpack.c.l.b16 %v1087
    %v1367 = vunpack.c.h.b16 %v1087
    %v1368 = vunpack.c.l.b16 %v1088
    %v1369 = vunpack.c.h.b16 %v1088
    %v1370 = vunpack.c.l.b16 %v1089
    %v1371 = vunpack.c.h.b16 %v1089
    %v1372 = vunpack.c.l.b16 %v1090
    %v1373 = vunpack.c.h.b16 %v1090
    %v1374 = vunpack.c.l.b16 %v1091
    %v1375 = vunpack.c.h.b16 %v1091
    %v1376 = vunpack.c.l.b16 %v1092
    %v1377 = vunpack.c.h.b16 %v1092
    %v1378 = vunpack.c.l.b16 %v1093
    %v1379 = vunpack.c.h.b16 %v1093
    %v1380 = vunpack.c.l.b16 %v1094
    %v1381 = vunpack.c.h.b16 %v1094
    %v1382 = vunpack.c.l.b16 %v1095
    %v1383 = vunpack.c.h.b16 %v1095
    %v1384 = vunpack.c.l.b16 %v1096
    %v1385 = vunpack.c.h.b16 %v1096
    %v1386 = vunpack.c.l.b16 %v1097
    %v1387 = vunpack.c.h.b16 %v1097
    %v1388 = vunpack.c.l.b16 %v1098
    %v1389 = vunpack.c.h.b16 %v1098
    %v1390 = vunpack.c.l.b16 %v1099
    %v1391 = vunpack.c.h.b16 %v1099
    %v1392 = vunpack.c.l.b16 %v1100
    %v1393 = vunpack.c.h.b16 %v1100
    %v1394 = vunpack.c.l.b16 %v1101
    %v1395 = vunpack.c.h.b16 %v1101
    %v1396 = vpack.c.b16 %v1206, %v1204
    %v1397 = vpack.c.b16 %v1207, %v1205
    %v1398 = vpack.c.b16 %v1210, %v1208
    %v1399 = vpack.c.b16 %v1211, %v1209
    %v1400 = vpack.c.b16 %v1214, %v1212
    %v1401 = vpack.c.b16 %v1215, %v1213
    %v1402 = vpack.c.b16 %v1218, %v1216
    %v1403 = vpack.c.b16 %v1219, %v1217
    %v1404 = vpack.c.b16 %v1222, %v1220
    %v1405 = vpack.c.b16 %v1223, %v1221
    %v1406 = vpack.c.b16 %v1226, %v1224
    %v1407 = vpack.c.b16 %v1227, %v1225
    %v1408 = vpack.c.b16 %v1230, %v1228
    %v1409 = vpack.c.b16 %v1231, %v1229
    %v1410 = vpack.c.b16 %v1234, %v1232
    %v1411 = vpack.c.b16 %v1235, %v1233
    %v1412 = vpack.c.b16 %v1238, %v1236
    %v1413 = vpack.c.b16 %v1239, %v1237
    %v1414 = vpack.c.b16 %v1242, %v1240
    %v1415 = vpack.c.b16 %v1243, %v1241
    %v1416 = vpack.c.b16 %v1246, %v1244
    %v1417 = vpack.c.b16 %v1247, %v1245
    %v1418 = vpack.c.b16 %v1250, %v1248
    %v1419 = vpack.c.b16 %v1251, %v1249
    %v1420 = vpack.c.b16 %v1254, %v1252
    %v1421 = vpack.c.b16 %v1255, %v1253
    %v1422 = vpack.c.b16 %v1258, %v1256
    %v1423 = vpack.c.b16 %v1259, %v1257
    %v1424 = vpack.c.b16 %v1262, %v1260
    %v1425 = vpack.c.b16 %v1263, %v1261
    %v1426 = vpack.c.b16 %v1266, %v1264
    %v1427 = vpack.c.b16 %v1267, %v1265
    %v1428 = vpack.c.b16 %v1270, %v1268
    %v1429 = vpack.c.b16 %v1271, %v1269
    %v1430 = vpack.c.b16 %v1274, %v1272
    %v1431 = vpack.c.b16 %v1275, %v1273
    %v1432 = vpack.c.b16 %v1278, %v1276
    %v1433 = vpack.c.b16 %v1279, %v1277
    %v1434 = vpack.c.b16 %v1282, %v1280
    %v1435 = vpack.c.b16 %v1283, %v1281
    %v1436 = vpack.c.b16 %v1286, %v1284
    %v1437 = vpack.c.b16 %v1287, %v1285
    %v1438 = vpack.c.b16 %v1290, %v1288
    %v1439 = vpack.c.b16 %v1291, %v1289
    %v1440 = vpack.c.b16 %v1294, %v1292
    %v1441 = vpack.c.b16 %v1295, %v1293
    %v1442 = vpack.c.b16 %v1298, %v1296
    %v1443 = vpack.c.b16 %v1299, %v1297
    %v1444 = vpack.c.b16 %v1302, %v1300
    %v1445 = vpack.c.b16 %v1303, %v1301
    %v1446 = vpack.c.b16 %v1306, %v1304
    %v1447 = vpack.c.b16 %v1307, %v1305
    %v1448 = vpack.c.b16 %v1310, %v1308
    %v1449 = vpack.c.b16 %v1311, %v1309
    %v1450 = vpack.c.b16 %v1314, %v1312
    %v1451 = vpack.c.b16 %v1315, %v1313
    %v1452 = vpack.c.b16 %v1318, %v1316
    %v1453 = vpack.c.b16 %v1319, %v1317
    %v1454 = vpack.c.b16 %v1322, %v1320
    %v1455 = vpack.c.b16 %v1323, %v1321
    %v1456 = vpack.c.b16 %v1326, %v1324
    %v1457 = vpack.c.b16 %v1327, %v1325
    %v1458 = vpack.c.b16 %v1330, %v1328
    %v1459 = vpack.c.b16 %v1331, %v1329
    %v1460 = vpack.c.b16 %v1334, %v1332
    %v1461 = vpack.c.b16 %v1335, %v1333
    %v1462 = vpack.c.b16 %v1338, %v1336
    %v1463 = vpack.c.b16 %v1339, %v1337
    %v1464 = vpack.c.b16 %v1342, %v1340
    %v1465 = vpack.c.b16 %v1343, %v1341
    %v1466 = vpack.c.b16 %v1346, %v1344
    %v1467 = vpack.c.b16 %v1347, %v1345
    %v1468 = vpack.c.b16 %v1350, %v1348
    %v1469 = vpack.c.b16 %v1351, %v1349
    %v1470 = vpack.c.b16 %v1354, %v1352
    %v1471 = vpack.c.b16 %v1355, %v1353
    %v1472 = vpack.c.b16 %v1358, %v1356
    %v1473 = vpack.c.b16 %v1359, %v1357
    %v1474 = vpack.c.b16 %v1362, %v1360
    %v1475 = vpack.c.b16 %v1363, %v1361
    %v1476 = vpack.c.b16 %v1366, %v1364
    %v1477 = vpack.c.b16 %v1367, %v1365
    %v1478 = vpack.c.b16 %v1370, %v1368
    %v1479 = vpack.c.b16 %v1371, %v1369
    %v1480 = vpack.c.b16 %v1374, %v1372
    %v1481 = vpack.c.b16 %v1375, %v1373
    %v1482 = vpack.c.b16 %v1378, %v1376
    %v1483 = vpack.c.b16 %v1379, %v1377
    %v1484 = vpack.c.b16 %v1382, %v1380
    %v1485 = vpack.c.b16 %v1383, %v1381
    %v1486 = vpack.c.b16 %v1386, %v1384
    %v1487 = vpack.c.b16 %v1387, %v1385
    %v1488 = vpack.c.b16 %v1390, %v1388
    %v1489 = vpack.c.b16 %v1391, %v1389
    %v1490 = vpack.c.b16 %v1394, %v1392
    %v1491 = vpack.c.b16 %v1395, %v1393
    %1588 = vmatpush.bf16.msra.mxu0 %v1410
    %1589 = vmatpush.bf16.msra.mxu0 %v1408
    %1590 = vmatpush.bf16.msra.mxu0 %v1406
    %1591 = vmatpush.bf16.msra.mxu0 %v1404
    %1592 = vmatpush.bf16.msra.mxu0 %v1402
    %1593 = vmatpush.bf16.msra.mxu0 %v1400
    %1594 = vmatpush.bf16.msra.mxu0 %v1398
    %1595 = vmatpush.bf16.msra.mxu0 %v1396
    %1596 = vmatmul.bf16.gmra.mxu0 %v1000
    %v1597 = vpop.f32.mrf.mxu0
    %v1598 = vadd.f32 %v1104, %v1597
    %v1599 = vpop.f32.mrf.mxu0
    %1600 = vdwg.mxu0
    %1601 = vmatpush.bf16.msra.mxu0 %v1426
    %1602 = vmatpush.bf16.msra.mxu0 %v1424
    %1603 = vmatpush.bf16.msra.mxu0 %v1422
    %1604 = vmatpush.bf16.msra.mxu0 %v1420
    %1605 = vmatpush.bf16.msra.mxu0 %v1418
    %1606 = vmatpush.bf16.msra.mxu0 %v1416
    %1607 = vmatpush.bf16.msra.mxu0 %v1414
    %1608 = vmatpush.bf16.msra.mxu0 %v1412
    %1609 = vmatmul.bf16.gmra.mxu0 %v1001
    %v1610 = vpop.f32.mrf.mxu0
    %v1611 = vadd.f32 %v1598, %v1610
    %v1612 = vpop.f32.mrf.mxu0
    %1613 = vdwg.mxu0
    %1614 = vmatpush.bf16.msra.mxu0 %v1442
    %1615 = vmatpush.bf16.msra.mxu0 %v1440
    %1616 = vmatpush.bf16.msra.mxu0 %v1438
    %1617 = vmatpush.bf16.msra.mxu0 %v1436
    %1618 = vmatpush.bf16.msra.mxu0 %v1434
    %1619 = vmatpush.bf16.msra.mxu0 %v1432
    %1620 = vmatpush.bf16.msra.mxu0 %v1430
    %1621 = vmatpush.bf16.msra.mxu0 %v1428
    %1622 = vmatmul.bf16.gmra.mxu0 %v1002
    %v1623 = vpop.f32.mrf.mxu0
    %v1624 = vadd.f32 %v1611, %v1623
    %v1625 = vpop.f32.mrf.mxu0
    %1626 = vdwg.mxu0
    %1627 = vmatpush.bf16.msra.mxu0 %v1458
    %1628 = vmatpush.bf16.msra.mxu0 %v1456
    %1629 = vmatpush.bf16.msra.mxu0 %v1454
    %1630 = vmatpush.bf16.msra.mxu0 %v1452
    %1631 = vmatpush.bf16.msra.mxu0 %v1450
    %1632 = vmatpush.bf16.msra.mxu0 %v1448
    %1633 = vmatpush.bf16.msra.mxu0 %v1446
    %1634 = vmatpush.bf16.msra.mxu0 %v1444
    %1635 = vmatmul.bf16.gmra.mxu0 %v1003
    %v1636 = vpop.f32.mrf.mxu0
    %v1637 = vadd.f32 %v1624, %v1636
    %v1638 = vpop.f32.mrf.mxu0
    %1639 = vdwg.mxu0
    %1640 = vmatpush.bf16.msra.mxu0 %v1474
    %1641 = vmatpush.bf16.msra.mxu0 %v1472
    %1642 = vmatpush.bf16.msra.mxu0 %v1470
    %1643 = vmatpush.bf16.msra.mxu0 %v1468
    %1644 = vmatpush.bf16.msra.mxu0 %v1466
    %1645 = vmatpush.bf16.msra.mxu0 %v1464
    %1646 = vmatpush.bf16.msra.mxu0 %v1462
    %1647 = vmatpush.bf16.msra.mxu0 %v1460
    %1648 = vmatmul.bf16.gmra.mxu0 %v1004
    %v1649 = vpop.f32.mrf.mxu0
    %v1650 = vadd.f32 %v1637, %v1649
    %v1651 = vpop.f32.mrf.mxu0
    %1652 = vdwg.mxu0
    %1653 = vmatpush.bf16.msra.mxu0 %v1490
    %1654 = vmatpush.bf16.msra.mxu0 %v1488
    %1655 = vmatpush.bf16.msra.mxu0 %v1486
    %1656 = vmatpush.bf16.msra.mxu0 %v1484
    %1657 = vmatpush.bf16.msra.mxu0 %v1482
    %1658 = vmatpush.bf16.msra.mxu0 %v1480
    %1659 = vmatpush.bf16.msra.mxu0 %v1478
    %1660 = vmatpush.bf16.msra.mxu0 %v1476
    %1661 = vmatmul.bf16.gmra.mxu0 %v1005
    %v1662 = vpop.f32.mrf.mxu0
    %v1663 = vadd.f32 %v1650, %v1662
    %v1664 = vpop.f32.mrf.mxu0
    %1665 = vdwg.mxu0
    %1666 = vmatpush.bf16.msra.mxu0 %v1411
    %1667 = vmatpush.bf16.msra.mxu0 %v1409
    %1668 = vmatpush.bf16.msra.mxu0 %v1407
    %1669 = vmatpush.bf16.msra.mxu0 %v1405
    %1670 = vmatpush.bf16.msra.mxu0 %v1403
    %1671 = vmatpush.bf16.msra.mxu0 %v1401
    %1672 = vmatpush.bf16.msra.mxu0 %v1399
    %1673 = vmatpush.bf16.msra.mxu0 %v1397
    %1674 = vmatmul.bf16.gmra.mxu0 %v1000
    %v1675 = vpop.f32.mrf.mxu0
    %v1676 = vadd.f32 %v1105, %v1675
    %v1677 = vpop.f32.mrf.mxu0
    %1678 = vdwg.mxu0
    %1679 = vmatpush.bf16.msra.mxu0 %v1427
    %1680 = vmatpush.bf16.msra.mxu0 %v1425
    %1681 = vmatpush.bf16.msra.mxu0 %v1423
    %1682 = vmatpush.bf16.msra.mxu0 %v1421
    %1683 = vmatpush.bf16.msra.mxu0 %v1419
    %1684 = vmatpush.bf16.msra.mxu0 %v1417
    %1685 = vmatpush.bf16.msra.mxu0 %v1415
    %1686 = vmatpush.bf16.msra.mxu0 %v1413
    %1687 = vmatmul.bf16.gmra.mxu0 %v1001
    %v1688 = vpop.f32.mrf.mxu0
    %v1689 = vadd.f32 %v1676, %v1688
    %v1690 = vpop.f32.mrf.mxu0
    %1691 = vdwg.mxu0
    %1692 = vmatpush.bf16.msra.mxu0 %v1443
    %1693 = vmatpush.bf16.msra.mxu0 %v1441
    %1694 = vmatpush.bf16.msra.mxu0 %v1439
    %1695 = vmatpush.bf16.msra.mxu0 %v1437
    %1696 = vmatpush.bf16.msra.mxu0 %v1435
    %1697 = vmatpush.bf16.msra.mxu0 %v1433
    %1698 = vmatpush.bf16.msra.mxu0 %v1431
    %1699 = vmatpush.bf16.msra.mxu0 %v1429
    %1700 = vmatmul.bf16.gmra.mxu0 %v1002
    %v1701 = vpop.f32.mrf.mxu0
    %v1702 = vadd.f32 %v1689, %v1701
    %v1703 = vpop.f32.mrf.mxu0
    %1704 = vdwg.mxu0
    %1705 = vmatpush.bf16.msra.mxu0 %v1459
    %1706 = vmatpush.bf16.msra.mxu0 %v1457
    %1707 = vmatpush.bf16.msra.mxu0 %v1455
    %1708 = vmatpush.bf16.msra.mxu0 %v1453
    %1709 = vmatpush.bf16.msra.mxu0 %v1451
    %1710 = vmatpush.bf16.msra.mxu0 %v1449
    %1711 = vmatpush.bf16.msra.mxu0 %v1447
    %1712 = vmatpush.bf16.msra.mxu0 %v1445
    %1713 = vmatmul.bf16.gmra.mxu0 %v1003
    %v1714 = vpop.f32.mrf.mxu0
    %v1715 = vadd.f32 %v1702, %v1714
    %v1716 = vpop.f32.mrf.mxu0
    %1717 = vdwg.mxu0
    %1718 = vmatpush.bf16.msra.mxu0 %v1475
    %1719 = vmatpush.bf16.msra.mxu0 %v1473
    %1720 = vmatpush.bf16.msra.mxu0 %v1471
    %1721 = vmatpush.bf16.msra.mxu0 %v1469
    %1722 = vmatpush.bf16.msra.mxu0 %v1467
    %1723 = vmatpush.bf16.msra.mxu0 %v1465
    %1724 = vmatpush.bf16.msra.mxu0 %v1463
    %1725 = vmatpush.bf16.msra.mxu0 %v1461
    %1726 = vmatmul.bf16.gmra.mxu0 %v1004
    %v1727 = vpop.f32.mrf.mxu0
    %v1728 = vadd.f32 %v1715, %v1727
    %v1729 = vpop.f32.mrf.mxu0
    %1730 = vdwg.mxu0
    %1731 = vmatpush.bf16.msra.mxu0 %v1491
    %1732 = vmatpush.bf16.msra.mxu0 %v1489
    %1733 = vmatpush.bf16.msra.mxu0 %v1487
    %1734 = vmatpush.bf16.msra.mxu0 %v1485
    %1735 = vmatpush.bf16.msra.mxu0 %v1483
    %1736 = vmatpush.bf16.msra.mxu0 %v1481
    %1737 = vmatpush.bf16.msra.mxu0 %v1479
    %1738 = vmatpush.bf16.msra.mxu0 %v1477
    %1739 = vmatmul.bf16.gmra.mxu0 %v1005
    %v1740 = vpop.f32.mrf.mxu0
    %v1741 = vadd.f32 %v1728, %v1740
    %v1742 = vpop.f32.mrf.mxu0
    %1743 = vdwg.mxu0
    %v1744 = vld [vmem:[#allocation6] sm:$0x1]
    %v1745 = vld [vmem:[%s8] sm:$0x3]
    %vm1746 = vcmp.ge.f32.partialorder %v1663, 0.0
    %vm1747 = vcmp.ge.f32.partialorder %v1741, 0.0
    %v1748 = vmul.f32 %v1663, 0.2
    %v1749 = vmul.f32 %v1741, 0.2
    %v1750 = vsel %vm1746, %v1663, %v1748
    %v1751 = vsel %vm1747, %v1741, %v1749
    %v1752 = vrot.slane %v1750, 4
    %v1753 = vadd.f32 %v1750, %v1752
    %v1754 = vrot.slane %v1753, 2
    %v1755 = vadd.f32 %v1753, %v1754
    %v1756 = vrot.slane %v1755, 1
    %v1757 = vadd.f32 %v1755, %v1756
    %v1758 = vrot.slane %v1751, 4
    %v1759 = vadd.f32 %v1751, %v1758
    %v1760 = vrot.slane %v1759, 2
    %v1761 = vadd.f32 %v1759, %v1760
    %v1762 = vrot.slane %v1761, 1
    %v1763 = vadd.f32 %v1761, %v1762
    %1765 = vrot.lane.b32.xlu0 %v1757, 64
    %v1766 = vpop.permute.xlu0 %1765
    %v1768 = vadd.f32 %v1757, %v1766
    %v1769 = vadd.f32 %v1768, %v1763
    %1771 = vrot.lane.b32.xlu0 %v1763, 64
    %v1772 = vpop.permute.xlu0 %1771
    %v1774 = vadd.f32 %v1769, %v1772
    %v1775 = vmul.f32 %v1774, 0.03125
    %1777 = vrot.lane.b32.xlu0 %v1775, 64
    %v1778 = vpop.permute.xlu0 %1777
    %vm1780 = vcmask 523264
    %v1781 = vsel %vm1780, %v1775, %v1778
    %v1782 = vperm.slane %v1781, 0
    %v1783 = vsub.f32 %v1750, %v1782
    %v1784 = vsub.f32 %v1751, %v1782
    %v1785 = vmul.f32 %v1783, %v1783
    %v1786 = vmul.f32 %v1784, %v1784
    %v1787 = vrot.slane %v1785, 4
    %v1788 = vadd.f32 %v1785, %v1787
    %v1789 = vrot.slane %v1788, 2
    %v1790 = vadd.f32 %v1788, %v1789
    %v1791 = vrot.slane %v1790, 1
    %v1792 = vadd.f32 %v1790, %v1791
    %v1793 = vrot.slane %v1786, 4
    %v1794 = vadd.f32 %v1786, %v1793
    %v1795 = vrot.slane %v1794, 2
    %v1796 = vadd.f32 %v1794, %v1795
    %v1797 = vrot.slane %v1796, 1
    %v1798 = vadd.f32 %v1796, %v1797
    %1800 = vrot.lane.b32.xlu0 %v1792, 64
    %v1801 = vpop.permute.xlu0 %1800
    %v1803 = vadd.f32 %v1792, %v1801
    %v1804 = vadd.f32 %v1803, %v1798
    %1806 = vrot.lane.b32.xlu0 %v1798, 64
    %v1807 = vpop.permute.xlu0 %1806
    %v1809 = vadd.f32 %v1804, %v1807
    %v1810 = vmul.f32 %v1809, 0.03125
    %v1811 = vadd.f32 %v1810, 1e-05
    %v1812 = vrsqrt.pop %v1811
    %v1813 = vmul.f32 %v1812, %v1811
    %v1814 = vmul.f32 %v1813, %v1812
    %v1815 = vmul.f32 0.5, %v1814
    %v1816 = vsub.f32 1.5, %v1815
    %v1817 = vmul.f32 %v1812, %v1816
    %vm1818 = vweird.f32 %v1811
    %vm1819 = vweird.f32 %v1812
    %vm1820 = vmor %vm1818, %vm1819
    %v1821 = vsel %vm1820, %v1812, %v1817
    %v1822 = vmul.f32 %v1821, %v1744
    %1824 = vrot.lane.b32.xlu0 %v1822, 64
    %v1825 = vpop.permute.xlu0 %1824
    %v1827 = vsel %vm1780, %v1822, %v1825
    %v1828 = vperm.slane %v1827, 0
    %v1829 = vmul.f32 %v1783, %v1828
    %v1830 = vmul.f32 %v1784, %v1828
    %v1832 = vperm.slane %v1745, 0
    %v1833 = vperm.slane %v1745, 1
    %v1836 = vadd.f32 %v1829, %v1832
    %v1837 = vadd.f32 %v1830, %v1833
    %v1838 = vrot.slane %v1836, 7
    %v1839 = vrot.slane %v1837, 7
    %v1840 = vsel %vm176, 0.0, %v1838
    %v1841 = vsel %vm176, 0.0, %v1839
    %v1842 = vrot.slane %v1836, 1
    %v1843 = vrot.slane %v1837, 1
    %v1844 = vsel %vm182, 0.0, %v1842
    %v1845 = vsel %vm182, 0.0, %v1843
    %v1846 = vpack.c.bf16 %v1836, %v1836
    %v1847 = vpack.c.bf16 %v1837, %v1837
    %v1848 = vpack.c.bf16 %v1840, %v1840
    %v1849 = vpack.c.bf16 %v1841, %v1841
    %v1850 = vpack.c.bf16 %v1844, %v1844
    %v1851 = vpack.c.bf16 %v1845, %v1845
    %v1852 = vld [vmem:[#allocation7] sm:$0xff]
    %v1853 = vld [vmem:[#allocation7 + $0x8] sm:$0xff]
    %v1854 = vld [vmem:[#allocation7 + $0x10] sm:$0xff]
    %v1855 = vld [vmem:[#allocation7 + $0x18] sm:$0xff]
    %v1856 = vld [vmem:[#allocation7 + $0x20] sm:$0xff]
    %v1857 = vld [vmem:[#allocation7 + $0x28] sm:$0xff]
    %v1858 = vld [vmem:[#allocation7 + $0x30] sm:$0xff]
    %v1859 = vld [vmem:[#allocation7 + $0x38] sm:$0xff]
    %v1860 = vld [vmem:[#allocation7 + $0x40] sm:$0xff]
    %v1861 = vld [vmem:[#allocation7 + $0x48] sm:$0xff]
    %v1862 = vld [vmem:[#allocation7 + $0x50] sm:$0xff]
    %v1863 = vld [vmem:[#allocation7 + $0x58] sm:$0xff]
    %v1864 = vld [vmem:[#allocation7 + $0x60] sm:$0xff]
    %v1865 = vld [vmem:[#allocation7 + $0x68] sm:$0xff]
    %v1866 = vld [vmem:[#allocation7 + $0x70] sm:$0xff]
    %v1867 = vld [vmem:[#allocation7 + $0x78] sm:$0xff]
    %v1868 = vld [vmem:[#allocation7 + $0x80] sm:$0xff]
    %v1869 = vld [vmem:[#allocation7 + $0x88] sm:$0xff]
    %v1870 = vld [vmem:[#allocation7 + $0x90] sm:$0xff]
    %v1871 = vld [vmem:[#allocation7 + $0x98] sm:$0xff]
    %v1872 = vld [vmem:[#allocation7 + $0xa0] sm:$0xff]
    %v1873 = vld [vmem:[#allocation7 + $0xa8] sm:$0xff]
    %v1874 = vld [vmem:[#allocation7 + $0xb0] sm:$0xff]
    %v1875 = vld [vmem:[#allocation7 + $0xb8] sm:$0xff]
    %v1876 = vld [vmem:[#allocation7 + $0xc0] sm:$0xff]
    %v1877 = vld [vmem:[#allocation7 + $0xc8] sm:$0xff]
    %v1878 = vld [vmem:[#allocation7 + $0xd0] sm:$0xff]
    %v1879 = vld [vmem:[#allocation7 + $0xd8] sm:$0xff]
    %v1880 = vld [vmem:[#allocation7 + $0xe0] sm:$0xff]
    %v1881 = vld [vmem:[#allocation7 + $0xe8] sm:$0xff]
    %v1882 = vld [vmem:[#allocation7 + $0xf0] sm:$0xff]
    %v1883 = vld [vmem:[#allocation7 + $0xf8] sm:$0xff]
    %v1884 = vld [vmem:[#allocation7 + $0x100] sm:$0xff]
    %v1885 = vld [vmem:[#allocation7 + $0x108] sm:$0xff]
    %v1886 = vld [vmem:[#allocation7 + $0x110] sm:$0xff]
    %v1887 = vld [vmem:[#allocation7 + $0x118] sm:$0xff]
    %v1888 = vld [vmem:[#allocation7 + $0x120] sm:$0xff]
    %v1889 = vld [vmem:[#allocation7 + $0x128] sm:$0xff]
    %v1890 = vld [vmem:[#allocation7 + $0x130] sm:$0xff]
    %v1891 = vld [vmem:[#allocation7 + $0x138] sm:$0xff]
    %v1892 = vld [vmem:[#allocation7 + $0x140] sm:$0xff]
    %v1893 = vld [vmem:[#allocation7 + $0x148] sm:$0xff]
    %v1894 = vld [vmem:[#allocation7 + $0x150] sm:$0xff]
    %v1895 = vld [vmem:[#allocation7 + $0x158] sm:$0xff]
    %v1896 = vld [vmem:[#allocation7 + $0x160] sm:$0xff]
    %v1897 = vld [vmem:[#allocation7 + $0x168] sm:$0xff]
    %v1898 = vld [vmem:[#allocation7 + $0x170] sm:$0xff]
    %v1899 = vld [vmem:[#allocation7 + $0x178] sm:$0xff]
    %v1900 = vld [vmem:[#allocation7 + $0x180] sm:$0xff]
    %v1901 = vld [vmem:[#allocation7 + $0x188] sm:$0xff]
    %v1902 = vld [vmem:[#allocation7 + $0x190] sm:$0xff]
    %v1903 = vld [vmem:[#allocation7 + $0x198] sm:$0xff]
    %v1904 = vld [vmem:[#allocation7 + $0x1a0] sm:$0xff]
    %v1905 = vld [vmem:[#allocation7 + $0x1a8] sm:$0xff]
    %v1906 = vld [vmem:[#allocation7 + $0x1b0] sm:$0xff]
    %v1907 = vld [vmem:[#allocation7 + $0x1b8] sm:$0xff]
    %v1908 = vld [vmem:[#allocation7 + $0x1c0] sm:$0xff]
    %v1909 = vld [vmem:[#allocation7 + $0x1c8] sm:$0xff]
    %v1910 = vld [vmem:[#allocation7 + $0x1d0] sm:$0xff]
    %v1911 = vld [vmem:[#allocation7 + $0x1d8] sm:$0xff]
    %v1912 = vld [vmem:[#allocation7 + $0x1e0] sm:$0xff]
    %v1913 = vld [vmem:[#allocation7 + $0x1e8] sm:$0xff]
    %v1914 = vld [vmem:[#allocation7 + $0x1f0] sm:$0xff]
    %v1915 = vld [vmem:[#allocation7 + $0x1f8] sm:$0xff]
    %v1916 = vld [vmem:[#allocation7 + $0x200] sm:$0xff]
    %v1917 = vld [vmem:[#allocation7 + $0x208] sm:$0xff]
    %v1918 = vld [vmem:[#allocation7 + $0x210] sm:$0xff]
    %v1919 = vld [vmem:[#allocation7 + $0x218] sm:$0xff]
    %v1920 = vld [vmem:[#allocation7 + $0x220] sm:$0xff]
    %v1921 = vld [vmem:[#allocation7 + $0x228] sm:$0xff]
    %v1922 = vld [vmem:[#allocation7 + $0x230] sm:$0xff]
    %v1923 = vld [vmem:[#allocation7 + $0x238] sm:$0xff]
    %v1924 = vld [vmem:[#allocation7 + $0x240] sm:$0xff]
    %v1925 = vld [vmem:[#allocation7 + $0x248] sm:$0xff]
    %v1926 = vld [vmem:[#allocation7 + $0x250] sm:$0xff]
    %v1927 = vld [vmem:[#allocation7 + $0x258] sm:$0xff]
    %v1928 = vld [vmem:[#allocation7 + $0x260] sm:$0xff]
    %v1929 = vld [vmem:[#allocation7 + $0x268] sm:$0xff]
    %v1930 = vld [vmem:[#allocation7 + $0x270] sm:$0xff]
    %v1931 = vld [vmem:[#allocation7 + $0x278] sm:$0xff]
    %v1932 = vld [vmem:[#allocation7 + $0x280] sm:$0xff]
    %v1933 = vld [vmem:[#allocation7 + $0x288] sm:$0xff]
    %v1934 = vld [vmem:[#allocation7 + $0x290] sm:$0xff]
    %v1935 = vld [vmem:[#allocation7 + $0x298] sm:$0xff]
    %v1936 = vld [vmem:[#allocation7 + $0x2a0] sm:$0xff]
    %v1937 = vld [vmem:[#allocation7 + $0x2a8] sm:$0xff]
    %v1938 = vld [vmem:[#allocation7 + $0x2b0] sm:$0xff]
    %v1939 = vld [vmem:[#allocation7 + $0x2b8] sm:$0xff]
    %v1940 = vld [vmem:[#allocation7 + $0x2c0] sm:$0xff]
    %v1941 = vld [vmem:[#allocation7 + $0x2c8] sm:$0xff]
    %v1942 = vld [vmem:[#allocation7 + $0x2d0] sm:$0xff]
    %v1943 = vld [vmem:[#allocation7 + $0x2d8] sm:$0xff]
    %v1944 = vld [vmem:[#allocation7 + $0x2e0] sm:$0xff]
    %v1945 = vld [vmem:[#allocation7 + $0x2e8] sm:$0xff]
    %v1946 = vld [vmem:[#allocation7 + $0x2f0] sm:$0xff]
    %v1947 = vld [vmem:[#allocation7 + $0x2f8] sm:$0xff]
    %v1948 = vld [vmem:[%s10] sm:$0x3]
    %v1950 = vperm.slane %v1948, 0
    %v1951 = vperm.slane %v1948, 1
    %v2050 = vunpack.c.l.b16 %v1852
    %v2051 = vunpack.c.h.b16 %v1852
    %v2052 = vunpack.c.l.b16 %v1853
    %v2053 = vunpack.c.h.b16 %v1853
    %v2054 = vunpack.c.l.b16 %v1854
    %v2055 = vunpack.c.h.b16 %v1854
    %v2056 = vunpack.c.l.b16 %v1855
    %v2057 = vunpack.c.h.b16 %v1855
    %v2058 = vunpack.c.l.b16 %v1856
    %v2059 = vunpack.c.h.b16 %v1856
    %v2060 = vunpack.c.l.b16 %v1857
    %v2061 = vunpack.c.h.b16 %v1857
    %v2062 = vunpack.c.l.b16 %v1858
    %v2063 = vunpack.c.h.b16 %v1858
    %v2064 = vunpack.c.l.b16 %v1859
    %v2065 = vunpack.c.h.b16 %v1859
    %v2066 = vunpack.c.l.b16 %v1860
    %v2067 = vunpack.c.h.b16 %v1860
    %v2068 = vunpack.c.l.b16 %v1861
    %v2069 = vunpack.c.h.b16 %v1861
    %v2070 = vunpack.c.l.b16 %v1862
    %v2071 = vunpack.c.h.b16 %v1862
    %v2072 = vunpack.c.l.b16 %v1863
    %v2073 = vunpack.c.h.b16 %v1863
    %v2074 = vunpack.c.l.b16 %v1864
    %v2075 = vunpack.c.h.b16 %v1864
    %v2076 = vunpack.c.l.b16 %v1865
    %v2077 = vunpack.c.h.b16 %v1865
    %v2078 = vunpack.c.l.b16 %v1866
    %v2079 = vunpack.c.h.b16 %v1866
    %v2080 = vunpack.c.l.b16 %v1867
    %v2081 = vunpack.c.h.b16 %v1867
    %v2082 = vunpack.c.l.b16 %v1868
    %v2083 = vunpack.c.h.b16 %v1868
    %v2084 = vunpack.c.l.b16 %v1869
    %v2085 = vunpack.c.h.b16 %v1869
    %v2086 = vunpack.c.l.b16 %v1870
    %v2087 = vunpack.c.h.b16 %v1870
    %v2088 = vunpack.c.l.b16 %v1871
    %v2089 = vunpack.c.h.b16 %v1871
    %v2090 = vunpack.c.l.b16 %v1872
    %v2091 = vunpack.c.h.b16 %v1872
    %v2092 = vunpack.c.l.b16 %v1873
    %v2093 = vunpack.c.h.b16 %v1873
    %v2094 = vunpack.c.l.b16 %v1874
    %v2095 = vunpack.c.h.b16 %v1874
    %v2096 = vunpack.c.l.b16 %v1875
    %v2097 = vunpack.c.h.b16 %v1875
    %v2098 = vunpack.c.l.b16 %v1876
    %v2099 = vunpack.c.h.b16 %v1876
    %v2100 = vunpack.c.l.b16 %v1877
    %v2101 = vunpack.c.h.b16 %v1877
    %v2102 = vunpack.c.l.b16 %v1878
    %v2103 = vunpack.c.h.b16 %v1878
    %v2104 = vunpack.c.l.b16 %v1879
    %v2105 = vunpack.c.h.b16 %v1879
    %v2106 = vunpack.c.l.b16 %v1880
    %v2107 = vunpack.c.h.b16 %v1880
    %v2108 = vunpack.c.l.b16 %v1881
    %v2109 = vunpack.c.h.b16 %v1881
    %v2110 = vunpack.c.l.b16 %v1882
    %v2111 = vunpack.c.h.b16 %v1882
    %v2112 = vunpack.c.l.b16 %v1883
    %v2113 = vunpack.c.h.b16 %v1883
    %v2114 = vunpack.c.l.b16 %v1884
    %v2115 = vunpack.c.h.b16 %v1884
    %v2116 = vunpack.c.l.b16 %v1885
    %v2117 = vunpack.c.h.b16 %v1885
    %v2118 = vunpack.c.l.b16 %v1886
    %v2119 = vunpack.c.h.b16 %v1886
    %v2120 = vunpack.c.l.b16 %v1887
    %v2121 = vunpack.c.h.b16 %v1887
    %v2122 = vunpack.c.l.b16 %v1888
    %v2123 = vunpack.c.h.b16 %v1888
    %v2124 = vunpack.c.l.b16 %v1889
    %v2125 = vunpack.c.h.b16 %v1889
    %v2126 = vunpack.c.l.b16 %v1890
    %v2127 = vunpack.c.h.b16 %v1890
    %v2128 = vunpack.c.l.b16 %v1891
    %v2129 = vunpack.c.h.b16 %v1891
    %v2130 = vunpack.c.l.b16 %v1892
    %v2131 = vunpack.c.h.b16 %v1892
    %v2132 = vunpack.c.l.b16 %v1893
    %v2133 = vunpack.c.h.b16 %v1893
    %v2134 = vunpack.c.l.b16 %v1894
    %v2135 = vunpack.c.h.b16 %v1894
    %v2136 = vunpack.c.l.b16 %v1895
    %v2137 = vunpack.c.h.b16 %v1895
    %v2138 = vunpack.c.l.b16 %v1896
    %v2139 = vunpack.c.h.b16 %v1896
    %v2140 = vunpack.c.l.b16 %v1897
    %v2141 = vunpack.c.h.b16 %v1897
    %v2142 = vunpack.c.l.b16 %v1898
    %v2143 = vunpack.c.h.b16 %v1898
    %v2144 = vunpack.c.l.b16 %v1899
    %v2145 = vunpack.c.h.b16 %v1899
    %v2146 = vunpack.c.l.b16 %v1900
    %v2147 = vunpack.c.h.b16 %v1900
    %v2148 = vunpack.c.l.b16 %v1901
    %v2149 = vunpack.c.h.b16 %v1901
    %v2150 = vunpack.c.l.b16 %v1902
    %v2151 = vunpack.c.h.b16 %v1902
    %v2152 = vunpack.c.l.b16 %v1903
    %v2153 = vunpack.c.h.b16 %v1903
    %v2154 = vunpack.c.l.b16 %v1904
    %v2155 = vunpack.c.h.b16 %v1904
    %v2156 = vunpack.c.l.b16 %v1905
    %v2157 = vunpack.c.h.b16 %v1905
    %v2158 = vunpack.c.l.b16 %v1906
    %v2159 = vunpack.c.h.b16 %v1906
    %v2160 = vunpack.c.l.b16 %v1907
    %v2161 = vunpack.c.h.b16 %v1907
    %v2162 = vunpack.c.l.b16 %v1908
    %v2163 = vunpack.c.h.b16 %v1908
    %v2164 = vunpack.c.l.b16 %v1909
    %v2165 = vunpack.c.h.b16 %v1909
    %v2166 = vunpack.c.l.b16 %v1910
    %v2167 = vunpack.c.h.b16 %v1910
    %v2168 = vunpack.c.l.b16 %v1911
    %v2169 = vunpack.c.h.b16 %v1911
    %v2170 = vunpack.c.l.b16 %v1912
    %v2171 = vunpack.c.h.b16 %v1912
    %v2172 = vunpack.c.l.b16 %v1913
    %v2173 = vunpack.c.h.b16 %v1913
    %v2174 = vunpack.c.l.b16 %v1914
    %v2175 = vunpack.c.h.b16 %v1914
    %v2176 = vunpack.c.l.b16 %v1915
    %v2177 = vunpack.c.h.b16 %v1915
    %v2178 = vunpack.c.l.b16 %v1916
    %v2179 = vunpack.c.h.b16 %v1916
    %v2180 = vunpack.c.l.b16 %v1917
    %v2181 = vunpack.c.h.b16 %v1917
    %v2182 = vunpack.c.l.b16 %v1918
    %v2183 = vunpack.c.h.b16 %v1918
    %v2184 = vunpack.c.l.b16 %v1919
    %v2185 = vunpack.c.h.b16 %v1919
    %v2186 = vunpack.c.l.b16 %v1920
    %v2187 = vunpack.c.h.b16 %v1920
    %v2188 = vunpack.c.l.b16 %v1921
    %v2189 = vunpack.c.h.b16 %v1921
    %v2190 = vunpack.c.l.b16 %v1922
    %v2191 = vunpack.c.h.b16 %v1922
    %v2192 = vunpack.c.l.b16 %v1923
    %v2193 = vunpack.c.h.b16 %v1923
    %v2194 = vunpack.c.l.b16 %v1924
    %v2195 = vunpack.c.h.b16 %v1924
    %v2196 = vunpack.c.l.b16 %v1925
    %v2197 = vunpack.c.h.b16 %v1925
    %v2198 = vunpack.c.l.b16 %v1926
    %v2199 = vunpack.c.h.b16 %v1926
    %v2200 = vunpack.c.l.b16 %v1927
    %v2201 = vunpack.c.h.b16 %v1927
    %v2202 = vunpack.c.l.b16 %v1928
    %v2203 = vunpack.c.h.b16 %v1928
    %v2204 = vunpack.c.l.b16 %v1929
    %v2205 = vunpack.c.h.b16 %v1929
    %v2206 = vunpack.c.l.b16 %v1930
    %v2207 = vunpack.c.h.b16 %v1930
    %v2208 = vunpack.c.l.b16 %v1931
    %v2209 = vunpack.c.h.b16 %v1931
    %v2210 = vunpack.c.l.b16 %v1932
    %v2211 = vunpack.c.h.b16 %v1932
    %v2212 = vunpack.c.l.b16 %v1933
    %v2213 = vunpack.c.h.b16 %v1933
    %v2214 = vunpack.c.l.b16 %v1934
    %v2215 = vunpack.c.h.b16 %v1934
    %v2216 = vunpack.c.l.b16 %v1935
    %v2217 = vunpack.c.h.b16 %v1935
    %v2218 = vunpack.c.l.b16 %v1936
    %v2219 = vunpack.c.h.b16 %v1936
    %v2220 = vunpack.c.l.b16 %v1937
    %v2221 = vunpack.c.h.b16 %v1937
    %v2222 = vunpack.c.l.b16 %v1938
    %v2223 = vunpack.c.h.b16 %v1938
    %v2224 = vunpack.c.l.b16 %v1939
    %v2225 = vunpack.c.h.b16 %v1939
    %v2226 = vunpack.c.l.b16 %v1940
    %v2227 = vunpack.c.h.b16 %v1940
    %v2228 = vunpack.c.l.b16 %v1941
    %v2229 = vunpack.c.h.b16 %v1941
    %v2230 = vunpack.c.l.b16 %v1942
    %v2231 = vunpack.c.h.b16 %v1942
    %v2232 = vunpack.c.l.b16 %v1943
    %v2233 = vunpack.c.h.b16 %v1943
    %v2234 = vunpack.c.l.b16 %v1944
    %v2235 = vunpack.c.h.b16 %v1944
    %v2236 = vunpack.c.l.b16 %v1945
    %v2237 = vunpack.c.h.b16 %v1945
    %v2238 = vunpack.c.l.b16 %v1946
    %v2239 = vunpack.c.h.b16 %v1946
    %v2240 = vunpack.c.l.b16 %v1947
    %v2241 = vunpack.c.h.b16 %v1947
    %v2242 = vpack.c.b16 %v2052, %v2050
    %v2243 = vpack.c.b16 %v2053, %v2051
    %v2244 = vpack.c.b16 %v2056, %v2054
    %v2245 = vpack.c.b16 %v2057, %v2055
    %v2246 = vpack.c.b16 %v2060, %v2058
    %v2247 = vpack.c.b16 %v2061, %v2059
    %v2248 = vpack.c.b16 %v2064, %v2062
    %v2249 = vpack.c.b16 %v2065, %v2063
    %v2250 = vpack.c.b16 %v2068, %v2066
    %v2251 = vpack.c.b16 %v2069, %v2067
    %v2252 = vpack.c.b16 %v2072, %v2070
    %v2253 = vpack.c.b16 %v2073, %v2071
    %v2254 = vpack.c.b16 %v2076, %v2074
    %v2255 = vpack.c.b16 %v2077, %v2075
    %v2256 = vpack.c.b16 %v2080, %v2078
    %v2257 = vpack.c.b16 %v2081, %v2079
    %v2258 = vpack.c.b16 %v2084, %v2082
    %v2259 = vpack.c.b16 %v2085, %v2083
    %v2260 = vpack.c.b16 %v2088, %v2086
    %v2261 = vpack.c.b16 %v2089, %v2087
    %v2262 = vpack.c.b16 %v2092, %v2090
    %v2263 = vpack.c.b16 %v2093, %v2091
    %v2264 = vpack.c.b16 %v2096, %v2094
    %v2265 = vpack.c.b16 %v2097, %v2095
    %v2266 = vpack.c.b16 %v2100, %v2098
    %v2267 = vpack.c.b16 %v2101, %v2099
    %v2268 = vpack.c.b16 %v2104, %v2102
    %v2269 = vpack.c.b16 %v2105, %v2103
    %v2270 = vpack.c.b16 %v2108, %v2106
    %v2271 = vpack.c.b16 %v2109, %v2107
    %v2272 = vpack.c.b16 %v2112, %v2110
    %v2273 = vpack.c.b16 %v2113, %v2111
    %v2274 = vpack.c.b16 %v2116, %v2114
    %v2275 = vpack.c.b16 %v2117, %v2115
    %v2276 = vpack.c.b16 %v2120, %v2118
    %v2277 = vpack.c.b16 %v2121, %v2119
    %v2278 = vpack.c.b16 %v2124, %v2122
    %v2279 = vpack.c.b16 %v2125, %v2123
    %v2280 = vpack.c.b16 %v2128, %v2126
    %v2281 = vpack.c.b16 %v2129, %v2127
    %v2282 = vpack.c.b16 %v2132, %v2130
    %v2283 = vpack.c.b16 %v2133, %v2131
    %v2284 = vpack.c.b16 %v2136, %v2134
    %v2285 = vpack.c.b16 %v2137, %v2135
    %v2286 = vpack.c.b16 %v2140, %v2138
    %v2287 = vpack.c.b16 %v2141, %v2139
    %v2288 = vpack.c.b16 %v2144, %v2142
    %v2289 = vpack.c.b16 %v2145, %v2143
    %v2290 = vpack.c.b16 %v2148, %v2146
    %v2291 = vpack.c.b16 %v2149, %v2147
    %v2292 = vpack.c.b16 %v2152, %v2150
    %v2293 = vpack.c.b16 %v2153, %v2151
    %v2294 = vpack.c.b16 %v2156, %v2154
    %v2295 = vpack.c.b16 %v2157, %v2155
    %v2296 = vpack.c.b16 %v2160, %v2158
    %v2297 = vpack.c.b16 %v2161, %v2159
    %v2298 = vpack.c.b16 %v2164, %v2162
    %v2299 = vpack.c.b16 %v2165, %v2163
    %v2300 = vpack.c.b16 %v2168, %v2166
    %v2301 = vpack.c.b16 %v2169, %v2167
    %v2302 = vpack.c.b16 %v2172, %v2170
    %v2303 = vpack.c.b16 %v2173, %v2171
    %v2304 = vpack.c.b16 %v2176, %v2174
    %v2305 = vpack.c.b16 %v2177, %v2175
    %v2306 = vpack.c.b16 %v2180, %v2178
    %v2307 = vpack.c.b16 %v2181, %v2179
    %v2308 = vpack.c.b16 %v2184, %v2182
    %v2309 = vpack.c.b16 %v2185, %v2183
    %v2310 = vpack.c.b16 %v2188, %v2186
    %v2311 = vpack.c.b16 %v2189, %v2187
    %v2312 = vpack.c.b16 %v2192, %v2190
    %v2313 = vpack.c.b16 %v2193, %v2191
    %v2314 = vpack.c.b16 %v2196, %v2194
    %v2315 = vpack.c.b16 %v2197, %v2195
    %v2316 = vpack.c.b16 %v2200, %v2198
    %v2317 = vpack.c.b16 %v2201, %v2199
    %v2318 = vpack.c.b16 %v2204, %v2202
    %v2319 = vpack.c.b16 %v2205, %v2203
    %v2320 = vpack.c.b16 %v2208, %v2206
    %v2321 = vpack.c.b16 %v2209, %v2207
    %v2322 = vpack.c.b16 %v2212, %v2210
    %v2323 = vpack.c.b16 %v2213, %v2211
    %v2324 = vpack.c.b16 %v2216, %v2214
    %v2325 = vpack.c.b16 %v2217, %v2215
    %v2326 = vpack.c.b16 %v2220, %v2218
    %v2327 = vpack.c.b16 %v2221, %v2219
    %v2328 = vpack.c.b16 %v2224, %v2222
    %v2329 = vpack.c.b16 %v2225, %v2223
    %v2330 = vpack.c.b16 %v2228, %v2226
    %v2331 = vpack.c.b16 %v2229, %v2227
    %v2332 = vpack.c.b16 %v2232, %v2230
    %v2333 = vpack.c.b16 %v2233, %v2231
    %v2334 = vpack.c.b16 %v2236, %v2234
    %v2335 = vpack.c.b16 %v2237, %v2235
    %v2336 = vpack.c.b16 %v2240, %v2238
    %v2337 = vpack.c.b16 %v2241, %v2239
    %2434 = vmatpush.bf16.msra.mxu0 %v2256
    %2435 = vmatpush.bf16.msra.mxu0 %v2254
    %2436 = vmatpush.bf16.msra.mxu0 %v2252
    %2437 = vmatpush.bf16.msra.mxu0 %v2250
    %2438 = vmatpush.bf16.msra.mxu0 %v2248
    %2439 = vmatpush.bf16.msra.mxu0 %v2246
    %2440 = vmatpush.bf16.msra.mxu0 %v2244
    %2441 = vmatpush.bf16.msra.mxu0 %v2242
    %2442 = vmatmul.bf16.gmra.mxu0 %v1846
    %v2443 = vpop.f32.mrf.mxu0
    %v2444 = vadd.f32 %v1950, %v2443
    %v2445 = vpop.f32.mrf.mxu0
    %2446 = vdwg.mxu0
    %2447 = vmatpush.bf16.msra.mxu0 %v2272
    %2448 = vmatpush.bf16.msra.mxu0 %v2270
    %2449 = vmatpush.bf16.msra.mxu0 %v2268
    %2450 = vmatpush.bf16.msra.mxu0 %v2266
    %2451 = vmatpush.bf16.msra.mxu0 %v2264
    %2452 = vmatpush.bf16.msra.mxu0 %v2262
    %2453 = vmatpush.bf16.msra.mxu0 %v2260
    %2454 = vmatpush.bf16.msra.mxu0 %v2258
    %2455 = vmatmul.bf16.gmra.mxu0 %v1847
    %v2456 = vpop.f32.mrf.mxu0
    %v2457 = vadd.f32 %v2444, %v2456
    %v2458 = vpop.f32.mrf.mxu0
    %2459 = vdwg.mxu0
    %2460 = vmatpush.bf16.msra.mxu0 %v2288
    %2461 = vmatpush.bf16.msra.mxu0 %v2286
    %2462 = vmatpush.bf16.msra.mxu0 %v2284
    %2463 = vmatpush.bf16.msra.mxu0 %v2282
    %2464 = vmatpush.bf16.msra.mxu0 %v2280
    %2465 = vmatpush.bf16.msra.mxu0 %v2278
    %2466 = vmatpush.bf16.msra.mxu0 %v2276
    %2467 = vmatpush.bf16.msra.mxu0 %v2274
    %2468 = vmatmul.bf16.gmra.mxu0 %v1848
    %v2469 = vpop.f32.mrf.mxu0
    %v2470 = vadd.f32 %v2457, %v2469
    %v2471 = vpop.f32.mrf.mxu0
    %2472 = vdwg.mxu0
    %2473 = vmatpush.bf16.msra.mxu0 %v2304
    %2474 = vmatpush.bf16.msra.mxu0 %v2302
    %2475 = vmatpush.bf16.msra.mxu0 %v2300
    %2476 = vmatpush.bf16.msra.mxu0 %v2298
    %2477 = vmatpush.bf16.msra.mxu0 %v2296
    %2478 = vmatpush.bf16.msra.mxu0 %v2294
    %2479 = vmatpush.bf16.msra.mxu0 %v2292
    %2480 = vmatpush.bf16.msra.mxu0 %v2290
    %2481 = vmatmul.bf16.gmra.mxu0 %v1849
    %v2482 = vpop.f32.mrf.mxu0
    %v2483 = vadd.f32 %v2470, %v2482
    %v2484 = vpop.f32.mrf.mxu0
    %2485 = vdwg.mxu0
    %2486 = vmatpush.bf16.msra.mxu0 %v2320
    %2487 = vmatpush.bf16.msra.mxu0 %v2318
    %2488 = vmatpush.bf16.msra.mxu0 %v2316
    %2489 = vmatpush.bf16.msra.mxu0 %v2314
    %2490 = vmatpush.bf16.msra.mxu0 %v2312
    %2491 = vmatpush.bf16.msra.mxu0 %v2310
    %2492 = vmatpush.bf16.msra.mxu0 %v2308
    %2493 = vmatpush.bf16.msra.mxu0 %v2306
    %2494 = vmatmul.bf16.gmra.mxu0 %v1850
    %v2495 = vpop.f32.mrf.mxu0
    %v2496 = vadd.f32 %v2483, %v2495
    %v2497 = vpop.f32.mrf.mxu0
    %2498 = vdwg.mxu0
    %2499 = vmatpush.bf16.msra.mxu0 %v2336
    %2500 = vmatpush.bf16.msra.mxu0 %v2334
    %2501 = vmatpush.bf16.msra.mxu0 %v2332
    %2502 = vmatpush.bf16.msra.mxu0 %v2330
    %2503 = vmatpush.bf16.msra.mxu0 %v2328
    %2504 = vmatpush.bf16.msra.mxu0 %v2326
    %2505 = vmatpush.bf16.msra.mxu0 %v2324
    %2506 = vmatpush.bf16.msra.mxu0 %v2322
    %2507 = vmatmul.bf16.gmra.mxu0 %v1851
    %v2508 = vpop.f32.mrf.mxu0
    %v2509 = vadd.f32 %v2496, %v2508
    %v2510 = vpop.f32.mrf.mxu0
    %2511 = vdwg.mxu0
    %2512 = vmatpush.bf16.msra.mxu0 %v2257
    %2513 = vmatpush.bf16.msra.mxu0 %v2255
    %2514 = vmatpush.bf16.msra.mxu0 %v2253
    %2515 = vmatpush.bf16.msra.mxu0 %v2251
    %2516 = vmatpush.bf16.msra.mxu0 %v2249
    %2517 = vmatpush.bf16.msra.mxu0 %v2247
    %2518 = vmatpush.bf16.msra.mxu0 %v2245
    %2519 = vmatpush.bf16.msra.mxu0 %v2243
    %2520 = vmatmul.bf16.gmra.mxu0 %v1846
    %v2521 = vpop.f32.mrf.mxu0
    %v2522 = vadd.f32 %v1951, %v2521
    %v2523 = vpop.f32.mrf.mxu0
    %2524 = vdwg.mxu0
    %2525 = vmatpush.bf16.msra.mxu0 %v2273
    %2526 = vmatpush.bf16.msra.mxu0 %v2271
    %2527 = vmatpush.bf16.msra.mxu0 %v2269
    %2528 = vmatpush.bf16.msra.mxu0 %v2267
    %2529 = vmatpush.bf16.msra.mxu0 %v2265
    %2530 = vmatpush.bf16.msra.mxu0 %v2263
    %2531 = vmatpush.bf16.msra.mxu0 %v2261
    %2532 = vmatpush.bf16.msra.mxu0 %v2259
    %2533 = vmatmul.bf16.gmra.mxu0 %v1847
    %v2534 = vpop.f32.mrf.mxu0
    %v2535 = vadd.f32 %v2522, %v2534
    %v2536 = vpop.f32.mrf.mxu0
    %2537 = vdwg.mxu0
    %2538 = vmatpush.bf16.msra.mxu0 %v2289
    %2539 = vmatpush.bf16.msra.mxu0 %v2287
    %2540 = vmatpush.bf16.msra.mxu0 %v2285
    %2541 = vmatpush.bf16.msra.mxu0 %v2283
    %2542 = vmatpush.bf16.msra.mxu0 %v2281
    %2543 = vmatpush.bf16.msra.mxu0 %v2279
    %2544 = vmatpush.bf16.msra.mxu0 %v2277
    %2545 = vmatpush.bf16.msra.mxu0 %v2275
    %2546 = vmatmul.bf16.gmra.mxu0 %v1848
    %v2547 = vpop.f32.mrf.mxu0
    %v2548 = vadd.f32 %v2535, %v2547
    %v2549 = vpop.f32.mrf.mxu0
    %2550 = vdwg.mxu0
    %2551 = vmatpush.bf16.msra.mxu0 %v2305
    %2552 = vmatpush.bf16.msra.mxu0 %v2303
    %2553 = vmatpush.bf16.msra.mxu0 %v2301
    %2554 = vmatpush.bf16.msra.mxu0 %v2299
    %2555 = vmatpush.bf16.msra.mxu0 %v2297
    %2556 = vmatpush.bf16.msra.mxu0 %v2295
    %2557 = vmatpush.bf16.msra.mxu0 %v2293
    %2558 = vmatpush.bf16.msra.mxu0 %v2291
    %2559 = vmatmul.bf16.gmra.mxu0 %v1849
    %v2560 = vpop.f32.mrf.mxu0
    %v2561 = vadd.f32 %v2548, %v2560
    %v2562 = vpop.f32.mrf.mxu0
    %2563 = vdwg.mxu0
    %2564 = vmatpush.bf16.msra.mxu0 %v2321
    %2565 = vmatpush.bf16.msra.mxu0 %v2319
    %2566 = vmatpush.bf16.msra.mxu0 %v2317
    %2567 = vmatpush.bf16.msra.mxu0 %v2315
    %2568 = vmatpush.bf16.msra.mxu0 %v2313
    %2569 = vmatpush.bf16.msra.mxu0 %v2311
    %2570 = vmatpush.bf16.msra.mxu0 %v2309
    %2571 = vmatpush.bf16.msra.mxu0 %v2307
    %2572 = vmatmul.bf16.gmra.mxu0 %v1850
    %v2573 = vpop.f32.mrf.mxu0
    %v2574 = vadd.f32 %v2561, %v2573
    %v2575 = vpop.f32.mrf.mxu0
    %2576 = vdwg.mxu0
    %2577 = vmatpush.bf16.msra.mxu0 %v2337
    %2578 = vmatpush.bf16.msra.mxu0 %v2335
    %2579 = vmatpush.bf16.msra.mxu0 %v2333
    %2580 = vmatpush.bf16.msra.mxu0 %v2331
    %2581 = vmatpush.bf16.msra.mxu0 %v2329
    %2582 = vmatpush.bf16.msra.mxu0 %v2327
    %2583 = vmatpush.bf16.msra.mxu0 %v2325
    %2584 = vmatpush.bf16.msra.mxu0 %v2323
    %2585 = vmatmul.bf16.gmra.mxu0 %v1851
    %v2586 = vpop.f32.mrf.mxu0
    %v2587 = vadd.f32 %v2574, %v2586
    %v2588 = vpop.f32.mrf.mxu0
    %2589 = vdwg.mxu0
    %v2590 = vld [vmem:[%s11] sm:$0x1]
    %v2591 = vld [vmem:[%s12] sm:$0x3]
    %vm2592 = vcmp.ge.f32.partialorder %v2509, 0.0
    %vm2593 = vcmp.ge.f32.partialorder %v2587, 0.0
    %v2594 = vmul.f32 %v2509, 0.2
    %v2595 = vmul.f32 %v2587, 0.2
    %v2596 = vsel %vm2592, %v2509, %v2594
    %v2597 = vsel %vm2593, %v2587, %v2595
    %v2598 = vrot.slane %v2596, 4
    %v2599 = vadd.f32 %v2596, %v2598
    %v2600 = vrot.slane %v2599, 2
    %v2601 = vadd.f32 %v2599, %v2600
    %v2602 = vrot.slane %v2601, 1
    %v2603 = vadd.f32 %v2601, %v2602
    %v2604 = vrot.slane %v2597, 4
    %v2605 = vadd.f32 %v2597, %v2604
    %v2606 = vrot.slane %v2605, 2
    %v2607 = vadd.f32 %v2605, %v2606
    %v2608 = vrot.slane %v2607, 1
    %v2609 = vadd.f32 %v2607, %v2608
    %2611 = vrot.lane.b32.xlu0 %v2603, 96
    %v2612 = vpop.permute.xlu0 %2611
    %v2614 = vadd.f32 %v2603, %v2612
    %2615 = vrot.lane.b32.xlu0 %v2603, 64
    %v2616 = vpop.permute.xlu0 %2615
    %v2618 = vadd.f32 %v2614, %v2616
    %2619 = vrot.lane.b32.xlu0 %v2603, 32
    %v2620 = vpop.permute.xlu0 %2619
    %v2622 = vadd.f32 %v2618, %v2620
    %v2623 = vadd.f32 %v2622, %v2609
    %2625 = vrot.lane.b32.xlu0 %v2609, 96
    %v2626 = vpop.permute.xlu0 %2625
    %v2628 = vadd.f32 %v2623, %v2626
    %2629 = vrot.lane.b32.xlu0 %v2609, 64
    %v2630 = vpop.permute.xlu0 %2629
    %v2632 = vadd.f32 %v2628, %v2630
    %2633 = vrot.lane.b32.xlu0 %v2609, 32
    %v2634 = vpop.permute.xlu0 %2633
    %v2636 = vadd.f32 %v2632, %v2634
    %v2637 = vmul.f32 %v2636, 0.015625
    %2639 = vrot.lane.b32.xlu0 %v2637, 32
    %v2640 = vpop.permute.xlu0 %2639
    %2642 = vrot.lane.b32.xlu0 %v2637, 64
    %v2643 = vpop.permute.xlu0 %2642
    %2645 = vrot.lane.b32.xlu0 %v2637, 96
    %v2646 = vpop.permute.xlu0 %2645
    %vm2648 = vcmask 261120
    %v2649 = vsel %vm2648, %v2637, %v2640
    %v2650 = vsel %vm1780, %v2649, %v2643
    %vm2651 = vcmask 785408
    %v2652 = vsel %vm2651, %v2650, %v2646
    %v2653 = vperm.slane %v2652, 0
    %v2654 = vsub.f32 %v2596, %v2653
    %v2655 = vsub.f32 %v2597, %v2653
    %v2656 = vmul.f32 %v2654, %v2654
    %v2657 = vmul.f32 %v2655, %v2655
    %v2658 = vrot.slane %v2656, 4
    %v2659 = vadd.f32 %v2656, %v2658
    %v2660 = vrot.slane %v2659, 2
    %v2661 = vadd.f32 %v2659, %v2660
    %v2662 = vrot.slane %v2661, 1
    %v2663 = vadd.f32 %v2661, %v2662
    %v2664 = vrot.slane %v2657, 4
    %v2665 = vadd.f32 %v2657, %v2664
    %v2666 = vrot.slane %v2665, 2
    %v2667 = vadd.f32 %v2665, %v2666
    %v2668 = vrot.slane %v2667, 1
    %v2669 = vadd.f32 %v2667, %v2668
    %2671 = vrot.lane.b32.xlu0 %v2663, 96
    %v2672 = vpop.permute.xlu0 %2671
    %v2674 = vadd.f32 %v2663, %v2672
    %2675 = vrot.lane.b32.xlu0 %v2663, 64
    %v2676 = vpop.permute.xlu0 %2675
    %v2678 = vadd.f32 %v2674, %v2676
    %2679 = vrot.lane.b32.xlu0 %v2663, 32
    %v2680 = vpop.permute.xlu0 %2679
    %v2682 = vadd.f32 %v2678, %v2680
    %v2683 = vadd.f32 %v2682, %v2669
    %2685 = vrot.lane.b32.xlu0 %v2669, 96
    %v2686 = vpop.permute.xlu0 %2685
    %v2688 = vadd.f32 %v2683, %v2686
    %2689 = vrot.lane.b32.xlu0 %v2669, 64
    %v2690 = vpop.permute.xlu0 %2689
    %v2692 = vadd.f32 %v2688, %v2690
    %2693 = vrot.lane.b32.xlu0 %v2669, 32
    %v2694 = vpop.permute.xlu0 %2693
    %v2696 = vadd.f32 %v2692, %v2694
    %v2697 = vmul.f32 %v2696, 0.015625
    %v2698 = vadd.f32 %v2697, 1e-05
    %v2699 = vrsqrt.pop %v2698
    %v2700 = vmul.f32 %v2699, %v2698
    %v2701 = vmul.f32 %v2700, %v2699
    %v2702 = vmul.f32 0.5, %v2701
    %v2703 = vsub.f32 1.5, %v2702
    %v2704 = vmul.f32 %v2699, %v2703
    %vm2705 = vweird.f32 %v2698
    %vm2706 = vweird.f32 %v2699
    %vm2707 = vmor %vm2705, %vm2706
    %v2708 = vsel %vm2707, %v2699, %v2704
    %v2709 = vmul.f32 %v2708, %v2590
    %2711 = vrot.lane.b32.xlu0 %v2709, 32
    %v2712 = vpop.permute.xlu0 %2711
    %2714 = vrot.lane.b32.xlu0 %v2709, 64
    %v2715 = vpop.permute.xlu0 %2714
    %2717 = vrot.lane.b32.xlu0 %v2709, 96
    %v2718 = vpop.permute.xlu0 %2717
    %v2720 = vsel %vm2648, %v2709, %v2712
    %v2721 = vsel %vm1780, %v2720, %v2715
    %v2722 = vsel %vm2651, %v2721, %v2718
    %v2723 = vperm.slane %v2722, 0
    %v2724 = vmul.f32 %v2654, %v2723
    %v2725 = vmul.f32 %v2655, %v2723
    %v2727 = vperm.slane %v2591, 0
    %v2728 = vperm.slane %v2591, 1
    %v2731 = vadd.f32 %v2724, %v2727
    %v2732 = vadd.f32 %v2725, %v2728
    %v2733 = vrot.slane %v2731, 7
    %v2734 = vrot.slane %v2732, 7
    %v2735 = vsel %vm176, 0.0, %v2733
    %v2736 = vsel %vm176, 0.0, %v2734
    %v2737 = vrot.slane %v2731, 1
    %v2738 = vrot.slane %v2732, 1
    %v2739 = vsel %vm182, 0.0, %v2737
    %v2740 = vsel %vm182, 0.0, %v2738
    %v2741 = vpack.c.bf16 %v2731, %v2731
    %v2742 = vpack.c.bf16 %v2732, %v2732
    %v2743 = vpack.c.bf16 %v2735, %v2735
    %v2744 = vpack.c.bf16 %v2736, %v2736
    %v2745 = vpack.c.bf16 %v2739, %v2739
    %v2746 = vpack.c.bf16 %v2740, %v2740
    %v2747 = vld [vmem:[#allocation9] sm:$0xff]
    %v2748 = vld [vmem:[#allocation9 + $0x8] sm:$0xff]
    %v2749 = vld [vmem:[#allocation9 + $0x10] sm:$0xff]
    %v2750 = vld [vmem:[#allocation9 + $0x18] sm:$0xff]
    %v2751 = vld [vmem:[#allocation9 + $0x20] sm:$0xff]
    %v2752 = vld [vmem:[#allocation9 + $0x28] sm:$0xff]
    %v2753 = vld [vmem:[#allocation9 + $0x30] sm:$0xff]
    %v2754 = vld [vmem:[#allocation9 + $0x38] sm:$0xff]
    %v2755 = vld [vmem:[#allocation9 + $0x40] sm:$0xff]
    %v2756 = vld [vmem:[#allocation9 + $0x48] sm:$0xff]
    %v2757 = vld [vmem:[#allocation9 + $0x50] sm:$0xff]
    %v2758 = vld [vmem:[#allocation9 + $0x58] sm:$0xff]
    %v2759 = vld [vmem:[#allocation9 + $0x60] sm:$0xff]
    %v2760 = vld [vmem:[#allocation9 + $0x68] sm:$0xff]
    %v2761 = vld [vmem:[#allocation9 + $0x70] sm:$0xff]
    %v2762 = vld [vmem:[#allocation9 + $0x78] sm:$0xff]
    %v2763 = vld [vmem:[#allocation9 + $0x80] sm:$0xff]
    %v2764 = vld [vmem:[#allocation9 + $0x88] sm:$0xff]
    %v2765 = vld [vmem:[#allocation9 + $0x90] sm:$0xff]
    %v2766 = vld [vmem:[#allocation9 + $0x98] sm:$0xff]
    %v2767 = vld [vmem:[#allocation9 + $0xa0] sm:$0xff]
    %v2768 = vld [vmem:[#allocation9 + $0xa8] sm:$0xff]
    %v2769 = vld [vmem:[#allocation9 + $0xb0] sm:$0xff]
    %v2770 = vld [vmem:[#allocation9 + $0xb8] sm:$0xff]
    %v2771 = vld [vmem:[#allocation9 + $0xc0] sm:$0xff]
    %v2772 = vld [vmem:[#allocation9 + $0xc8] sm:$0xff]
    %v2773 = vld [vmem:[#allocation9 + $0xd0] sm:$0xff]
    %v2774 = vld [vmem:[#allocation9 + $0xd8] sm:$0xff]
    %v2775 = vld [vmem:[#allocation9 + $0xe0] sm:$0xff]
    %v2776 = vld [vmem:[#allocation9 + $0xe8] sm:$0xff]
    %v2777 = vld [vmem:[#allocation9 + $0xf0] sm:$0xff]
    %v2778 = vld [vmem:[#allocation9 + $0xf8] sm:$0xff]
    %v2779 = vld [vmem:[#allocation9 + $0x100] sm:$0xff]
    %v2780 = vld [vmem:[#allocation9 + $0x108] sm:$0xff]
    %v2781 = vld [vmem:[#allocation9 + $0x110] sm:$0xff]
    %v2782 = vld [vmem:[#allocation9 + $0x118] sm:$0xff]
    %v2783 = vld [vmem:[#allocation9 + $0x120] sm:$0xff]
    %v2784 = vld [vmem:[#allocation9 + $0x128] sm:$0xff]
    %v2785 = vld [vmem:[#allocation9 + $0x130] sm:$0xff]
    %v2786 = vld [vmem:[#allocation9 + $0x138] sm:$0xff]
    %v2787 = vld [vmem:[#allocation9 + $0x140] sm:$0xff]
    %v2788 = vld [vmem:[#allocation9 + $0x148] sm:$0xff]
    %v2789 = vld [vmem:[#allocation9 + $0x150] sm:$0xff]
    %v2790 = vld [vmem:[#allocation9 + $0x158] sm:$0xff]
    %v2791 = vld [vmem:[#allocation9 + $0x160] sm:$0xff]
    %v2792 = vld [vmem:[#allocation9 + $0x168] sm:$0xff]
    %v2793 = vld [vmem:[#allocation9 + $0x170] sm:$0xff]
    %v2794 = vld [vmem:[#allocation9 + $0x178] sm:$0xff]
    %v2795 = vld [vmem:[#allocation9 + $0x180] sm:$0xff]
    %v2796 = vld [vmem:[#allocation9 + $0x188] sm:$0xff]
    %v2797 = vld [vmem:[#allocation9 + $0x190] sm:$0xff]
    %v2798 = vld [vmem:[#allocation9 + $0x198] sm:$0xff]
    %v2799 = vld [vmem:[#allocation9 + $0x1a0] sm:$0xff]
    %v2800 = vld [vmem:[#allocation9 + $0x1a8] sm:$0xff]
    %v2801 = vld [vmem:[#allocation9 + $0x1b0] sm:$0xff]
    %v2802 = vld [vmem:[#allocation9 + $0x1b8] sm:$0xff]
    %v2803 = vld [vmem:[#allocation9 + $0x1c0] sm:$0xff]
    %v2804 = vld [vmem:[#allocation9 + $0x1c8] sm:$0xff]
    %v2805 = vld [vmem:[#allocation9 + $0x1d0] sm:$0xff]
    %v2806 = vld [vmem:[#allocation9 + $0x1d8] sm:$0xff]
    %v2807 = vld [vmem:[#allocation9 + $0x1e0] sm:$0xff]
    %v2808 = vld [vmem:[#allocation9 + $0x1e8] sm:$0xff]
    %v2809 = vld [vmem:[#allocation9 + $0x1f0] sm:$0xff]
    %v2810 = vld [vmem:[#allocation9 + $0x1f8] sm:$0xff]
    %v2811 = vld [vmem:[#allocation9 + $0x200] sm:$0xff]
    %v2812 = vld [vmem:[#allocation9 + $0x208] sm:$0xff]
    %v2813 = vld [vmem:[#allocation9 + $0x210] sm:$0xff]
    %v2814 = vld [vmem:[#allocation9 + $0x218] sm:$0xff]
    %v2815 = vld [vmem:[#allocation9 + $0x220] sm:$0xff]
    %v2816 = vld [vmem:[#allocation9 + $0x228] sm:$0xff]
    %v2817 = vld [vmem:[#allocation9 + $0x230] sm:$0xff]
    %v2818 = vld [vmem:[#allocation9 + $0x238] sm:$0xff]
    %v2819 = vld [vmem:[#allocation9 + $0x240] sm:$0xff]
    %v2820 = vld [vmem:[#allocation9 + $0x248] sm:$0xff]
    %v2821 = vld [vmem:[#allocation9 + $0x250] sm:$0xff]
    %v2822 = vld [vmem:[#allocation9 + $0x258] sm:$0xff]
    %v2823 = vld [vmem:[#allocation9 + $0x260] sm:$0xff]
    %v2824 = vld [vmem:[#allocation9 + $0x268] sm:$0xff]
    %v2825 = vld [vmem:[#allocation9 + $0x270] sm:$0xff]
    %v2826 = vld [vmem:[#allocation9 + $0x278] sm:$0xff]
    %v2827 = vld [vmem:[#allocation9 + $0x280] sm:$0xff]
    %v2828 = vld [vmem:[#allocation9 + $0x288] sm:$0xff]
    %v2829 = vld [vmem:[#allocation9 + $0x290] sm:$0xff]
    %v2830 = vld [vmem:[#allocation9 + $0x298] sm:$0xff]
    %v2831 = vld [vmem:[#allocation9 + $0x2a0] sm:$0xff]
    %v2832 = vld [vmem:[#allocation9 + $0x2a8] sm:$0xff]
    %v2833 = vld [vmem:[#allocation9 + $0x2b0] sm:$0xff]
    %v2834 = vld [vmem:[#allocation9 + $0x2b8] sm:$0xff]
    %v2835 = vld [vmem:[#allocation9 + $0x2c0] sm:$0xff]
    %v2836 = vld [vmem:[#allocation9 + $0x2c8] sm:$0xff]
    %v2837 = vld [vmem:[#allocation9 + $0x2d0] sm:$0xff]
    %v2838 = vld [vmem:[#allocation9 + $0x2d8] sm:$0xff]
    %v2839 = vld [vmem:[#allocation9 + $0x2e0] sm:$0xff]
    %v2840 = vld [vmem:[#allocation9 + $0x2e8] sm:$0xff]
    %v2841 = vld [vmem:[#allocation9 + $0x2f0] sm:$0xff]
    %v2842 = vld [vmem:[#allocation9 + $0x2f8] sm:$0xff]
    %v2843 = vld [vmem:[%s14] sm:$0x3]
    %v2845 = vperm.slane %v2843, 0
    %v2846 = vperm.slane %v2843, 1
    %v2945 = vunpack.c.l.b16 %v2747
    %v2946 = vunpack.c.h.b16 %v2747
    %v2947 = vunpack.c.l.b16 %v2748
    %v2948 = vunpack.c.h.b16 %v2748
    %v2949 = vunpack.c.l.b16 %v2749
    %v2950 = vunpack.c.h.b16 %v2749
    %v2951 = vunpack.c.l.b16 %v2750
    %v2952 = vunpack.c.h.b16 %v2750
    %v2953 = vunpack.c.l.b16 %v2751
    %v2954 = vunpack.c.h.b16 %v2751
    %v2955 = vunpack.c.l.b16 %v2752
    %v2956 = vunpack.c.h.b16 %v2752
    %v2957 = vunpack.c.l.b16 %v2753
    %v2958 = vunpack.c.h.b16 %v2753
    %v2959 = vunpack.c.l.b16 %v2754
    %v2960 = vunpack.c.h.b16 %v2754
    %v2961 = vunpack.c.l.b16 %v2755
    %v2962 = vunpack.c.h.b16 %v2755
    %v2963 = vunpack.c.l.b16 %v2756
    %v2964 = vunpack.c.h.b16 %v2756
    %v2965 = vunpack.c.l.b16 %v2757
    %v2966 = vunpack.c.h.b16 %v2757
    %v2967 = vunpack.c.l.b16 %v2758
    %v2968 = vunpack.c.h.b16 %v2758
    %v2969 = vunpack.c.l.b16 %v2759
    %v2970 = vunpack.c.h.b16 %v2759
    %v2971 = vunpack.c.l.b16 %v2760
    %v2972 = vunpack.c.h.b16 %v2760
    %v2973 = vunpack.c.l.b16 %v2761
    %v2974 = vunpack.c.h.b16 %v2761
    %v2975 = vunpack.c.l.b16 %v2762
    %v2976 = vunpack.c.h.b16 %v2762
    %v2977 = vunpack.c.l.b16 %v2763
    %v2978 = vunpack.c.h.b16 %v2763
    %v2979 = vunpack.c.l.b16 %v2764
    %v2980 = vunpack.c.h.b16 %v2764
    %v2981 = vunpack.c.l.b16 %v2765
    %v2982 = vunpack.c.h.b16 %v2765
    %v2983 = vunpack.c.l.b16 %v2766
    %v2984 = vunpack.c.h.b16 %v2766
    %v2985 = vunpack.c.l.b16 %v2767
    %v2986 = vunpack.c.h.b16 %v2767
    %v2987 = vunpack.c.l.b16 %v2768
    %v2988 = vunpack.c.h.b16 %v2768
    %v2989 = vunpack.c.l.b16 %v2769
    %v2990 = vunpack.c.h.b16 %v2769
    %v2991 = vunpack.c.l.b16 %v2770
    %v2992 = vunpack.c.h.b16 %v2770
    %v2993 = vunpack.c.l.b16 %v2771
    %v2994 = vunpack.c.h.b16 %v2771
    %v2995 = vunpack.c.l.b16 %v2772
    %v2996 = vunpack.c.h.b16 %v2772
    %v2997 = vunpack.c.l.b16 %v2773
    %v2998 = vunpack.c.h.b16 %v2773
    %v2999 = vunpack.c.l.b16 %v2774
    %v3000 = vunpack.c.h.b16 %v2774
    %v3001 = vunpack.c.l.b16 %v2775
    %v3002 = vunpack.c.h.b16 %v2775
    %v3003 = vunpack.c.l.b16 %v2776
    %v3004 = vunpack.c.h.b16 %v2776
    %v3005 = vunpack.c.l.b16 %v2777
    %v3006 = vunpack.c.h.b16 %v2777
    %v3007 = vunpack.c.l.b16 %v2778
    %v3008 = vunpack.c.h.b16 %v2778
    %v3009 = vunpack.c.l.b16 %v2779
    %v3010 = vunpack.c.h.b16 %v2779
    %v3011 = vunpack.c.l.b16 %v2780
    %v3012 = vunpack.c.h.b16 %v2780
    %v3013 = vunpack.c.l.b16 %v2781
    %v3014 = vunpack.c.h.b16 %v2781
    %v3015 = vunpack.c.l.b16 %v2782
    %v3016 = vunpack.c.h.b16 %v2782
    %v3017 = vunpack.c.l.b16 %v2783
    %v3018 = vunpack.c.h.b16 %v2783
    %v3019 = vunpack.c.l.b16 %v2784
    %v3020 = vunpack.c.h.b16 %v2784
    %v3021 = vunpack.c.l.b16 %v2785
    %v3022 = vunpack.c.h.b16 %v2785
    %v3023 = vunpack.c.l.b16 %v2786
    %v3024 = vunpack.c.h.b16 %v2786
    %v3025 = vunpack.c.l.b16 %v2787
    %v3026 = vunpack.c.h.b16 %v2787
    %v3027 = vunpack.c.l.b16 %v2788
    %v3028 = vunpack.c.h.b16 %v2788
    %v3029 = vunpack.c.l.b16 %v2789
    %v3030 = vunpack.c.h.b16 %v2789
    %v3031 = vunpack.c.l.b16 %v2790
    %v3032 = vunpack.c.h.b16 %v2790
    %v3033 = vunpack.c.l.b16 %v2791
    %v3034 = vunpack.c.h.b16 %v2791
    %v3035 = vunpack.c.l.b16 %v2792
    %v3036 = vunpack.c.h.b16 %v2792
    %v3037 = vunpack.c.l.b16 %v2793
    %v3038 = vunpack.c.h.b16 %v2793
    %v3039 = vunpack.c.l.b16 %v2794
    %v3040 = vunpack.c.h.b16 %v2794
    %v3041 = vunpack.c.l.b16 %v2795
    %v3042 = vunpack.c.h.b16 %v2795
    %v3043 = vunpack.c.l.b16 %v2796
    %v3044 = vunpack.c.h.b16 %v2796
    %v3045 = vunpack.c.l.b16 %v2797
    %v3046 = vunpack.c.h.b16 %v2797
    %v3047 = vunpack.c.l.b16 %v2798
    %v3048 = vunpack.c.h.b16 %v2798
    %v3049 = vunpack.c.l.b16 %v2799
    %v3050 = vunpack.c.h.b16 %v2799
    %v3051 = vunpack.c.l.b16 %v2800
    %v3052 = vunpack.c.h.b16 %v2800
    %v3053 = vunpack.c.l.b16 %v2801
    %v3054 = vunpack.c.h.b16 %v2801
    %v3055 = vunpack.c.l.b16 %v2802
    %v3056 = vunpack.c.h.b16 %v2802
    %v3057 = vunpack.c.l.b16 %v2803
    %v3058 = vunpack.c.h.b16 %v2803
    %v3059 = vunpack.c.l.b16 %v2804
    %v3060 = vunpack.c.h.b16 %v2804
    %v3061 = vunpack.c.l.b16 %v2805
    %v3062 = vunpack.c.h.b16 %v2805
    %v3063 = vunpack.c.l.b16 %v2806
    %v3064 = vunpack.c.h.b16 %v2806
    %v3065 = vunpack.c.l.b16 %v2807
    %v3066 = vunpack.c.h.b16 %v2807
    %v3067 = vunpack.c.l.b16 %v2808
    %v3068 = vunpack.c.h.b16 %v2808
    %v3069 = vunpack.c.l.b16 %v2809
    %v3070 = vunpack.c.h.b16 %v2809
    %v3071 = vunpack.c.l.b16 %v2810
    %v3072 = vunpack.c.h.b16 %v2810
    %v3073 = vunpack.c.l.b16 %v2811
    %v3074 = vunpack.c.h.b16 %v2811
    %v3075 = vunpack.c.l.b16 %v2812
    %v3076 = vunpack.c.h.b16 %v2812
    %v3077 = vunpack.c.l.b16 %v2813
    %v3078 = vunpack.c.h.b16 %v2813
    %v3079 = vunpack.c.l.b16 %v2814
    %v3080 = vunpack.c.h.b16 %v2814
    %v3081 = vunpack.c.l.b16 %v2815
    %v3082 = vunpack.c.h.b16 %v2815
    %v3083 = vunpack.c.l.b16 %v2816
    %v3084 = vunpack.c.h.b16 %v2816
    %v3085 = vunpack.c.l.b16 %v2817
    %v3086 = vunpack.c.h.b16 %v2817
    %v3087 = vunpack.c.l.b16 %v2818
    %v3088 = vunpack.c.h.b16 %v2818
    %v3089 = vunpack.c.l.b16 %v2819
    %v3090 = vunpack.c.h.b16 %v2819
    %v3091 = vunpack.c.l.b16 %v2820
    %v3092 = vunpack.c.h.b16 %v2820
    %v3093 = vunpack.c.l.b16 %v2821
    %v3094 = vunpack.c.h.b16 %v2821
    %v3095 = vunpack.c.l.b16 %v2822
    %v3096 = vunpack.c.h.b16 %v2822
    %v3097 = vunpack.c.l.b16 %v2823
    %v3098 = vunpack.c.h.b16 %v2823
    %v3099 = vunpack.c.l.b16 %v2824
    %v3100 = vunpack.c.h.b16 %v2824
    %v3101 = vunpack.c.l.b16 %v2825
    %v3102 = vunpack.c.h.b16 %v2825
    %v3103 = vunpack.c.l.b16 %v2826
    %v3104 = vunpack.c.h.b16 %v2826
    %v3105 = vunpack.c.l.b16 %v2827
    %v3106 = vunpack.c.h.b16 %v2827
    %v3107 = vunpack.c.l.b16 %v2828
    %v3108 = vunpack.c.h.b16 %v2828
    %v3109 = vunpack.c.l.b16 %v2829
    %v3110 = vunpack.c.h.b16 %v2829
    %v3111 = vunpack.c.l.b16 %v2830
    %v3112 = vunpack.c.h.b16 %v2830
    %v3113 = vunpack.c.l.b16 %v2831
    %v3114 = vunpack.c.h.b16 %v2831
    %v3115 = vunpack.c.l.b16 %v2832
    %v3116 = vunpack.c.h.b16 %v2832
    %v3117 = vunpack.c.l.b16 %v2833
    %v3118 = vunpack.c.h.b16 %v2833
    %v3119 = vunpack.c.l.b16 %v2834
    %v3120 = vunpack.c.h.b16 %v2834
    %v3121 = vunpack.c.l.b16 %v2835
    %v3122 = vunpack.c.h.b16 %v2835
    %v3123 = vunpack.c.l.b16 %v2836
    %v3124 = vunpack.c.h.b16 %v2836
    %v3125 = vunpack.c.l.b16 %v2837
    %v3126 = vunpack.c.h.b16 %v2837
    %v3127 = vunpack.c.l.b16 %v2838
    %v3128 = vunpack.c.h.b16 %v2838
    %v3129 = vunpack.c.l.b16 %v2839
    %v3130 = vunpack.c.h.b16 %v2839
    %v3131 = vunpack.c.l.b16 %v2840
    %v3132 = vunpack.c.h.b16 %v2840
    %v3133 = vunpack.c.l.b16 %v2841
    %v3134 = vunpack.c.h.b16 %v2841
    %v3135 = vunpack.c.l.b16 %v2842
    %v3136 = vunpack.c.h.b16 %v2842
    %v3137 = vpack.c.b16 %v2947, %v2945
    %v3138 = vpack.c.b16 %v2948, %v2946
    %v3139 = vpack.c.b16 %v2951, %v2949
    %v3140 = vpack.c.b16 %v2952, %v2950
    %v3141 = vpack.c.b16 %v2955, %v2953
    %v3142 = vpack.c.b16 %v2956, %v2954
    %v3143 = vpack.c.b16 %v2959, %v2957
    %v3144 = vpack.c.b16 %v2960, %v2958
    %v3145 = vpack.c.b16 %v2963, %v2961
    %v3146 = vpack.c.b16 %v2964, %v2962
    %v3147 = vpack.c.b16 %v2967, %v2965
    %v3148 = vpack.c.b16 %v2968, %v2966
    %v3149 = vpack.c.b16 %v2971, %v2969
    %v3150 = vpack.c.b16 %v2972, %v2970
    %v3151 = vpack.c.b16 %v2975, %v2973
    %v3152 = vpack.c.b16 %v2976, %v2974
    %v3153 = vpack.c.b16 %v2979, %v2977
    %v3154 = vpack.c.b16 %v2980, %v2978
    %v3155 = vpack.c.b16 %v2983, %v2981
    %v3156 = vpack.c.b16 %v2984, %v2982
    %v3157 = vpack.c.b16 %v2987, %v2985
    %v3158 = vpack.c.b16 %v2988, %v2986
    %v3159 = vpack.c.b16 %v2991, %v2989
    %v3160 = vpack.c.b16 %v2992, %v2990
    %v3161 = vpack.c.b16 %v2995, %v2993
    %v3162 = vpack.c.b16 %v2996, %v2994
    %v3163 = vpack.c.b16 %v2999, %v2997
    %v3164 = vpack.c.b16 %v3000, %v2998
    %v3165 = vpack.c.b16 %v3003, %v3001
    %v3166 = vpack.c.b16 %v3004, %v3002
    %v3167 = vpack.c.b16 %v3007, %v3005
    %v3168 = vpack.c.b16 %v3008, %v3006
    %v3169 = vpack.c.b16 %v3011, %v3009
    %v3170 = vpack.c.b16 %v3012, %v3010
    %v3171 = vpack.c.b16 %v3015, %v3013
    %v3172 = vpack.c.b16 %v3016, %v3014
    %v3173 = vpack.c.b16 %v3019, %v3017
    %v3174 = vpack.c.b16 %v3020, %v3018
    %v3175 = vpack.c.b16 %v3023, %v3021
    %v3176 = vpack.c.b16 %v3024, %v3022
    %v3177 = vpack.c.b16 %v3027, %v3025
    %v3178 = vpack.c.b16 %v3028, %v3026
    %v3179 = vpack.c.b16 %v3031, %v3029
    %v3180 = vpack.c.b16 %v3032, %v3030
    %v3181 = vpack.c.b16 %v3035, %v3033
    %v3182 = vpack.c.b16 %v3036, %v3034
    %v3183 = vpack.c.b16 %v3039, %v3037
    %v3184 = vpack.c.b16 %v3040, %v3038
    %v3185 = vpack.c.b16 %v3043, %v3041
    %v3186 = vpack.c.b16 %v3044, %v3042
    %v3187 = vpack.c.b16 %v3047, %v3045
    %v3188 = vpack.c.b16 %v3048, %v3046
    %v3189 = vpack.c.b16 %v3051, %v3049
    %v3190 = vpack.c.b16 %v3052, %v3050
    %v3191 = vpack.c.b16 %v3055, %v3053
    %v3192 = vpack.c.b16 %v3056, %v3054
    %v3193 = vpack.c.b16 %v3059, %v3057
    %v3194 = vpack.c.b16 %v3060, %v3058
    %v3195 = vpack.c.b16 %v3063, %v3061
    %v3196 = vpack.c.b16 %v3064, %v3062
    %v3197 = vpack.c.b16 %v3067, %v3065
    %v3198 = vpack.c.b16 %v3068, %v3066
    %v3199 = vpack.c.b16 %v3071, %v3069
    %v3200 = vpack.c.b16 %v3072, %v3070
    %v3201 = vpack.c.b16 %v3075, %v3073
    %v3202 = vpack.c.b16 %v3076, %v3074
    %v3203 = vpack.c.b16 %v3079, %v3077
    %v3204 = vpack.c.b16 %v3080, %v3078
    %v3205 = vpack.c.b16 %v3083, %v3081
    %v3206 = vpack.c.b16 %v3084, %v3082
    %v3207 = vpack.c.b16 %v3087, %v3085
    %v3208 = vpack.c.b16 %v3088, %v3086
    %v3209 = vpack.c.b16 %v3091, %v3089
    %v3210 = vpack.c.b16 %v3092, %v3090
    %v3211 = vpack.c.b16 %v3095, %v3093
    %v3212 = vpack.c.b16 %v3096, %v3094
    %v3213 = vpack.c.b16 %v3099, %v3097
    %v3214 = vpack.c.b16 %v3100, %v3098
    %v3215 = vpack.c.b16 %v3103, %v3101
    %v3216 = vpack.c.b16 %v3104, %v3102
    %v3217 = vpack.c.b16 %v3107, %v3105
    %v3218 = vpack.c.b16 %v3108, %v3106
    %v3219 = vpack.c.b16 %v3111, %v3109
    %v3220 = vpack.c.b16 %v3112, %v3110
    %v3221 = vpack.c.b16 %v3115, %v3113
    %v3222 = vpack.c.b16 %v3116, %v3114
    %v3223 = vpack.c.b16 %v3119, %v3117
    %v3224 = vpack.c.b16 %v3120, %v3118
    %v3225 = vpack.c.b16 %v3123, %v3121
    %v3226 = vpack.c.b16 %v3124, %v3122
    %v3227 = vpack.c.b16 %v3127, %v3125
    %v3228 = vpack.c.b16 %v3128, %v3126
    %v3229 = vpack.c.b16 %v3131, %v3129
    %v3230 = vpack.c.b16 %v3132, %v3130
    %v3231 = vpack.c.b16 %v3135, %v3133
    %v3232 = vpack.c.b16 %v3136, %v3134
    %3329 = vmatpush.bf16.msra.mxu0 %v3151
    %3330 = vmatpush.bf16.msra.mxu0 %v3149
    %3331 = vmatpush.bf16.msra.mxu0 %v3147
    %3332 = vmatpush.bf16.msra.mxu0 %v3145
    %3333 = vmatpush.bf16.msra.mxu0 %v3143
    %3334 = vmatpush.bf16.msra.mxu0 %v3141
    %3335 = vmatpush.bf16.msra.mxu0 %v3139
    %3336 = vmatpush.bf16.msra.mxu0 %v3137
    %3337 = vmatmul.bf16.gmra.mxu0 %v2741
    %v3338 = vpop.f32.mrf.mxu0
    %v3339 = vadd.f32 %v2845, %v3338
    %v3340 = vpop.f32.mrf.mxu0
    %3341 = vdwg.mxu0
    %3342 = vmatpush.bf16.msra.mxu0 %v3167
    %3343 = vmatpush.bf16.msra.mxu0 %v3165
    %3344 = vmatpush.bf16.msra.mxu0 %v3163
    %3345 = vmatpush.bf16.msra.mxu0 %v3161
    %3346 = vmatpush.bf16.msra.mxu0 %v3159
    %3347 = vmatpush.bf16.msra.mxu0 %v3157
    %3348 = vmatpush.bf16.msra.mxu0 %v3155
    %3349 = vmatpush.bf16.msra.mxu0 %v3153
    %3350 = vmatmul.bf16.gmra.mxu0 %v2742
    %v3351 = vpop.f32.mrf.mxu0
    %v3352 = vadd.f32 %v3339, %v3351
    %v3353 = vpop.f32.mrf.mxu0
    %3354 = vdwg.mxu0
    %3355 = vmatpush.bf16.msra.mxu0 %v3183
    %3356 = vmatpush.bf16.msra.mxu0 %v3181
    %3357 = vmatpush.bf16.msra.mxu0 %v3179
    %3358 = vmatpush.bf16.msra.mxu0 %v3177
    %3359 = vmatpush.bf16.msra.mxu0 %v3175
    %3360 = vmatpush.bf16.msra.mxu0 %v3173
    %3361 = vmatpush.bf16.msra.mxu0 %v3171
    %3362 = vmatpush.bf16.msra.mxu0 %v3169
    %3363 = vmatmul.bf16.gmra.mxu0 %v2743
    %v3364 = vpop.f32.mrf.mxu0
    %v3365 = vadd.f32 %v3352, %v3364
    %v3366 = vpop.f32.mrf.mxu0
    %3367 = vdwg.mxu0
    %3368 = vmatpush.bf16.msra.mxu0 %v3199
    %3369 = vmatpush.bf16.msra.mxu0 %v3197
    %3370 = vmatpush.bf16.msra.mxu0 %v3195
    %3371 = vmatpush.bf16.msra.mxu0 %v3193
    %3372 = vmatpush.bf16.msra.mxu0 %v3191
    %3373 = vmatpush.bf16.msra.mxu0 %v3189
    %3374 = vmatpush.bf16.msra.mxu0 %v3187
    %3375 = vmatpush.bf16.msra.mxu0 %v3185
    %3376 = vmatmul.bf16.gmra.mxu0 %v2744
    %v3377 = vpop.f32.mrf.mxu0
    %v3378 = vadd.f32 %v3365, %v3377
    %v3379 = vpop.f32.mrf.mxu0
    %3380 = vdwg.mxu0
    %3381 = vmatpush.bf16.msra.mxu0 %v3215
    %3382 = vmatpush.bf16.msra.mxu0 %v3213
    %3383 = vmatpush.bf16.msra.mxu0 %v3211
    %3384 = vmatpush.bf16.msra.mxu0 %v3209
    %3385 = vmatpush.bf16.msra.mxu0 %v3207
    %3386 = vmatpush.bf16.msra.mxu0 %v3205
    %3387 = vmatpush.bf16.msra.mxu0 %v3203
    %3388 = vmatpush.bf16.msra.mxu0 %v3201
    %3389 = vmatmul.bf16.gmra.mxu0 %v2745
    %v3390 = vpop.f32.mrf.mxu0
    %v3391 = vadd.f32 %v3378, %v3390
    %v3392 = vpop.f32.mrf.mxu0
    %3393 = vdwg.mxu0
    %3394 = vmatpush.bf16.msra.mxu0 %v3231
    %3395 = vmatpush.bf16.msra.mxu0 %v3229
    %3396 = vmatpush.bf16.msra.mxu0 %v3227
    %3397 = vmatpush.bf16.msra.mxu0 %v3225
    %3398 = vmatpush.bf16.msra.mxu0 %v3223
    %3399 = vmatpush.bf16.msra.mxu0 %v3221
    %3400 = vmatpush.bf16.msra.mxu0 %v3219
    %3401 = vmatpush.bf16.msra.mxu0 %v3217
    %3402 = vmatmul.bf16.gmra.mxu0 %v2746
    %v3403 = vpop.f32.mrf.mxu0
    %v3404 = vadd.f32 %v3391, %v3403
    %v3405 = vpop.f32.mrf.mxu0
    %3406 = vdwg.mxu0
    %3407 = vmatpush.bf16.msra.mxu0 %v3152
    %3408 = vmatpush.bf16.msra.mxu0 %v3150
    %3409 = vmatpush.bf16.msra.mxu0 %v3148
    %3410 = vmatpush.bf16.msra.mxu0 %v3146
    %3411 = vmatpush.bf16.msra.mxu0 %v3144
    %3412 = vmatpush.bf16.msra.mxu0 %v3142
    %3413 = vmatpush.bf16.msra.mxu0 %v3140
    %3414 = vmatpush.bf16.msra.mxu0 %v3138
    %3415 = vmatmul.bf16.gmra.mxu0 %v2741
    %v3416 = vpop.f32.mrf.mxu0
    %v3417 = vadd.f32 %v2846, %v3416
    %v3418 = vpop.f32.mrf.mxu0
    %3419 = vdwg.mxu0
    %3420 = vmatpush.bf16.msra.mxu0 %v3168
    %3421 = vmatpush.bf16.msra.mxu0 %v3166
    %3422 = vmatpush.bf16.msra.mxu0 %v3164
    %3423 = vmatpush.bf16.msra.mxu0 %v3162
    %3424 = vmatpush.bf16.msra.mxu0 %v3160
    %3425 = vmatpush.bf16.msra.mxu0 %v3158
    %3426 = vmatpush.bf16.msra.mxu0 %v3156
    %3427 = vmatpush.bf16.msra.mxu0 %v3154
    %3428 = vmatmul.bf16.gmra.mxu0 %v2742
    %v3429 = vpop.f32.mrf.mxu0
    %v3430 = vadd.f32 %v3417, %v3429
    %v3431 = vpop.f32.mrf.mxu0
    %3432 = vdwg.mxu0
    %3433 = vmatpush.bf16.msra.mxu0 %v3184
    %3434 = vmatpush.bf16.msra.mxu0 %v3182
    %3435 = vmatpush.bf16.msra.mxu0 %v3180
    %3436 = vmatpush.bf16.msra.mxu0 %v3178
    %3437 = vmatpush.bf16.msra.mxu0 %v3176
    %3438 = vmatpush.bf16.msra.mxu0 %v3174
    %3439 = vmatpush.bf16.msra.mxu0 %v3172
    %3440 = vmatpush.bf16.msra.mxu0 %v3170
    %3441 = vmatmul.bf16.gmra.mxu0 %v2743
    %v3442 = vpop.f32.mrf.mxu0
    %v3443 = vadd.f32 %v3430, %v3442
    %v3444 = vpop.f32.mrf.mxu0
    %3445 = vdwg.mxu0
    %3446 = vmatpush.bf16.msra.mxu0 %v3200
    %3447 = vmatpush.bf16.msra.mxu0 %v3198
    %3448 = vmatpush.bf16.msra.mxu0 %v3196
    %3449 = vmatpush.bf16.msra.mxu0 %v3194
    %3450 = vmatpush.bf16.msra.mxu0 %v3192
    %3451 = vmatpush.bf16.msra.mxu0 %v3190
    %3452 = vmatpush.bf16.msra.mxu0 %v3188
    %3453 = vmatpush.bf16.msra.mxu0 %v3186
    %3454 = vmatmul.bf16.gmra.mxu0 %v2744
    %v3455 = vpop.f32.mrf.mxu0
    %v3456 = vadd.f32 %v3443, %v3455
    %v3457 = vpop.f32.mrf.mxu0
    %3458 = vdwg.mxu0
    %3459 = vmatpush.bf16.msra.mxu0 %v3216
    %3460 = vmatpush.bf16.msra.mxu0 %v3214
    %3461 = vmatpush.bf16.msra.mxu0 %v3212
    %3462 = vmatpush.bf16.msra.mxu0 %v3210
    %3463 = vmatpush.bf16.msra.mxu0 %v3208
    %3464 = vmatpush.bf16.msra.mxu0 %v3206
    %3465 = vmatpush.bf16.msra.mxu0 %v3204
    %3466 = vmatpush.bf16.msra.mxu0 %v3202
    %3467 = vmatmul.bf16.gmra.mxu0 %v2745
    %v3468 = vpop.f32.mrf.mxu0
    %v3469 = vadd.f32 %v3456, %v3468
    %v3470 = vpop.f32.mrf.mxu0
    %3471 = vdwg.mxu0
    %3472 = vmatpush.bf16.msra.mxu0 %v3232
    %3473 = vmatpush.bf16.msra.mxu0 %v3230
    %3474 = vmatpush.bf16.msra.mxu0 %v3228
    %3475 = vmatpush.bf16.msra.mxu0 %v3226
    %3476 = vmatpush.bf16.msra.mxu0 %v3224
    %3477 = vmatpush.bf16.msra.mxu0 %v3222
    %3478 = vmatpush.bf16.msra.mxu0 %v3220
    %3479 = vmatpush.bf16.msra.mxu0 %v3218
    %3480 = vmatmul.bf16.gmra.mxu0 %v2746
    %v3481 = vpop.f32.mrf.mxu0
    %v3482 = vadd.f32 %v3469, %v3481
    %v3483 = vpop.f32.mrf.mxu0
    %3484 = vdwg.mxu0
    %v3485 = vld [vmem:[%s15] sm:$0x1]
    %v3486 = vld [vmem:[%s16] sm:$0x3]
    %vm3487 = vcmp.ge.f32.partialorder %v3404, 0.0
    %vm3488 = vcmp.ge.f32.partialorder %v3482, 0.0
    %v3489 = vmul.f32 %v3404, 0.2
    %v3490 = vmul.f32 %v3482, 0.2
    %v3491 = vsel %vm3487, %v3404, %v3489
    %v3492 = vsel %vm3488, %v3482, %v3490
    %v3493 = vrot.slane %v3491, 4
    %v3494 = vadd.f32 %v3491, %v3493
    %v3495 = vrot.slane %v3494, 2
    %v3496 = vadd.f32 %v3494, %v3495
    %v3497 = vrot.slane %v3496, 1
    %v3498 = vadd.f32 %v3496, %v3497
    %v3499 = vrot.slane %v3492, 4
    %v3500 = vadd.f32 %v3492, %v3499
    %v3501 = vrot.slane %v3500, 2
    %v3502 = vadd.f32 %v3500, %v3501
    %v3503 = vrot.slane %v3502, 1
    %v3504 = vadd.f32 %v3502, %v3503
    %3506 = vrot.lane.b32.xlu0 %v3498, 112
    %v3507 = vpop.permute.xlu0 %3506
    %v3509 = vadd.f32 %v3498, %v3507
    %3510 = vrot.lane.b32.xlu0 %v3498, 96
    %v3511 = vpop.permute.xlu0 %3510
    %v3513 = vadd.f32 %v3509, %v3511
    %3514 = vrot.lane.b32.xlu0 %v3498, 80
    %v3515 = vpop.permute.xlu0 %3514
    %v3517 = vadd.f32 %v3513, %v3515
    %3518 = vrot.lane.b32.xlu0 %v3498, 64
    %v3519 = vpop.permute.xlu0 %3518
    %v3521 = vadd.f32 %v3517, %v3519
    %3522 = vrot.lane.b32.xlu0 %v3498, 48
    %v3523 = vpop.permute.xlu0 %3522
    %v3525 = vadd.f32 %v3521, %v3523
    %3526 = vrot.lane.b32.xlu0 %v3498, 32
    %v3527 = vpop.permute.xlu0 %3526
    %v3529 = vadd.f32 %v3525, %v3527
    %3530 = vrot.lane.b32.xlu0 %v3498, 16
    %v3531 = vpop.permute.xlu0 %3530
    %v3533 = vadd.f32 %v3529, %v3531
    %v3534 = vadd.f32 %v3533, %v3504
    %3536 = vrot.lane.b32.xlu0 %v3504, 112
    %v3537 = vpop.permute.xlu0 %3536
    %v3539 = vadd.f32 %v3534, %v3537
    %3540 = vrot.lane.b32.xlu0 %v3504, 96
    %v3541 = vpop.permute.xlu0 %3540
    %v3543 = vadd.f32 %v3539, %v3541
    %3544 = vrot.lane.b32.xlu0 %v3504, 80
    %v3545 = vpop.permute.xlu0 %3544
    %v3547 = vadd.f32 %v3543, %v3545
    %3548 = vrot.lane.b32.xlu0 %v3504, 64
    %v3549 = vpop.permute.xlu0 %3548
    %v3551 = vadd.f32 %v3547, %v3549
    %3552 = vrot.lane.b32.xlu0 %v3504, 48
    %v3553 = vpop.permute.xlu0 %3552
    %v3555 = vadd.f32 %v3551, %v3553
    %3556 = vrot.lane.b32.xlu0 %v3504, 32
    %v3557 = vpop.permute.xlu0 %3556
    %v3559 = vadd.f32 %v3555, %v3557
    %3560 = vrot.lane.b32.xlu0 %v3504, 16
    %v3561 = vpop.permute.xlu0 %3560
    %v3563 = vadd.f32 %v3559, %v3561
    %v3564 = vmul.f32 %v3563, 0.0078125
    %3566 = vrot.lane.b32.xlu0 %v3564, 16
    %v3567 = vpop.permute.xlu0 %3566
    %3569 = vrot.lane.b32.xlu0 %v3564, 32
    %v3570 = vpop.permute.xlu0 %3569
    %3572 = vrot.lane.b32.xlu0 %v3564, 48
    %v3573 = vpop.permute.xlu0 %3572
    %3575 = vrot.lane.b32.xlu0 %v3564, 64
    %v3576 = vpop.permute.xlu0 %3575
    %3578 = vrot.lane.b32.xlu0 %v3564, 80
    %v3579 = vpop.permute.xlu0 %3578
    %3581 = vrot.lane.b32.xlu0 %v3564, 96
    %v3582 = vpop.permute.xlu0 %3581
    %3584 = vrot.lane.b32.xlu0 %v3564, 112
    %v3585 = vpop.permute.xlu0 %3584
    %vm3587 = vcmask 130048
    %v3588 = vsel %vm3587, %v3564, %v3567
    %v3589 = vsel %vm2648, %v3588, %v3570
    %vm3590 = vcmask 392192
    %v3591 = vsel %vm3590, %v3589, %v3573
    %v3592 = vsel %vm1780, %v3591, %v3576
    %vm3593 = vcmask 654336
    %v3594 = vsel %vm3593, %v3592, %v3579
    %v3595 = vsel %vm2651, %v3594, %v3582
    %vm3596 = vcmask 916480
    %v3597 = vsel %vm3596, %v3595, %v3585
    %v3598 = vperm.slane %v3597, 0
    %v3599 = vsub.f32 %v3491, %v3598
    %v3600 = vsub.f32 %v3492, %v3598
    %v3601 = vmul.f32 %v3599, %v3599
    %v3602 = vmul.f32 %v3600, %v3600
    %v3603 = vrot.slane %v3601, 4
    %v3604 = vadd.f32 %v3601, %v3603
    %v3605 = vrot.slane %v3604, 2
    %v3606 = vadd.f32 %v3604, %v3605
    %v3607 = vrot.slane %v3606, 1
    %v3608 = vadd.f32 %v3606, %v3607
    %v3609 = vrot.slane %v3602, 4
    %v3610 = vadd.f32 %v3602, %v3609
    %v3611 = vrot.slane %v3610, 2
    %v3612 = vadd.f32 %v3610, %v3611
    %v3613 = vrot.slane %v3612, 1
    %v3614 = vadd.f32 %v3612, %v3613
    %3616 = vrot.lane.b32.xlu0 %v3608, 112
    %v3617 = vpop.permute.xlu0 %3616
    %v3619 = vadd.f32 %v3608, %v3617
    %3620 = vrot.lane.b32.xlu0 %v3608, 96
    %v3621 = vpop.permute.xlu0 %3620
    %v3623 = vadd.f32 %v3619, %v3621
    %3624 = vrot.lane.b32.xlu0 %v3608, 80
    %v3625 = vpop.permute.xlu0 %3624
    %v3627 = vadd.f32 %v3623, %v3625
    %3628 = vrot.lane.b32.xlu0 %v3608, 64
    %v3629 = vpop.permute.xlu0 %3628
    %v3631 = vadd.f32 %v3627, %v3629
    %3632 = vrot.lane.b32.xlu0 %v3608, 48
    %v3633 = vpop.permute.xlu0 %3632
    %v3635 = vadd.f32 %v3631, %v3633
    %3636 = vrot.lane.b32.xlu0 %v3608, 32
    %v3637 = vpop.permute.xlu0 %3636
    %v3639 = vadd.f32 %v3635, %v3637
    %3640 = vrot.lane.b32.xlu0 %v3608, 16
    %v3641 = vpop.permute.xlu0 %3640
    %v3643 = vadd.f32 %v3639, %v3641
    %v3644 = vadd.f32 %v3643, %v3614
    %3646 = vrot.lane.b32.xlu0 %v3614, 112
    %v3647 = vpop.permute.xlu0 %3646
    %v3649 = vadd.f32 %v3644, %v3647
    %3650 = vrot.lane.b32.xlu0 %v3614, 96
    %v3651 = vpop.permute.xlu0 %3650
    %v3653 = vadd.f32 %v3649, %v3651
    %3654 = vrot.lane.b32.xlu0 %v3614, 80
    %v3655 = vpop.permute.xlu0 %3654
    %v3657 = vadd.f32 %v3653, %v3655
    %3658 = vrot.lane.b32.xlu0 %v3614, 64
    %v3659 = vpop.permute.xlu0 %3658
    %v3661 = vadd.f32 %v3657, %v3659
    %3662 = vrot.lane.b32.xlu0 %v3614, 48
    %v3663 = vpop.permute.xlu0 %3662
    %v3665 = vadd.f32 %v3661, %v3663
    %3666 = vrot.lane.b32.xlu0 %v3614, 32
    %v3667 = vpop.permute.xlu0 %3666
    %v3669 = vadd.f32 %v3665, %v3667
    %3670 = vrot.lane.b32.xlu0 %v3614, 16
    %v3671 = vpop.permute.xlu0 %3670
    %v3673 = vadd.f32 %v3669, %v3671
    %v3674 = vmul.f32 %v3673, 0.0078125
    %v3675 = vadd.f32 %v3674, 1e-05
    %v3676 = vrsqrt.pop %v3675
    %v3677 = vmul.f32 %v3676, %v3675
    %v3678 = vmul.f32 %v3677, %v3676
    %v3679 = vmul.f32 0.5, %v3678
    %v3680 = vsub.f32 1.5, %v3679
    %v3681 = vmul.f32 %v3676, %v3680
    %vm3682 = vweird.f32 %v3675
    %vm3683 = vweird.f32 %v3676
    %vm3684 = vmor %vm3682, %vm3683
    %v3685 = vsel %vm3684, %v3676, %v3681
    %v3686 = vmul.f32 %v3685, %v3485
    %3688 = vrot.lane.b32.xlu0 %v3686, 16
    %v3689 = vpop.permute.xlu0 %3688
    %3691 = vrot.lane.b32.xlu0 %v3686, 32
    %v3692 = vpop.permute.xlu0 %3691
    %3694 = vrot.lane.b32.xlu0 %v3686, 48
    %v3695 = vpop.permute.xlu0 %3694
    %3697 = vrot.lane.b32.xlu0 %v3686, 64
    %v3698 = vpop.permute.xlu0 %3697
    %3700 = vrot.lane.b32.xlu0 %v3686, 80
    %v3701 = vpop.permute.xlu0 %3700
    %3703 = vrot.lane.b32.xlu0 %v3686, 96
    %v3704 = vpop.permute.xlu0 %3703
    %3706 = vrot.lane.b32.xlu0 %v3686, 112
    %v3707 = vpop.permute.xlu0 %3706
    %v3709 = vsel %vm3587, %v3686, %v3689
    %v3710 = vsel %vm2648, %v3709, %v3692
    %v3711 = vsel %vm3590, %v3710, %v3695
    %v3712 = vsel %vm1780, %v3711, %v3698
    %v3713 = vsel %vm3593, %v3712, %v3701
    %v3714 = vsel %vm2651, %v3713, %v3704
    %v3715 = vsel %vm3596, %v3714, %v3707
    %v3716 = vperm.slane %v3715, 0
    %v3717 = vmul.f32 %v3599, %v3716
    %v3718 = vmul.f32 %v3600, %v3716
    %v3720 = vperm.slane %v3486, 0
    %v3721 = vperm.slane %v3486, 1
    %v3724 = vadd.f32 %v3717, %v3720
    %v3725 = vadd.f32 %v3718, %v3721
    %v3726 = vrot.slane %v3724, 7
    %v3727 = vrot.slane %v3725, 7
    %v3728 = vsel %vm176, 0.0, %v3726
    %v3729 = vsel %vm176, 0.0, %v3727
    %v3730 = vrot.slane %v3724, 1
    %v3731 = vrot.slane %v3725, 1
    %v3732 = vsel %vm182, 0.0, %v3730
    %v3733 = vsel %vm182, 0.0, %v3731
    %v3734 = vpack.c.bf16 %v3724, %v3724
    %v3735 = vpack.c.bf16 %v3725, %v3725
    %v3736 = vpack.c.bf16 %v3728, %v3728
    %v3737 = vpack.c.bf16 %v3729, %v3729
    %v3738 = vpack.c.bf16 %v3732, %v3732
    %v3739 = vpack.c.bf16 %v3733, %v3733
    %v3740 = vld [vmem:[#allocation10] sm:$0xf]
    %v3741 = vld [vmem:[#allocation10 + $0x4] sm:$0xf]
    %v3742 = vld [vmem:[#allocation10 + $0x8] sm:$0xf]
    %v3743 = vld [vmem:[#allocation10 + $0xc] sm:$0xf]
    %v3744 = vld [vmem:[#allocation10 + $0x10] sm:$0xf]
    %v3745 = vld [vmem:[#allocation10 + $0x14] sm:$0xf]
    %v3746 = vld [vmem:[#allocation10 + $0x18] sm:$0xf]
    %v3747 = vld [vmem:[#allocation10 + $0x1c] sm:$0xf]
    %v3748 = vld [vmem:[#allocation10 + $0x20] sm:$0xf]
    %v3749 = vld [vmem:[#allocation10 + $0x24] sm:$0xf]
    %v3750 = vld [vmem:[#allocation10 + $0x28] sm:$0xf]
    %v3751 = vld [vmem:[#allocation10 + $0x2c] sm:$0xf]
    %v3752 = vld [vmem:[#allocation10 + $0x30] sm:$0xf]
    %v3753 = vld [vmem:[#allocation10 + $0x34] sm:$0xf]
    %v3754 = vld [vmem:[#allocation10 + $0x38] sm:$0xf]
    %v3755 = vld [vmem:[#allocation10 + $0x3c] sm:$0xf]
    %v3756 = vld [vmem:[#allocation10 + $0x40] sm:$0xf]
    %v3757 = vld [vmem:[#allocation10 + $0x44] sm:$0xf]
    %v3758 = vld [vmem:[#allocation10 + $0x48] sm:$0xf]
    %v3759 = vld [vmem:[#allocation10 + $0x4c] sm:$0xf]
    %v3760 = vld [vmem:[#allocation10 + $0x50] sm:$0xf]
    %v3761 = vld [vmem:[#allocation10 + $0x54] sm:$0xf]
    %v3762 = vld [vmem:[#allocation10 + $0x58] sm:$0xf]
    %v3763 = vld [vmem:[#allocation10 + $0x5c] sm:$0xf]
    %v3764 = vld [vmem:[#allocation10 + $0x60] sm:$0xf]
    %v3765 = vld [vmem:[#allocation10 + $0x64] sm:$0xf]
    %v3766 = vld [vmem:[#allocation10 + $0x68] sm:$0xf]
    %v3767 = vld [vmem:[#allocation10 + $0x6c] sm:$0xf]
    %v3768 = vld [vmem:[#allocation10 + $0x70] sm:$0xf]
    %v3769 = vld [vmem:[#allocation10 + $0x74] sm:$0xf]
    %v3770 = vld [vmem:[#allocation10 + $0x78] sm:$0xf]
    %v3771 = vld [vmem:[#allocation10 + $0x7c] sm:$0xf]
    %v3772 = vld [vmem:[#allocation10 + $0x80] sm:$0xf]
    %v3773 = vld [vmem:[#allocation10 + $0x84] sm:$0xf]
    %v3774 = vld [vmem:[#allocation10 + $0x88] sm:$0xf]
    %v3775 = vld [vmem:[#allocation10 + $0x8c] sm:$0xf]
    %v3776 = vld [vmem:[#allocation10 + $0x90] sm:$0xf]
    %v3777 = vld [vmem:[#allocation10 + $0x94] sm:$0xf]
    %v3778 = vld [vmem:[#allocation10 + $0x98] sm:$0xf]
    %v3779 = vld [vmem:[#allocation10 + $0x9c] sm:$0xf]
    %v3780 = vld [vmem:[#allocation10 + $0xa0] sm:$0xf]
    %v3781 = vld [vmem:[#allocation10 + $0xa4] sm:$0xf]
    %v3782 = vld [vmem:[#allocation10 + $0xa8] sm:$0xf]
    %v3783 = vld [vmem:[#allocation10 + $0xac] sm:$0xf]
    %v3784 = vld [vmem:[#allocation10 + $0xb0] sm:$0xf]
    %v3785 = vld [vmem:[#allocation10 + $0xb4] sm:$0xf]
    %v3786 = vld [vmem:[#allocation10 + $0xb8] sm:$0xf]
    %v3787 = vld [vmem:[#allocation10 + $0xbc] sm:$0xf]
    %v3788 = vld [vmem:[#allocation10 + $0xc0] sm:$0xf]
    %v3789 = vld [vmem:[#allocation10 + $0xc4] sm:$0xf]
    %v3790 = vld [vmem:[#allocation10 + $0xc8] sm:$0xf]
    %v3791 = vld [vmem:[#allocation10 + $0xcc] sm:$0xf]
    %v3792 = vld [vmem:[#allocation10 + $0xd0] sm:$0xf]
    %v3793 = vld [vmem:[#allocation10 + $0xd4] sm:$0xf]
    %v3794 = vld [vmem:[#allocation10 + $0xd8] sm:$0xf]
    %v3795 = vld [vmem:[#allocation10 + $0xdc] sm:$0xf]
    %v3796 = vld [vmem:[#allocation10 + $0xe0] sm:$0xf]
    %v3797 = vld [vmem:[#allocation10 + $0xe4] sm:$0xf]
    %v3798 = vld [vmem:[#allocation10 + $0xe8] sm:$0xf]
    %v3799 = vld [vmem:[#allocation10 + $0xec] sm:$0xf]
    %v3800 = vld [vmem:[#allocation10 + $0xf0] sm:$0xf]
    %v3801 = vld [vmem:[#allocation10 + $0xf4] sm:$0xf]
    %v3802 = vld [vmem:[#allocation10 + $0xf8] sm:$0xf]
    %v3803 = vld [vmem:[#allocation10 + $0xfc] sm:$0xf]
    %v3804 = vld [vmem:[#allocation10 + $0x100] sm:$0xf]
    %v3805 = vld [vmem:[#allocation10 + $0x104] sm:$0xf]
    %v3806 = vld [vmem:[#allocation10 + $0x108] sm:$0xf]
    %v3807 = vld [vmem:[#allocation10 + $0x10c] sm:$0xf]
    %v3808 = vld [vmem:[#allocation10 + $0x110] sm:$0xf]
    %v3809 = vld [vmem:[#allocation10 + $0x114] sm:$0xf]
    %v3810 = vld [vmem:[#allocation10 + $0x118] sm:$0xf]
    %v3811 = vld [vmem:[#allocation10 + $0x11c] sm:$0xf]
    %v3812 = vld [vmem:[#allocation10 + $0x120] sm:$0xf]
    %v3813 = vld [vmem:[#allocation10 + $0x124] sm:$0xf]
    %v3814 = vld [vmem:[#allocation10 + $0x128] sm:$0xf]
    %v3815 = vld [vmem:[#allocation10 + $0x12c] sm:$0xf]
    %v3816 = vld [vmem:[#allocation10 + $0x130] sm:$0xf]
    %v3817 = vld [vmem:[#allocation10 + $0x134] sm:$0xf]
    %v3818 = vld [vmem:[#allocation10 + $0x138] sm:$0xf]
    %v3819 = vld [vmem:[#allocation10 + $0x13c] sm:$0xf]
    %v3820 = vld [vmem:[#allocation10 + $0x140] sm:$0xf]
    %v3821 = vld [vmem:[#allocation10 + $0x144] sm:$0xf]
    %v3822 = vld [vmem:[#allocation10 + $0x148] sm:$0xf]
    %v3823 = vld [vmem:[#allocation10 + $0x14c] sm:$0xf]
    %v3824 = vld [vmem:[#allocation10 + $0x150] sm:$0xf]
    %v3825 = vld [vmem:[#allocation10 + $0x154] sm:$0xf]
    %v3826 = vld [vmem:[#allocation10 + $0x158] sm:$0xf]
    %v3827 = vld [vmem:[#allocation10 + $0x15c] sm:$0xf]
    %v3828 = vld [vmem:[#allocation10 + $0x160] sm:$0xf]
    %v3829 = vld [vmem:[#allocation10 + $0x164] sm:$0xf]
    %v3830 = vld [vmem:[#allocation10 + $0x168] sm:$0xf]
    %v3831 = vld [vmem:[#allocation10 + $0x16c] sm:$0xf]
    %v3832 = vld [vmem:[#allocation10 + $0x170] sm:$0xf]
    %v3833 = vld [vmem:[#allocation10 + $0x174] sm:$0xf]
    %v3834 = vld [vmem:[#allocation10 + $0x178] sm:$0xf]
    %v3835 = vld [vmem:[#allocation10 + $0x17c] sm:$0xf]
    %v3836 = vld [vmem:[%s18] sm:$0x1]
    %v3838 = vperm.slane %v3836, 0
    %v3936 = vunpack.c.l.b16 %v3740
    %v3937 = vunpack.c.l.b16 %v3741
    %v3938 = vunpack.c.l.b16 %v3742
    %v3939 = vunpack.c.l.b16 %v3743
    %v3940 = vunpack.c.l.b16 %v3744
    %v3941 = vunpack.c.l.b16 %v3745
    %v3942 = vunpack.c.l.b16 %v3746
    %v3943 = vunpack.c.l.b16 %v3747
    %v3944 = vunpack.c.l.b16 %v3748
    %v3945 = vunpack.c.l.b16 %v3749
    %v3946 = vunpack.c.l.b16 %v3750
    %v3947 = vunpack.c.l.b16 %v3751
    %v3948 = vunpack.c.l.b16 %v3752
    %v3949 = vunpack.c.l.b16 %v3753
    %v3950 = vunpack.c.l.b16 %v3754
    %v3951 = vunpack.c.l.b16 %v3755
    %v3952 = vunpack.c.l.b16 %v3756
    %v3953 = vunpack.c.l.b16 %v3757
    %v3954 = vunpack.c.l.b16 %v3758
    %v3955 = vunpack.c.l.b16 %v3759
    %v3956 = vunpack.c.l.b16 %v3760
    %v3957 = vunpack.c.l.b16 %v3761
    %v3958 = vunpack.c.l.b16 %v3762
    %v3959 = vunpack.c.l.b16 %v3763
    %v3960 = vunpack.c.l.b16 %v3764
    %v3961 = vunpack.c.l.b16 %v3765
    %v3962 = vunpack.c.l.b16 %v3766
    %v3963 = vunpack.c.l.b16 %v3767
    %v3964 = vunpack.c.l.b16 %v3768
    %v3965 = vunpack.c.l.b16 %v3769
    %v3966 = vunpack.c.l.b16 %v3770
    %v3967 = vunpack.c.l.b16 %v3771
    %v3968 = vunpack.c.l.b16 %v3772
    %v3969 = vunpack.c.l.b16 %v3773
    %v3970 = vunpack.c.l.b16 %v3774
    %v3971 = vunpack.c.l.b16 %v3775
    %v3972 = vunpack.c.l.b16 %v3776
    %v3973 = vunpack.c.l.b16 %v3777
    %v3974 = vunpack.c.l.b16 %v3778
    %v3975 = vunpack.c.l.b16 %v3779
    %v3976 = vunpack.c.l.b16 %v3780
    %v3977 = vunpack.c.l.b16 %v3781
    %v3978 = vunpack.c.l.b16 %v3782
    %v3979 = vunpack.c.l.b16 %v3783
    %v3980 = vunpack.c.l.b16 %v3784
    %v3981 = vunpack.c.l.b16 %v3785
    %v3982 = vunpack.c.l.b16 %v3786
    %v3983 = vunpack.c.l.b16 %v3787
    %v3984 = vunpack.c.l.b16 %v3788
    %v3985 = vunpack.c.l.b16 %v3789
    %v3986 = vunpack.c.l.b16 %v3790
    %v3987 = vunpack.c.l.b16 %v3791
    %v3988 = vunpack.c.l.b16 %v3792
    %v3989 = vunpack.c.l.b16 %v3793
    %v3990 = vunpack.c.l.b16 %v3794
    %v3991 = vunpack.c.l.b16 %v3795
    %v3992 = vunpack.c.l.b16 %v3796
    %v3993 = vunpack.c.l.b16 %v3797
    %v3994 = vunpack.c.l.b16 %v3798
    %v3995 = vunpack.c.l.b16 %v3799
    %v3996 = vunpack.c.l.b16 %v3800
    %v3997 = vunpack.c.l.b16 %v3801
    %v3998 = vunpack.c.l.b16 %v3802
    %v3999 = vunpack.c.l.b16 %v3803
    %v4000 = vunpack.c.l.b16 %v3804
    %v4001 = vunpack.c.l.b16 %v3805
    %v4002 = vunpack.c.l.b16 %v3806
    %v4003 = vunpack.c.l.b16 %v3807
    %v4004 = vunpack.c.l.b16 %v3808
    %v4005 = vunpack.c.l.b16 %v3809
    %v4006 = vunpack.c.l.b16 %v3810
    %v4007 = vunpack.c.l.b16 %v3811
    %v4008 = vunpack.c.l.b16 %v3812
    %v4009 = vunpack.c.l.b16 %v3813
    %v4010 = vunpack.c.l.b16 %v3814
    %v4011 = vunpack.c.l.b16 %v3815
    %v4012 = vunpack.c.l.b16 %v3816
    %v4013 = vunpack.c.l.b16 %v3817
    %v4014 = vunpack.c.l.b16 %v3818
    %v4015 = vunpack.c.l.b16 %v3819
    %v4016 = vunpack.c.l.b16 %v3820
    %v4017 = vunpack.c.l.b16 %v3821
    %v4018 = vunpack.c.l.b16 %v3822
    %v4019 = vunpack.c.l.b16 %v3823
    %v4020 = vunpack.c.l.b16 %v3824
    %v4021 = vunpack.c.l.b16 %v3825
    %v4022 = vunpack.c.l.b16 %v3826
    %v4023 = vunpack.c.l.b16 %v3827
    %v4024 = vunpack.c.l.b16 %v3828
    %v4025 = vunpack.c.l.b16 %v3829
    %v4026 = vunpack.c.l.b16 %v3830
    %v4027 = vunpack.c.l.b16 %v3831
    %v4028 = vunpack.c.l.b16 %v3832
    %v4029 = vunpack.c.l.b16 %v3833
    %v4030 = vunpack.c.l.b16 %v3834
    %v4031 = vunpack.c.l.b16 %v3835
    %v4032 = vpack.c.b16 %v3937, %v3936
    %v4033 = vpack.c.b16 %v3939, %v3938
    %v4034 = vpack.c.b16 %v3941, %v3940
    %v4035 = vpack.c.b16 %v3943, %v3942
    %v4036 = vpack.c.b16 %v3945, %v3944
    %v4037 = vpack.c.b16 %v3947, %v3946
    %v4038 = vpack.c.b16 %v3949, %v3948
    %v4039 = vpack.c.b16 %v3951, %v3950
    %v4040 = vpack.c.b16 %v3953, %v3952
    %v4041 = vpack.c.b16 %v3955, %v3954
    %v4042 = vpack.c.b16 %v3957, %v3956
    %v4043 = vpack.c.b16 %v3959, %v3958
    %v4044 = vpack.c.b16 %v3961, %v3960
    %v4045 = vpack.c.b16 %v3963, %v3962
    %v4046 = vpack.c.b16 %v3965, %v3964
    %v4047 = vpack.c.b16 %v3967, %v3966
    %v4048 = vpack.c.b16 %v3969, %v3968
    %v4049 = vpack.c.b16 %v3971, %v3970
    %v4050 = vpack.c.b16 %v3973, %v3972
    %v4051 = vpack.c.b16 %v3975, %v3974
    %v4052 = vpack.c.b16 %v3977, %v3976
    %v4053 = vpack.c.b16 %v3979, %v3978
    %v4054 = vpack.c.b16 %v3981, %v3980
    %v4055 = vpack.c.b16 %v3983, %v3982
    %v4056 = vpack.c.b16 %v3985, %v3984
    %v4057 = vpack.c.b16 %v3987, %v3986
    %v4058 = vpack.c.b16 %v3989, %v3988
    %v4059 = vpack.c.b16 %v3991, %v3990
    %v4060 = vpack.c.b16 %v3993, %v3992
    %v4061 = vpack.c.b16 %v3995, %v3994
    %v4062 = vpack.c.b16 %v3997, %v3996
    %v4063 = vpack.c.b16 %v3999, %v3998
    %v4064 = vpack.c.b16 %v4001, %v4000
    %v4065 = vpack.c.b16 %v4003, %v4002
    %v4066 = vpack.c.b16 %v4005, %v4004
    %v4067 = vpack.c.b16 %v4007, %v4006
    %v4068 = vpack.c.b16 %v4009, %v4008
    %v4069 = vpack.c.b16 %v4011, %v4010
    %v4070 = vpack.c.b16 %v4013, %v4012
    %v4071 = vpack.c.b16 %v4015, %v4014
    %v4072 = vpack.c.b16 %v4017, %v4016
    %v4073 = vpack.c.b16 %v4019, %v4018
    %v4074 = vpack.c.b16 %v4021, %v4020
    %v4075 = vpack.c.b16 %v4023, %v4022
    %v4076 = vpack.c.b16 %v4025, %v4024
    %v4077 = vpack.c.b16 %v4027, %v4026
    %v4078 = vpack.c.b16 %v4029, %v4028
    %v4079 = vpack.c.b16 %v4031, %v4030
    %4128 = vmatpush.bf16.msra.mxu0 %v4039
    %4129 = vmatpush.bf16.msra.mxu0 %v4038
    %4130 = vmatpush.bf16.msra.mxu0 %v4037
    %4131 = vmatpush.bf16.msra.mxu0 %v4036
    %4132 = vmatpush.bf16.msra.mxu0 %v4035
    %4133 = vmatpush.bf16.msra.mxu0 %v4034
    %4134 = vmatpush.bf16.msra.mxu0 %v4033
    %4135 = vmatpush.bf16.msra.mxu0 %v4032
    %4136 = vmatmul.bf16.gmra.mxu0 %v3734
    %v4137 = vpop.f32.mrf.mxu0
    %v4138 = vadd.f32 %v3838, %v4137
    %v4139 = vpop.f32.mrf.mxu0
    %4140 = vdwg.mxu0
    %4141 = vmatpush.bf16.msra.mxu0 %v4047
    %4142 = vmatpush.bf16.msra.mxu0 %v4046
    %4143 = vmatpush.bf16.msra.mxu0 %v4045
    %4144 = vmatpush.bf16.msra.mxu0 %v4044
    %4145 = vmatpush.bf16.msra.mxu0 %v4043
    %4146 = vmatpush.bf16.msra.mxu0 %v4042
    %4147 = vmatpush.bf16.msra.mxu0 %v4041
    %4148 = vmatpush.bf16.msra.mxu0 %v4040
    %4149 = vmatmul.bf16.gmra.mxu0 %v3735
    %v4150 = vpop.f32.mrf.mxu0
    %v4151 = vadd.f32 %v4138, %v4150
    %v4152 = vpop.f32.mrf.mxu0
    %4153 = vdwg.mxu0
    %4154 = vmatpush.bf16.msra.mxu0 %v4055
    %4155 = vmatpush.bf16.msra.mxu0 %v4054
    %4156 = vmatpush.bf16.msra.mxu0 %v4053
    %4157 = vmatpush.bf16.msra.mxu0 %v4052
    %4158 = vmatpush.bf16.msra.mxu0 %v4051
    %4159 = vmatpush.bf16.msra.mxu0 %v4050
    %4160 = vmatpush.bf16.msra.mxu0 %v4049
    %4161 = vmatpush.bf16.msra.mxu0 %v4048
    %4162 = vmatmul.bf16.gmra.mxu0 %v3736
    %v4163 = vpop.f32.mrf.mxu0
    %v4164 = vadd.f32 %v4151, %v4163
    %v4165 = vpop.f32.mrf.mxu0
    %4166 = vdwg.mxu0
    %4167 = vmatpush.bf16.msra.mxu0 %v4063
    %4168 = vmatpush.bf16.msra.mxu0 %v4062
    %4169 = vmatpush.bf16.msra.mxu0 %v4061
    %4170 = vmatpush.bf16.msra.mxu0 %v4060
    %4171 = vmatpush.bf16.msra.mxu0 %v4059
    %4172 = vmatpush.bf16.msra.mxu0 %v4058
    %4173 = vmatpush.bf16.msra.mxu0 %v4057
    %4174 = vmatpush.bf16.msra.mxu0 %v4056
    %4175 = vmatmul.bf16.gmra.mxu0 %v3737
    %v4176 = vpop.f32.mrf.mxu0
    %v4177 = vadd.f32 %v4164, %v4176
    %v4178 = vpop.f32.mrf.mxu0
    %4179 = vdwg.mxu0
    %4180 = vmatpush.bf16.msra.mxu0 %v4071
    %4181 = vmatpush.bf16.msra.mxu0 %v4070
    %4182 = vmatpush.bf16.msra.mxu0 %v4069
    %4183 = vmatpush.bf16.msra.mxu0 %v4068
    %4184 = vmatpush.bf16.msra.mxu0 %v4067
    %4185 = vmatpush.bf16.msra.mxu0 %v4066
    %4186 = vmatpush.bf16.msra.mxu0 %v4065
    %4187 = vmatpush.bf16.msra.mxu0 %v4064
    %4188 = vmatmul.bf16.gmra.mxu0 %v3738
    %v4189 = vpop.f32.mrf.mxu0
    %v4190 = vadd.f32 %v4177, %v4189
    %v4191 = vpop.f32.mrf.mxu0
    %4192 = vdwg.mxu0
    %4193 = vmatpush.bf16.msra.mxu0 %v4079
    %4194 = vmatpush.bf16.msra.mxu0 %v4078
    %4195 = vmatpush.bf16.msra.mxu0 %v4077
    %4196 = vmatpush.bf16.msra.mxu0 %v4076
    %4197 = vmatpush.bf16.msra.mxu0 %v4075
    %4198 = vmatpush.bf16.msra.mxu0 %v4074
    %4199 = vmatpush.bf16.msra.mxu0 %v4073
    %4200 = vmatpush.bf16.msra.mxu0 %v4072
    %4201 = vmatmul.bf16.gmra.mxu0 %v3739
    %v4202 = vpop.f32.mrf.mxu0
    %v4203 = vadd.f32 %v4190, %v4202
    %v4204 = vpop.f32.mrf.mxu0
    %4205 = vdwg.mxu0
    %v4206 = vtanh.pop %v4203
    %4207 = vst [vmem:[%s19] sm:$0xff] %v4206
    // Predicated region
    $region102: #{generator_forward.3} parent=1 // pred_check
      _
    $region103: #{generator_forward.3} parent=1 // pred_check_branch
      %4209 = sbr.rel (0) target = $region105
    $region104: #{generator_forward.3} parent=1 // pred_region
      _
    $region105: #{generator_forward.3} parent=1 // pred_fallthru
      _
    // Predicated region
    $region106: #{generator_forward.3} parent=1 // pred_check
      _
    $region107: #{generator_forward.3} parent=1 // pred_check_branch
      %4211 = sbr.rel (0) target = $region109
    $region108: #{generator_forward.3} parent=1 // pred_region
      _
    $region109: #{generator_forward.3} parent=1 // pred_fallthru
      _
    %4212 = vsyncpa [#allocation3], 1
    %4213 = vsyncpa [#allocation5], 1
    %4214 = vsyncpa [#allocation8], 1
    %4215 = vsyncpa [#allocation11], 1

</llo_original>
